<compile_context>
chip_gen: v5e
topology: v5e:2x2
jax: 0.10.0
libtpu: 0.0.40
codegen_flags: <defaults>
</compile_context>

<pallas_src>
import math

import jax
import jax.numpy as jnp
from jax import lax
from jax.experimental import pallas as pl
from jax.experimental.pallas import tpu as pltpu  # noqa: F401  (TPU backend)

# ----------------------------- small config ---------------------------------
IMG_SIZE = 16
PATCH_SIZE = 4
IN_CHANS = 3
EMBED_DIM = 32
DEPTH = 12            # forward() requires exactly the count==12 branch here
NUM_HEADS = 4         # middle blocks
LAST_HEADS = 2        # first & last block
MLP_RATIO = 4.0
BATCH = 2
NUM_PATCHES = (IMG_SIZE // PATCH_SIZE) ** 2   # 16
SEQ = NUM_PATCHES + 1                         # 17 (with cls token)
HIDDEN = int(EMBED_DIM * MLP_RATIO)
LN_EPS = 1e-5

assert DEPTH == 12, "this fused implementation hard-codes the count==12 layout"

# ----------------------------- in-kernel helpers ------------------------------


def _layernorm(x, g, b):
    mu = jnp.mean(x, axis=-1, keepdims=True)
    xc = x - mu
    var = jnp.mean(xc * xc, axis=-1, keepdims=True)
    return xc * lax.rsqrt(var + LN_EPS) * g + b


def _gelu(x):
    # exact GELU (matches torch.nn.GELU default)
    return 0.5 * x * (1.0 + lax.erf(x * (2.0 ** -0.5)))


def _sum_all(x):
    """Reduce an array of rank >= 2 to a (1, 1) f32 via staged reductions."""
    r = jnp.sum(x, axis=-1, keepdims=True)        # (..., 1)
    while r.ndim > 2:                             # collapse leading dims
        r = jnp.sum(r, axis=0)
    return jnp.sum(r, axis=0, keepdims=True)      # (1, 1)


# ----------------------------- fused Pallas kernel ----------------------------


def _alivit_kernel(
        patches_ref, pw_ref, pb_ref, base_ref,
        ln1_g_ref, ln1_b_ref, qkv_w_ref, qkv_b_ref,
        proj_w_ref, proj_b_ref, ln2_g_ref, ln2_b_ref,
        fc1_w_ref, fc1_b_ref, fc2_w_ref, fc2_b_ref,
        tqk1_ref, tvv1_ref, tqk11_ref, tvv11_ref,
        qk_ref, vv_ref):
    B, N, D, P = BATCH, SEQ, EMBED_DIM, NUM_PATCHES

    # --------------- patch embed + cls token + pos embed ---------------------
    # patches: (B*P, C*p*p); pw: (C*p*p, D); base: (N, D) with row0 = cls+pos0.
    emb = (jnp.dot(patches_ref[...], pw_ref[...],
                   preferred_element_type=jnp.float32) + pb_ref[...])    # (B*P, D)
    base = base_ref[...]
    pieces = []
    for b in range(B):                              # static, tiny slice placement
        pieces.append(base[0:1])
        pieces.append(base[1:] + emb[b * P:(b + 1) * P])
    x = jnp.concatenate(pieces, axis=0)             # (B*N, D)

    # --------------- shared helpers (batched over B and heads) ---------------
    def head_stack(mat, off, num_heads):
        # mat: (B*N, 3D) -> (B*num_heads, N, dh) with g = b*H + h
        dh = D // num_heads
        parts = []
        for b in range(B):
            rows = mat[b * N:(b + 1) * N]
            for h in range(num_heads):
                parts.append(rows[:, off + h * dh: off + (h + 1) * dh][None])
        return jnp.concatenate(parts, axis=0)

    def qkv_heads(x2, ln_g, ln_b, w, bias, num_heads):
        h1 = _layernorm(x2, ln_g, ln_b)
        qkv = jnp.dot(h1, w, preferred_element_type=jnp.float32) + bias  # (B*N, 3D)
        return (head_stack(qkv, 0, num_heads),
                head_stack(qkv, D, num_heads),
                head_stack(qkv, 2 * D, num_heads))

    def batched_scores(a_s, b_s, num_heads):
        dh = D // num_heads
        return jnp.einsum('gnd,gmd->gnm', a_s, b_s,
                          preferred_element_type=jnp.float32) * (dh ** -0.5)

    def proj_heads(o, w, bias, num_heads):
        # o: (B*H, N, dh) -> lane-concat heads, sublane-concat batch -> one matmul
        rows = [jnp.concatenate([o[b * num_heads + h] for h in range(num_heads)],
                                axis=-1) for b in range(B)]
        o_full = jnp.concatenate(rows, axis=0)                          # (B*N, D)
        return jnp.dot(o_full, w, preferred_element_type=jnp.float32) + bias

    def relation_ce(a_s, b_s, t, num_heads):
        # -sum(t * log_softmax(a b^T * scale)) over all (b, h, n, m) -> (1, 1)
        s = batched_scores(a_s, b_s, num_heads)
        m = jnp.max(s, axis=-1, keepdims=True)
        e = jnp.exp(s - m)
        logp = (s - m) - jnp.log(jnp.sum(e, axis=-1, keepdims=True))
        return _sum_all(-t * logp)

    def mlp(x2, ln_g, ln_b, w1, b1, w2, b2):
        h = _layernorm(x2, ln_g, ln_b)
        h = jnp.dot(h, w1, preferred_element_type=jnp.float32) + b1
        h = _gelu(h)
        return jnp.dot(h, w2, preferred_element_type=jnp.float32) + b2

    # --------------- block 0: relation KD (on input x) + apply ---------------
    q_s, k_s, v_s = qkv_heads(x, ln1_g_ref[0], ln1_b_ref[0],
                              qkv_w_ref[0], qkv_b_ref[0], LAST_HEADS)
    # qk scores are shared between the KD log-softmax and the attention softmax
    s = batched_scores(q_s, k_s, LAST_HEADS)
    m = jnp.max(s, axis=-1, keepdims=True)
    e = jnp.exp(s - m)
    den = jnp.sum(e, axis=-1, keepdims=True)
    logp = (s - m) - jnp.log(den)
    qk_ce = _sum_all(-tqk1_ref[...] * logp)
    vv_ce = relation_ce(v_s, v_s, tvv1_ref[...], LAST_HEADS)

    p = e / den
    o = jnp.einsum('gnm,gmd->gnd', p, v_s, preferred_element_type=jnp.float32)
    x = x + proj_heads(o, proj_w_ref[0], proj_b_ref[0], LAST_HEADS)
    x = x + mlp(x, ln2_g_ref[0], ln2_b_ref[0], fc1_w_ref[0], fc1_b_ref[0],
                fc2_w_ref[0], fc2_b_ref[0])

    # --------------- blocks 1..10: in-kernel layer loop, weights resident ----
    def mid_body(l, x2):
        q_m, k_m, v_m = qkv_heads(x2, ln1_g_ref[l], ln1_b_ref[l],
                                  qkv_w_ref[l], qkv_b_ref[l], NUM_HEADS)
        sm = batched_scores(q_m, k_m, NUM_HEADS)
        mm = jnp.max(sm, axis=-1, keepdims=True)
        em = jnp.exp(sm - mm)
        pm = em / jnp.sum(em, axis=-1, keepdims=True)
        om = jnp.einsum('gnm,gmd->gnd', pm, v_m,
                        preferred_element_type=jnp.float32)
        x2 = x2 + proj_heads(om, proj_w_ref[l], proj_b_ref[l], NUM_HEADS)
        x2 = x2 + mlp(x2, ln2_g_ref[l], ln2_b_ref[l], fc1_w_ref[l], fc1_b_ref[l],
                      fc2_w_ref[l], fc2_b_ref[l])
        return x2

    x = lax.fori_loop(1, DEPTH - 1, mid_body, x)

    # --------------- block 11: relation KD only ------------------------------
    L = DEPTH - 1
    q_s, k_s, v_s = qkv_heads(x, ln1_g_ref[L], ln1_b_ref[L],
                              qkv_w_ref[L], qkv_b_ref[L], LAST_HEADS)
    qk_ce = qk_ce + relation_ce(q_s, k_s, tqk11_ref[...], LAST_HEADS)
    vv_ce = vv_ce + relation_ce(v_s, v_s, tvv11_ref[...], LAST_HEADS)

    qk_ref[...] = qk_ce
    vv_ref[...] = vv_ce


# ----------------------------- model glue ------------------------------------


def patchify(imgs, p):
    # (B, C, H, W) -> (B, num_patches, C*p*p) with (c, ph, pw) flatten order
    B, C, H, W = imgs.shape
    hp, wp = H // p, W // p
    x = imgs.reshape(B, C, hp, p, wp, p)
    x = x.transpose(0, 2, 4, 1, 3, 5)
    return x.reshape(B, hp * wp, C * p * p)


def alivit_forward(imgs, teacher_out, params):
    B = imgs.shape[0]
    patches = patchify(imgs, PATCH_SIZE).reshape(
        B * NUM_PATCHES, IN_CHANS * PATCH_SIZE * PATCH_SIZE)          # (32, 48)

    # (cls + pos[0]) in row 0, pos[1:] in rows 1..16 — precomputed outside.
    base = jnp.concatenate(
        [params["cls_token"] + params["pos_embed"][:1],
         params["pos_embed"][1:]], axis=0)                            # (17, 32)

    # teacher tensors flattened to (B*H_last, N, N): g = b*H + h
    t = [ti.reshape(B * LAST_HEADS, SEQ, SEQ) for ti in teacher_out]

    blk = params["blocks"]   # every leaf stacked as (DEPTH, ...)

    qk_ce, vv_ce = pl.pallas_call(
        _alivit_kernel,
        out_shape=(jax.ShapeDtypeStruct((1, 1), jnp.float32),
                   jax.ShapeDtypeStruct((1, 1), jnp.float32)),
    )(patches, params["patch_w"], params["patch_b"], base,
      blk["ln1_g"], blk["ln1_b"], blk["qkv_w"], blk["qkv_b"],
      blk["proj_w"], blk["proj_b"], blk["ln2_g"], blk["ln2_b"],
      blk["fc1_w"], blk["fc1_b"], blk["fc2_w"], blk["fc2_b"],
      t[0], t[1], t[2], t[3])

    # Teacher entropy term sum(t * log t) is constant w.r.t. the student:
    # computed here in plain XLA (hoisted out of the kernel).
    def ent(tt):
        safe = jnp.where(tt > 0.0, tt, 1.0)
        return jnp.sum(jnp.where(tt > 0.0, tt * jnp.log(safe), 0.0))

    # KLDivLoss(pred.log(), t).sum(-1).mean()  ==  (sum t*log t - sum t*log p) / (B*H*N)
    inv = 1.0 / float(B * LAST_HEADS * SEQ)
    qk_loss = (qk_ce[0, 0] + ent(t[0]) + ent(t[2])) * inv
    vv_loss = (vv_ce[0, 0] + ent(t[1]) + ent(t[3])) * inv
    return qk_loss, vv_loss


# ----------------------------- parameter init --------------------------------


def _get_1d_sincos(embed_dim, pos):
    omega = jnp.arange(embed_dim // 2, dtype=jnp.float32) / (embed_dim / 2.0)
    omega = 1.0 / (10000.0 ** omega)
    out = pos.reshape(-1)[:, None] * omega[None, :]
    return jnp.concatenate([jnp.sin(out), jnp.cos(out)], axis=1)


def get_2d_sincos_pos_embed(embed_dim, grid_size, cls_token=False):
    gh = jnp.arange(grid_size, dtype=jnp.float32)
    gw = jnp.arange(grid_size, dtype=jnp.float32)
    mesh = jnp.meshgrid(gw, gh)  # matches np.meshgrid(grid_w, grid_h)
    emb0 = _get_1d_sincos(embed_dim // 2, mesh[0])
    emb1 = _get_1d_sincos(embed_dim // 2, mesh[1])
    pos = jnp.concatenate([emb0, emb1], axis=1)
    if cls_token:
        pos = jnp.concatenate([jnp.zeros((1, embed_dim), jnp.float32), pos], 0)
    return pos


def init_params(key):
    keys = iter(jax.random.split(key, 64))
    D = EMBED_DIM

    def xavier(shape):
        bound = math.sqrt(6.0 / (shape[0] + shape[1]))
        return jax.random.uniform(next(keys), shape, jnp.float32, -bound, bound)

    def block_params():
        return dict(
            ln1_g=jnp.ones((1, D), jnp.float32),
            ln1_b=jnp.zeros((1, D), jnp.float32),
            qkv_w=xavier((D, 3 * D)),
            qkv_b=jnp.zeros((1, 3 * D), jnp.float32),
            proj_w=xavier((D, D)),
            proj_b=jnp.zeros((1, D), jnp.float32),
            ln2_g=jnp.ones((1, D), jnp.float32),
            ln2_b=jnp.zeros((1, D), jnp.float32),
            fc1_w=xavier((D, HIDDEN)),
            fc1_b=jnp.zeros((1, HIDDEN), jnp.float32),
            fc2_w=xavier((HIDDEN, D)),
            fc2_b=jnp.zeros((1, D), jnp.float32),
        )

    blocks = [block_params() for _ in range(DEPTH)]
    stacked = jax.tree_util.tree_map(lambda *xs: jnp.stack(xs, 0), *blocks)

    params = dict(
        patch_w=xavier((IN_CHANS * PATCH_SIZE * PATCH_SIZE, D)),
        # TODO(synk): Conv2d default bias init (uniform) not reproduced; zeros used.
        patch_b=jnp.zeros((1, D), jnp.float32),
        cls_token=0.02 * jax.random.normal(next(keys), (1, D), jnp.float32),
        pos_embed=get_2d_sincos_pos_embed(D, int(NUM_PATCHES ** 0.5),
                                          cls_token=True),            # (SEQ, D)
        blocks=stacked,
    )
    return params


# ----------------------------- main -------------------------------------------

if __name__ == "__main__":
    key = jax.random.PRNGKey(0)
    k_param, k_img, k_t = jax.random.split(key, 3)

    params = init_params(k_param)
    imgs = jax.random.normal(k_img, (BATCH, IN_CHANS, IMG_SIZE, IMG_SIZE),
                             jnp.float32)

    # teacher outputs: softmax distributions matching qk_1/vv_1/qk/vv shapes
    tkeys = jax.random.split(k_t, 4)
    teacher_out = [
        jax.nn.softmax(jax.random.normal(tkeys[i],
                                         (BATCH, LAST_HEADS, SEQ, SEQ),
                                         jnp.float32), axis=-1)
        for i in range(4)
    ]

    qk_loss, vv_loss = jax.jit(alivit_forward)(imgs, teacher_out, params)
    jax.block_until_ready((qk_loss, vv_loss))
    assert jnp.isfinite(qk_loss) and jnp.isfinite(vv_loss)
    print("KERNEL_OK")
</pallas_src>

<mosaic_0001>
module attributes {stable_mosaic.version = 11 : i64} {
  func.func @_alivit_kernel(%arg0: memref<32x48xf32, #tpu.memory_space<vmem>>, %arg1: memref<48x32xf32, #tpu.memory_space<vmem>>, %arg2: memref<1x32xf32, #tpu.memory_space<vmem>>, %arg3: memref<17x32xf32, #tpu.memory_space<vmem>>, %arg4: memref<12x1x32xf32, #tpu.memory_space<vmem>>, %arg5: memref<12x1x32xf32, #tpu.memory_space<vmem>>, %arg6: memref<12x32x96xf32, #tpu.memory_space<vmem>>, %arg7: memref<12x1x96xf32, #tpu.memory_space<vmem>>, %arg8: memref<12x32x32xf32, #tpu.memory_space<vmem>>, %arg9: memref<12x1x32xf32, #tpu.memory_space<vmem>>, %arg10: memref<12x1x32xf32, #tpu.memory_space<vmem>>, %arg11: memref<12x1x32xf32, #tpu.memory_space<vmem>>, %arg12: memref<12x32x128xf32, #tpu.memory_space<vmem>>, %arg13: memref<12x1x128xf32, #tpu.memory_space<vmem>>, %arg14: memref<12x128x32xf32, #tpu.memory_space<vmem>>, %arg15: memref<12x1x32xf32, #tpu.memory_space<vmem>>, %arg16: memref<4x17x17xf32, #tpu.memory_space<vmem>>, %arg17: memref<4x17x17xf32, #tpu.memory_space<vmem>>, %arg18: memref<4x17x17xf32, #tpu.memory_space<vmem>>, %arg19: memref<4x17x17xf32, #tpu.memory_space<vmem>>, %arg20: memref<1x1xf32, #tpu.memory_space<vmem>>, %arg21: memref<1x1xf32, #tpu.memory_space<vmem>>) attributes {dimension_semantics = [], scalar_prefetch = 0 : i64, scratch_operands = 0 : i64, tpu.core_type = #tpu.core_type<tc>} {
    %c0 = arith.constant 0 : index
    %c0_0 = arith.constant 0 : index
    %0 = vector.load %arg0[%c0, %c0_0] : memref<32x48xf32, #tpu.memory_space<vmem>>, vector<32x48xf32>
    %c0_1 = arith.constant 0 : index
    %c0_2 = arith.constant 0 : index
    %1 = vector.load %arg1[%c0_1, %c0_2] : memref<48x32xf32, #tpu.memory_space<vmem>>, vector<48x32xf32>
    %cst = arith.constant dense<0.000000e+00> : vector<32x32xf32>
    %2 = tpu.matmul %0, %1, %cst {dimension_numbers = #tpu.dot_dimension_numbers<[1], [0], [0], [1], [0, 0, 1, 1], [], []>} : vector<32x48xf32>, vector<48x32xf32>, vector<32x32xf32> -> vector<32x32xf32>
    %c0_3 = arith.constant 0 : index
    %c0_4 = arith.constant 0 : index
    %3 = vector.load %arg2[%c0_3, %c0_4] : memref<1x32xf32, #tpu.memory_space<vmem>>, vector<1x32xf32>
    %4 = vector.broadcast %3 : vector<1x32xf32> to vector<32x32xf32>
    %5 = arith.addf %2, %4 : vector<32x32xf32>
    %c0_5 = arith.constant 0 : index
    %c0_6 = arith.constant 0 : index
    %6 = vector.load %arg3[%c0_5, %c0_6] : memref<17x32xf32, #tpu.memory_space<vmem>>, vector<17x32xf32>
    %7 = vector.extract_strided_slice %6 {offsets = [0, 0], sizes = [1, 32], strides = [1, 1]} : vector<17x32xf32> to vector<1x32xf32>
    %8 = vector.extract_strided_slice %6 {offsets = [1, 0], sizes = [16, 32], strides = [1, 1]} : vector<17x32xf32> to vector<16x32xf32>
    %9 = vector.extract_strided_slice %5 {offsets = [0, 0], sizes = [16, 32], strides = [1, 1]} : vector<32x32xf32> to vector<16x32xf32>
    %10 = arith.addf %8, %9 : vector<16x32xf32>
    %11 = vector.extract_strided_slice %6 {offsets = [0, 0], sizes = [1, 32], strides = [1, 1]} : vector<17x32xf32> to vector<1x32xf32>
    %12 = vector.extract_strided_slice %6 {offsets = [1, 0], sizes = [16, 32], strides = [1, 1]} : vector<17x32xf32> to vector<16x32xf32>
    %13 = vector.extract_strided_slice %5 {offsets = [16, 0], sizes = [16, 32], strides = [1, 1]} : vector<32x32xf32> to vector<16x32xf32>
    %14 = arith.addf %12, %13 : vector<16x32xf32>
    %15 = tpu.concatenate %7, %10, %11, %14 in 0 : vector<1x32xf32>, vector<16x32xf32>, vector<1x32xf32>, vector<16x32xf32> -> vector<34x32xf32>
    %c0_7 = arith.constant 0 : index
    %c0_8 = arith.constant 0 : index
    %c0_9 = arith.constant 0 : index
    %16 = vector.load %arg4[%c0_7, %c0_8, %c0_9] : memref<12x1x32xf32, #tpu.memory_space<vmem>>, vector<1x1x32xf32>
    %17 = vector.shape_cast %16 : vector<1x1x32xf32> to vector<1x32xf32>
    %c0_10 = arith.constant 0 : index
    %c0_11 = arith.constant 0 : index
    %c0_12 = arith.constant 0 : index
    %18 = vector.load %arg5[%c0_10, %c0_11, %c0_12] : memref<12x1x32xf32, #tpu.memory_space<vmem>>, vector<1x1x32xf32>
    %19 = vector.shape_cast %18 : vector<1x1x32xf32> to vector<1x32xf32>
    %c0_13 = arith.constant 0 : index
    %c0_14 = arith.constant 0 : index
    %c0_15 = arith.constant 0 : index
    %20 = vector.load %arg6[%c0_13, %c0_14, %c0_15] : memref<12x32x96xf32, #tpu.memory_space<vmem>>, vector<1x32x96xf32>
    %21 = vector.shape_cast %20 : vector<1x32x96xf32> to vector<32x96xf32>
    %c0_16 = arith.constant 0 : index
    %c0_17 = arith.constant 0 : index
    %c0_18 = arith.constant 0 : index
    %22 = vector.load %arg7[%c0_16, %c0_17, %c0_18] : memref<12x1x96xf32, #tpu.memory_space<vmem>>, vector<1x1x96xf32>
    %23 = vector.shape_cast %22 : vector<1x1x96xf32> to vector<1x96xf32>
    %cst_19 = arith.constant dense<0.000000e+00> : vector<34xf32>
    %24 = vector.multi_reduction <add>, %15, %cst_19 [1] : vector<34x32xf32> to vector<34xf32>
    %25 = vector.shape_cast %24 : vector<34xf32> to vector<34x1xf32>
    %cst_20 = arith.constant 3.200000e+01 : f32
    %26 = vector.broadcast %cst_20 : f32 to vector<34x1xf32>
    %27 = arith.divf %25, %26 : vector<34x1xf32>
    %28 = vector.broadcast %27 : vector<34x1xf32> to vector<34x32xf32>
    %29 = arith.subf %15, %28 : vector<34x32xf32>
    %30 = arith.mulf %29, %29 : vector<34x32xf32>
    %cst_21 = arith.constant dense<0.000000e+00> : vector<34xf32>
    %31 = vector.multi_reduction <add>, %30, %cst_21 [1] : vector<34x32xf32> to vector<34xf32>
    %32 = vector.shape_cast %31 : vector<34xf32> to vector<34x1xf32>
    %cst_22 = arith.constant 3.200000e+01 : f32
    %33 = vector.broadcast %cst_22 : f32 to vector<34x1xf32>
    %34 = arith.divf %32, %33 : vector<34x1xf32>
    %cst_23 = arith.constant 9.99999974E-6 : f32
    %35 = vector.broadcast %cst_23 : f32 to vector<34x1xf32>
    %36 = arith.addf %34, %35 : vector<34x1xf32>
    %37 = math.rsqrt %36 : vector<34x1xf32>
    %38 = vector.broadcast %37 : vector<34x1xf32> to vector<34x32xf32>
    %39 = arith.mulf %29, %38 : vector<34x32xf32>
    %40 = vector.broadcast %17 : vector<1x32xf32> to vector<34x32xf32>
    %41 = arith.mulf %39, %40 : vector<34x32xf32>
    %42 = vector.broadcast %19 : vector<1x32xf32> to vector<34x32xf32>
    %43 = arith.addf %41, %42 : vector<34x32xf32>
    %cst_24 = arith.constant dense<0.000000e+00> : vector<34x96xf32>
    %44 = tpu.matmul %43, %21, %cst_24 {dimension_numbers = #tpu.dot_dimension_numbers<[1], [0], [0], [1], [0, 0, 1, 1], [], []>} : vector<34x32xf32>, vector<32x96xf32>, vector<34x96xf32> -> vector<34x96xf32>
    %45 = vector.broadcast %23 : vector<1x96xf32> to vector<34x96xf32>
    %46 = arith.addf %44, %45 : vector<34x96xf32>
    %47 = vector.extract_strided_slice %46 {offsets = [0, 0], sizes = [17, 96], strides = [1, 1]} : vector<34x96xf32> to vector<17x96xf32>
    %48 = vector.extract_strided_slice %47 {offsets = [0, 0], sizes = [17, 16], strides = [1, 1]} : vector<17x96xf32> to vector<17x16xf32>
    %49 = vector.shape_cast %48 : vector<17x16xf32> to vector<1x17x16xf32>
    %50 = vector.extract_strided_slice %47 {offsets = [0, 16], sizes = [17, 16], strides = [1, 1]} : vector<17x96xf32> to vector<17x16xf32>
    %51 = vector.shape_cast %50 : vector<17x16xf32> to vector<1x17x16xf32>
    %52 = vector.extract_strided_slice %46 {offsets = [17, 0], sizes = [17, 96], strides = [1, 1]} : vector<34x96xf32> to vector<17x96xf32>
    %53 = vector.extract_strided_slice %52 {offsets = [0, 0], sizes = [17, 16], strides = [1, 1]} : vector<17x96xf32> to vector<17x16xf32>
    %54 = vector.shape_cast %53 : vector<17x16xf32> to vector<1x17x16xf32>
    %55 = vector.extract_strided_slice %52 {offsets = [0, 16], sizes = [17, 16], strides = [1, 1]} : vector<17x96xf32> to vector<17x16xf32>
    %56 = vector.shape_cast %55 : vector<17x16xf32> to vector<1x17x16xf32>
    %57 = tpu.concatenate %49, %51, %54, %56 in 0 : vector<1x17x16xf32>, vector<1x17x16xf32>, vector<1x17x16xf32>, vector<1x17x16xf32> -> vector<4x17x16xf32>
    %58 = vector.extract_strided_slice %46 {offsets = [0, 0], sizes = [17, 96], strides = [1, 1]} : vector<34x96xf32> to vector<17x96xf32>
    %59 = vector.extract_strided_slice %58 {offsets = [0, 32], sizes = [17, 16], strides = [1, 1]} : vector<17x96xf32> to vector<17x16xf32>
    %60 = vector.shape_cast %59 : vector<17x16xf32> to vector<1x17x16xf32>
    %61 = vector.extract_strided_slice %58 {offsets = [0, 48], sizes = [17, 16], strides = [1, 1]} : vector<17x96xf32> to vector<17x16xf32>
    %62 = vector.shape_cast %61 : vector<17x16xf32> to vector<1x17x16xf32>
    %63 = vector.extract_strided_slice %46 {offsets = [17, 0], sizes = [17, 96], strides = [1, 1]} : vector<34x96xf32> to vector<17x96xf32>
    %64 = vector.extract_strided_slice %63 {offsets = [0, 32], sizes = [17, 16], strides = [1, 1]} : vector<17x96xf32> to vector<17x16xf32>
    %65 = vector.shape_cast %64 : vector<17x16xf32> to vector<1x17x16xf32>
    %66 = vector.extract_strided_slice %63 {offsets = [0, 48], sizes = [17, 16], strides = [1, 1]} : vector<17x96xf32> to vector<17x16xf32>
    %67 = vector.shape_cast %66 : vector<17x16xf32> to vector<1x17x16xf32>
    %68 = tpu.concatenate %60, %62, %65, %67 in 0 : vector<1x17x16xf32>, vector<1x17x16xf32>, vector<1x17x16xf32>, vector<1x17x16xf32> -> vector<4x17x16xf32>
    %69 = vector.extract_strided_slice %46 {offsets = [0, 0], sizes = [17, 96], strides = [1, 1]} : vector<34x96xf32> to vector<17x96xf32>
    %70 = vector.extract_strided_slice %69 {offsets = [0, 64], sizes = [17, 16], strides = [1, 1]} : vector<17x96xf32> to vector<17x16xf32>
    %71 = vector.shape_cast %70 : vector<17x16xf32> to vector<1x17x16xf32>
    %72 = vector.extract_strided_slice %69 {offsets = [0, 80], sizes = [17, 16], strides = [1, 1]} : vector<17x96xf32> to vector<17x16xf32>
    %73 = vector.shape_cast %72 : vector<17x16xf32> to vector<1x17x16xf32>
    %74 = vector.extract_strided_slice %46 {offsets = [17, 0], sizes = [17, 96], strides = [1, 1]} : vector<34x96xf32> to vector<17x96xf32>
    %75 = vector.extract_strided_slice %74 {offsets = [0, 64], sizes = [17, 16], strides = [1, 1]} : vector<17x96xf32> to vector<17x16xf32>
    %76 = vector.shape_cast %75 : vector<17x16xf32> to vector<1x17x16xf32>
    %77 = vector.extract_strided_slice %74 {offsets = [0, 80], sizes = [17, 16], strides = [1, 1]} : vector<17x96xf32> to vector<17x16xf32>
    %78 = vector.shape_cast %77 : vector<17x16xf32> to vector<1x17x16xf32>
    %79 = tpu.concatenate %71, %73, %76, %78 in 0 : vector<1x17x16xf32>, vector<1x17x16xf32>, vector<1x17x16xf32>, vector<1x17x16xf32> -> vector<4x17x16xf32>
    "tpu.trace_start"() <{level = 10 : i32, message = "gnd,gmd->gnm"}> : () -> ()
    %cst_25 = arith.constant dense<0.000000e+00> : vector<4x17x17xf32>
    %80 = tpu.matmul %57, %68, %cst_25 {dimension_numbers = #tpu.dot_dimension_numbers<[2], [2], [1], [1], [0, 0, 0, 1, 1, 1], [0], [0]>} : vector<4x17x16xf32>, vector<4x17x16xf32>, vector<4x17x17xf32> -> vector<4x17x17xf32>
    "tpu.trace_stop"() : () -> ()
    %cst_26 = arith.constant 2.500000e-01 : f32
    %81 = vector.broadcast %cst_26 : f32 to vector<4x17x17xf32>
    %82 = arith.mulf %80, %81 : vector<4x17x17xf32>
    %cst_27 = arith.constant dense<0xFF800000> : vector<4x17xf32>
    %83 = vector.multi_reduction <maximumf>, %82, %cst_27 [2] : vector<4x17x17xf32> to vector<4x17xf32>
    %84 = vector.shape_cast %83 : vector<4x17xf32> to vector<4x17x1xf32>
    %85 = vector.broadcast %84 : vector<4x17x1xf32> to vector<4x17x17xf32>
    %86 = arith.subf %82, %85 : vector<4x17x17xf32>
    %87 = math.exp %86 : vector<4x17x17xf32>
    %cst_28 = arith.constant dense<0.000000e+00> : vector<4x17xf32>
    %88 = vector.multi_reduction <add>, %87, %cst_28 [2] : vector<4x17x17xf32> to vector<4x17xf32>
    %89 = vector.shape_cast %88 : vector<4x17xf32> to vector<4x17x1xf32>
    %90 = vector.broadcast %84 : vector<4x17x1xf32> to vector<4x17x17xf32>
    %91 = arith.subf %82, %90 : vector<4x17x17xf32>
    %92 = math.log %89 : vector<4x17x1xf32>
    %93 = vector.broadcast %92 : vector<4x17x1xf32> to vector<4x17x17xf32>
    %94 = arith.subf %91, %93 : vector<4x17x17xf32>
    %c0_29 = arith.constant 0 : index
    %c0_30 = arith.constant 0 : index
    %c0_31 = arith.constant 0 : index
    %95 = vector.load %arg16[%c0_29, %c0_30, %c0_31] : memref<4x17x17xf32, #tpu.memory_space<vmem>>, vector<4x17x17xf32>
    %cst_32 = arith.constant 0.000000e+00 : f32
    %96 = vector.broadcast %cst_32 : f32 to vector<4x17x17xf32>
    %97 = arith.subf %96, %95 : vector<4x17x17xf32>
    %98 = arith.mulf %97, %94 : vector<4x17x17xf32>
    %cst_33 = arith.constant dense<0.000000e+00> : vector<4x17xf32>
    %99 = vector.multi_reduction <add>, %98, %cst_33 [2] : vector<4x17x17xf32> to vector<4x17xf32>
    %100 = vector.shape_cast %99 : vector<4x17xf32> to vector<4x17x1xf32>
    %cst_34 = arith.constant dense<0.000000e+00> : vector<17x1xf32>
    %101 = vector.multi_reduction <add>, %100, %cst_34 [0] : vector<4x17x1xf32> to vector<17x1xf32>
    %cst_35 = arith.constant dense<0.000000e+00> : vector<1xf32>
    %102 = vector.multi_reduction <add>, %101, %cst_35 [0] : vector<17x1xf32> to vector<1xf32>
    %103 = vector.shape_cast %102 : vector<1xf32> to vector<1x1xf32>
    %c0_36 = arith.constant 0 : index
    %c0_37 = arith.constant 0 : index
    %c0_38 = arith.constant 0 : index
    %104 = vector.load %arg17[%c0_36, %c0_37, %c0_38] : memref<4x17x17xf32, #tpu.memory_space<vmem>>, vector<4x17x17xf32>
    "tpu.trace_start"() <{level = 10 : i32, message = "gnd,gmd->gnm"}> : () -> ()
    %cst_39 = arith.constant dense<0.000000e+00> : vector<4x17x17xf32>
    %105 = tpu.matmul %79, %79, %cst_39 {dimension_numbers = #tpu.dot_dimension_numbers<[2], [2], [1], [1], [0, 0, 0, 1, 1, 1], [0], [0]>} : vector<4x17x16xf32>, vector<4x17x16xf32>, vector<4x17x17xf32> -> vector<4x17x17xf32>
    "tpu.trace_stop"() : () -> ()
    %cst_40 = arith.constant 2.500000e-01 : f32
    %106 = vector.broadcast %cst_40 : f32 to vector<4x17x17xf32>
    %107 = arith.mulf %105, %106 : vector<4x17x17xf32>
    %cst_41 = arith.constant dense<0xFF800000> : vector<4x17xf32>
    %108 = vector.multi_reduction <maximumf>, %107, %cst_41 [2] : vector<4x17x17xf32> to vector<4x17xf32>
    %109 = vector.shape_cast %108 : vector<4x17xf32> to vector<4x17x1xf32>
    %110 = vector.broadcast %109 : vector<4x17x1xf32> to vector<4x17x17xf32>
    %111 = arith.subf %107, %110 : vector<4x17x17xf32>
    %112 = math.exp %111 : vector<4x17x17xf32>
    %113 = vector.broadcast %109 : vector<4x17x1xf32> to vector<4x17x17xf32>
    %114 = arith.subf %107, %113 : vector<4x17x17xf32>
    %cst_42 = arith.constant dense<0.000000e+00> : vector<4x17xf32>
    %115 = vector.multi_reduction <add>, %112, %cst_42 [2] : vector<4x17x17xf32> to vector<4x17xf32>
    %116 = vector.shape_cast %115 : vector<4x17xf32> to vector<4x17x1xf32>
    %117 = math.log %116 : vector<4x17x1xf32>
    %118 = vector.broadcast %117 : vector<4x17x1xf32> to vector<4x17x17xf32>
    %119 = arith.subf %114, %118 : vector<4x17x17xf32>
    %cst_43 = arith.constant 0.000000e+00 : f32
    %120 = vector.broadcast %cst_43 : f32 to vector<4x17x17xf32>
    %121 = arith.subf %120, %104 : vector<4x17x17xf32>
    %122 = arith.mulf %121, %119 : vector<4x17x17xf32>
    %cst_44 = arith.constant dense<0.000000e+00> : vector<4x17xf32>
    %123 = vector.multi_reduction <add>, %122, %cst_44 [2] : vector<4x17x17xf32> to vector<4x17xf32>
    %124 = vector.shape_cast %123 : vector<4x17xf32> to vector<4x17x1xf32>
    %cst_45 = arith.constant dense<0.000000e+00> : vector<17x1xf32>
    %125 = vector.multi_reduction <add>, %124, %cst_45 [0] : vector<4x17x1xf32> to vector<17x1xf32>
    %cst_46 = arith.constant dense<0.000000e+00> : vector<1xf32>
    %126 = vector.multi_reduction <add>, %125, %cst_46 [0] : vector<17x1xf32> to vector<1xf32>
    %127 = vector.shape_cast %126 : vector<1xf32> to vector<1x1xf32>
    %128 = vector.broadcast %89 : vector<4x17x1xf32> to vector<4x17x17xf32>
    %129 = arith.divf %87, %128 : vector<4x17x17xf32>
    "tpu.trace_start"() <{level = 10 : i32, message = "gnm,gmd->gnd"}> : () -> ()
    %cst_47 = arith.constant dense<0.000000e+00> : vector<4x17x16xf32>
    %130 = tpu.matmul %129, %79, %cst_47 {dimension_numbers = #tpu.dot_dimension_numbers<[2], [1], [1], [2], [0, 0, 0, 1, 1, 2], [0], [0]>} : vector<4x17x17xf32>, vector<4x17x16xf32>, vector<4x17x16xf32> -> vector<4x17x16xf32>
    "tpu.trace_stop"() : () -> ()
    %c0_48 = arith.constant 0 : index
    %c0_49 = arith.constant 0 : index
    %c0_50 = arith.constant 0 : index
    %131 = vector.load %arg8[%c0_48, %c0_49, %c0_50] : memref<12x32x32xf32, #tpu.memory_space<vmem>>, vector<1x32x32xf32>
    %132 = vector.shape_cast %131 : vector<1x32x32xf32> to vector<32x32xf32>
    %c0_51 = arith.constant 0 : index
    %c0_52 = arith.constant 0 : index
    %c0_53 = arith.constant 0 : index
    %133 = vector.load %arg9[%c0_51, %c0_52, %c0_53] : memref<12x1x32xf32, #tpu.memory_space<vmem>>, vector<1x1x32xf32>
    %134 = vector.shape_cast %133 : vector<1x1x32xf32> to vector<1x32xf32>
    %135 = vector.extract_strided_slice %130 {offsets = [0, 0, 0], sizes = [1, 17, 16], strides = [1, 1, 1]} : vector<4x17x16xf32> to vector<1x17x16xf32>
    %136 = vector.shape_cast %135 : vector<1x17x16xf32> to vector<17x16xf32>
    %137 = vector.extract_strided_slice %130 {offsets = [1, 0, 0], sizes = [1, 17, 16], strides = [1, 1, 1]} : vector<4x17x16xf32> to vector<1x17x16xf32>
    %138 = vector.shape_cast %137 : vector<1x17x16xf32> to vector<17x16xf32>
    %139 = tpu.concatenate %136, %138 in 1 : vector<17x16xf32>, vector<17x16xf32> -> vector<17x32xf32>
    %140 = vector.extract_strided_slice %130 {offsets = [2, 0, 0], sizes = [1, 17, 16], strides = [1, 1, 1]} : vector<4x17x16xf32> to vector<1x17x16xf32>
    %141 = vector.shape_cast %140 : vector<1x17x16xf32> to vector<17x16xf32>
    %142 = vector.extract_strided_slice %130 {offsets = [3, 0, 0], sizes = [1, 17, 16], strides = [1, 1, 1]} : vector<4x17x16xf32> to vector<1x17x16xf32>
    %143 = vector.shape_cast %142 : vector<1x17x16xf32> to vector<17x16xf32>
    %144 = tpu.concatenate %141, %143 in 1 : vector<17x16xf32>, vector<17x16xf32> -> vector<17x32xf32>
    %145 = tpu.concatenate %139, %144 in 0 : vector<17x32xf32>, vector<17x32xf32> -> vector<34x32xf32>
    %cst_54 = arith.constant dense<0.000000e+00> : vector<34x32xf32>
    %146 = tpu.matmul %145, %132, %cst_54 {dimension_numbers = #tpu.dot_dimension_numbers<[1], [0], [0], [1], [0, 0, 1, 1], [], []>} : vector<34x32xf32>, vector<32x32xf32>, vector<34x32xf32> -> vector<34x32xf32>
    %147 = vector.broadcast %134 : vector<1x32xf32> to vector<34x32xf32>
    %148 = arith.addf %146, %147 : vector<34x32xf32>
    %149 = arith.addf %15, %148 : vector<34x32xf32>
    %c0_55 = arith.constant 0 : index
    %c0_56 = arith.constant 0 : index
    %c0_57 = arith.constant 0 : index
    %150 = vector.load %arg10[%c0_55, %c0_56, %c0_57] : memref<12x1x32xf32, #tpu.memory_space<vmem>>, vector<1x1x32xf32>
    %151 = vector.shape_cast %150 : vector<1x1x32xf32> to vector<1x32xf32>
    %c0_58 = arith.constant 0 : index
    %c0_59 = arith.constant 0 : index
    %c0_60 = arith.constant 0 : index
    %152 = vector.load %arg11[%c0_58, %c0_59, %c0_60] : memref<12x1x32xf32, #tpu.memory_space<vmem>>, vector<1x1x32xf32>
    %153 = vector.shape_cast %152 : vector<1x1x32xf32> to vector<1x32xf32>
    %c0_61 = arith.constant 0 : index
    %c0_62 = arith.constant 0 : index
    %c0_63 = arith.constant 0 : index
    %154 = vector.load %arg12[%c0_61, %c0_62, %c0_63] : memref<12x32x128xf32, #tpu.memory_space<vmem>>, vector<1x32x128xf32>
    %155 = vector.shape_cast %154 : vector<1x32x128xf32> to vector<32x128xf32>
    %c0_64 = arith.constant 0 : index
    %c0_65 = arith.constant 0 : index
    %c0_66 = arith.constant 0 : index
    %156 = vector.load %arg13[%c0_64, %c0_65, %c0_66] : memref<12x1x128xf32, #tpu.memory_space<vmem>>, vector<1x1x128xf32>
    %157 = vector.shape_cast %156 : vector<1x1x128xf32> to vector<1x128xf32>
    %c0_67 = arith.constant 0 : index
    %c0_68 = arith.constant 0 : index
    %c0_69 = arith.constant 0 : index
    %158 = vector.load %arg14[%c0_67, %c0_68, %c0_69] : memref<12x128x32xf32, #tpu.memory_space<vmem>>, vector<1x128x32xf32>
    %159 = vector.shape_cast %158 : vector<1x128x32xf32> to vector<128x32xf32>
    %c0_70 = arith.constant 0 : index
    %c0_71 = arith.constant 0 : index
    %c0_72 = arith.constant 0 : index
    %160 = vector.load %arg15[%c0_70, %c0_71, %c0_72] : memref<12x1x32xf32, #tpu.memory_space<vmem>>, vector<1x1x32xf32>
    %161 = vector.shape_cast %160 : vector<1x1x32xf32> to vector<1x32xf32>
    %cst_73 = arith.constant dense<0.000000e+00> : vector<34xf32>
    %162 = vector.multi_reduction <add>, %149, %cst_73 [1] : vector<34x32xf32> to vector<34xf32>
    %163 = vector.shape_cast %162 : vector<34xf32> to vector<34x1xf32>
    %cst_74 = arith.constant 3.200000e+01 : f32
    %164 = vector.broadcast %cst_74 : f32 to vector<34x1xf32>
    %165 = arith.divf %163, %164 : vector<34x1xf32>
    %166 = vector.broadcast %165 : vector<34x1xf32> to vector<34x32xf32>
    %167 = arith.subf %149, %166 : vector<34x32xf32>
    %168 = arith.mulf %167, %167 : vector<34x32xf32>
    %cst_75 = arith.constant dense<0.000000e+00> : vector<34xf32>
    %169 = vector.multi_reduction <add>, %168, %cst_75 [1] : vector<34x32xf32> to vector<34xf32>
    %170 = vector.shape_cast %169 : vector<34xf32> to vector<34x1xf32>
    %cst_76 = arith.constant 3.200000e+01 : f32
    %171 = vector.broadcast %cst_76 : f32 to vector<34x1xf32>
    %172 = arith.divf %170, %171 : vector<34x1xf32>
    %cst_77 = arith.constant 9.99999974E-6 : f32
    %173 = vector.broadcast %cst_77 : f32 to vector<34x1xf32>
    %174 = arith.addf %172, %173 : vector<34x1xf32>
    %175 = math.rsqrt %174 : vector<34x1xf32>
    %176 = vector.broadcast %175 : vector<34x1xf32> to vector<34x32xf32>
    %177 = arith.mulf %167, %176 : vector<34x32xf32>
    %178 = vector.broadcast %151 : vector<1x32xf32> to vector<34x32xf32>
    %179 = arith.mulf %177, %178 : vector<34x32xf32>
    %180 = vector.broadcast %153 : vector<1x32xf32> to vector<34x32xf32>
    %181 = arith.addf %179, %180 : vector<34x32xf32>
    %cst_78 = arith.constant dense<0.000000e+00> : vector<34x128xf32>
    %182 = tpu.matmul %181, %155, %cst_78 {dimension_numbers = #tpu.dot_dimension_numbers<[1], [0], [0], [1], [0, 0, 1, 1], [], []>} : vector<34x32xf32>, vector<32x128xf32>, vector<34x128xf32> -> vector<34x128xf32>
    %183 = vector.broadcast %157 : vector<1x128xf32> to vector<34x128xf32>
    %184 = arith.addf %182, %183 : vector<34x128xf32>
    %cst_79 = arith.constant 5.000000e-01 : f32
    %185 = vector.broadcast %cst_79 : f32 to vector<34x128xf32>
    %186 = arith.mulf %185, %184 : vector<34x128xf32>
    %cst_80 = arith.constant 0.707106769 : f32
    %187 = vector.broadcast %cst_80 : f32 to vector<34x128xf32>
    %188 = arith.mulf %184, %187 : vector<34x128xf32>
    %189 = math.erf %188 : vector<34x128xf32>
    %cst_81 = arith.constant 1.000000e+00 : f32
    %190 = vector.broadcast %cst_81 : f32 to vector<34x128xf32>
    %191 = arith.addf %190, %189 : vector<34x128xf32>
    %192 = arith.mulf %186, %191 : vector<34x128xf32>
    %cst_82 = arith.constant dense<0.000000e+00> : vector<34x32xf32>
    %193 = tpu.matmul %192, %159, %cst_82 {dimension_numbers = #tpu.dot_dimension_numbers<[1], [0], [0], [1], [0, 0, 1, 1], [], []>} : vector<34x128xf32>, vector<128x32xf32>, vector<34x32xf32> -> vector<34x32xf32>
    %194 = vector.broadcast %161 : vector<1x32xf32> to vector<34x32xf32>
    %195 = arith.addf %193, %194 : vector<34x32xf32>
    %196 = arith.addf %149, %195 : vector<34x32xf32>
    %c1_i32 = arith.constant 1 : i32
    %c10_i32 = arith.constant 10 : i32
    %197 = arith.addi %c1_i32, %c10_i32 : i32
    %c1_i32_83 = arith.constant 1 : i32
    %198 = scf.for %arg22 = %c1_i32 to %197 step %c1_i32_83 iter_args(%arg23 = %196) -> (vector<34x32xf32>)  : i32 {
      %315 = arith.index_cast %arg22 : i32 to index
      %c0_128 = arith.constant 0 : index
      %c0_129 = arith.constant 0 : index
      %316 = vector.load %arg4[%315, %c0_128, %c0_129] : memref<12x1x32xf32, #tpu.memory_space<vmem>>, vector<1x1x32xf32>
      %317 = vector.shape_cast %316 : vector<1x1x32xf32> to vector<1x32xf32>
      %318 = arith.index_cast %arg22 : i32 to index
      %c0_130 = arith.constant 0 : index
      %c0_131 = arith.constant 0 : index
      %319 = vector.load %arg5[%318, %c0_130, %c0_131] : memref<12x1x32xf32, #tpu.memory_space<vmem>>, vector<1x1x32xf32>
      %320 = vector.shape_cast %319 : vector<1x1x32xf32> to vector<1x32xf32>
      %321 = arith.index_cast %arg22 : i32 to index
      %c0_132 = arith.constant 0 : index
      %c0_133 = arith.constant 0 : index
      %322 = vector.load %arg6[%321, %c0_132, %c0_133] : memref<12x32x96xf32, #tpu.memory_space<vmem>>, vector<1x32x96xf32>
      %323 = vector.shape_cast %322 : vector<1x32x96xf32> to vector<32x96xf32>
      %324 = arith.index_cast %arg22 : i32 to index
      %c0_134 = arith.constant 0 : index
      %c0_135 = arith.constant 0 : index
      %325 = vector.load %arg7[%324, %c0_134, %c0_135] : memref<12x1x96xf32, #tpu.memory_space<vmem>>, vector<1x1x96xf32>
      %326 = vector.shape_cast %325 : vector<1x1x96xf32> to vector<1x96xf32>
      %cst_136 = arith.constant dense<0.000000e+00> : vector<34xf32>
      %327 = vector.multi_reduction <add>, %arg23, %cst_136 [1] : vector<34x32xf32> to vector<34xf32>
      %328 = vector.shape_cast %327 : vector<34xf32> to vector<34x1xf32>
      %cst_137 = arith.constant 3.200000e+01 : f32
      %329 = vector.broadcast %cst_137 : f32 to vector<34x1xf32>
      %330 = arith.divf %328, %329 : vector<34x1xf32>
      %331 = vector.broadcast %330 : vector<34x1xf32> to vector<34x32xf32>
      %332 = arith.subf %arg23, %331 : vector<34x32xf32>
      %333 = arith.mulf %332, %332 : vector<34x32xf32>
      %cst_138 = arith.constant dense<0.000000e+00> : vector<34xf32>
      %334 = vector.multi_reduction <add>, %333, %cst_138 [1] : vector<34x32xf32> to vector<34xf32>
      %335 = vector.shape_cast %334 : vector<34xf32> to vector<34x1xf32>
      %cst_139 = arith.constant 3.200000e+01 : f32
      %336 = vector.broadcast %cst_139 : f32 to vector<34x1xf32>
      %337 = arith.divf %335, %336 : vector<34x1xf32>
      %cst_140 = arith.constant 9.99999974E-6 : f32
      %338 = vector.broadcast %cst_140 : f32 to vector<34x1xf32>
      %339 = arith.addf %337, %338 : vector<34x1xf32>
      %340 = math.rsqrt %339 : vector<34x1xf32>
      %341 = vector.broadcast %340 : vector<34x1xf32> to vector<34x32xf32>
      %342 = arith.mulf %332, %341 : vector<34x32xf32>
      %343 = vector.broadcast %317 : vector<1x32xf32> to vector<34x32xf32>
      %344 = arith.mulf %342, %343 : vector<34x32xf32>
      %345 = vector.broadcast %320 : vector<1x32xf32> to vector<34x32xf32>
      %346 = arith.addf %344, %345 : vector<34x32xf32>
      %cst_141 = arith.constant dense<0.000000e+00> : vector<34x96xf32>
      %347 = tpu.matmul %346, %323, %cst_141 {dimension_numbers = #tpu.dot_dimension_numbers<[1], [0], [0], [1], [0, 0, 1, 1], [], []>} : vector<34x32xf32>, vector<32x96xf32>, vector<34x96xf32> -> vector<34x96xf32>
      %348 = vector.broadcast %326 : vector<1x96xf32> to vector<34x96xf32>
      %349 = arith.addf %347, %348 : vector<34x96xf32>
      %350 = vector.extract_strided_slice %349 {offsets = [0, 0], sizes = [17, 96], strides = [1, 1]} : vector<34x96xf32> to vector<17x96xf32>
      %351 = vector.extract_strided_slice %350 {offsets = [0, 0], sizes = [17, 8], strides = [1, 1]} : vector<17x96xf32> to vector<17x8xf32>
      %352 = vector.shape_cast %351 : vector<17x8xf32> to vector<1x17x8xf32>
      %353 = vector.extract_strided_slice %350 {offsets = [0, 8], sizes = [17, 8], strides = [1, 1]} : vector<17x96xf32> to vector<17x8xf32>
      %354 = vector.shape_cast %353 : vector<17x8xf32> to vector<1x17x8xf32>
      %355 = vector.extract_strided_slice %350 {offsets = [0, 16], sizes = [17, 8], strides = [1, 1]} : vector<17x96xf32> to vector<17x8xf32>
      %356 = vector.shape_cast %355 : vector<17x8xf32> to vector<1x17x8xf32>
      %357 = vector.extract_strided_slice %350 {offsets = [0, 24], sizes = [17, 8], strides = [1, 1]} : vector<17x96xf32> to vector<17x8xf32>
      %358 = vector.shape_cast %357 : vector<17x8xf32> to vector<1x17x8xf32>
      %359 = vector.extract_strided_slice %349 {offsets = [17, 0], sizes = [17, 96], strides = [1, 1]} : vector<34x96xf32> to vector<17x96xf32>
      %360 = vector.extract_strided_slice %359 {offsets = [0, 0], sizes = [17, 8], strides = [1, 1]} : vector<17x96xf32> to vector<17x8xf32>
      %361 = vector.shape_cast %360 : vector<17x8xf32> to vector<1x17x8xf32>
      %362 = vector.extract_strided_slice %359 {offsets = [0, 8], sizes = [17, 8], strides = [1, 1]} : vector<17x96xf32> to vector<17x8xf32>
      %363 = vector.shape_cast %362 : vector<17x8xf32> to vector<1x17x8xf32>
      %364 = vector.extract_strided_slice %359 {offsets = [0, 16], sizes = [17, 8], strides = [1, 1]} : vector<17x96xf32> to vector<17x8xf32>
      %365 = vector.shape_cast %364 : vector<17x8xf32> to vector<1x17x8xf32>
      %366 = vector.extract_strided_slice %359 {offsets = [0, 24], sizes = [17, 8], strides = [1, 1]} : vector<17x96xf32> to vector<17x8xf32>
      %367 = vector.shape_cast %366 : vector<17x8xf32> to vector<1x17x8xf32>
      %368 = tpu.concatenate %352, %354, %356, %358, %361, %363, %365, %367 in 0 : vector<1x17x8xf32>, vector<1x17x8xf32>, vector<1x17x8xf32>, vector<1x17x8xf32>, vector<1x17x8xf32>, vector<1x17x8xf32>, vector<1x17x8xf32>, vector<1x17x8xf32> -> vector<8x17x8xf32>
      %369 = vector.extract_strided_slice %349 {offsets = [0, 0], sizes = [17, 96], strides = [1, 1]} : vector<34x96xf32> to vector<17x96xf32>
      %370 = vector.extract_strided_slice %369 {offsets = [0, 32], sizes = [17, 8], strides = [1, 1]} : vector<17x96xf32> to vector<17x8xf32>
      %371 = vector.shape_cast %370 : vector<17x8xf32> to vector<1x17x8xf32>
      %372 = vector.extract_strided_slice %369 {offsets = [0, 40], sizes = [17, 8], strides = [1, 1]} : vector<17x96xf32> to vector<17x8xf32>
      %373 = vector.shape_cast %372 : vector<17x8xf32> to vector<1x17x8xf32>
      %374 = vector.extract_strided_slice %369 {offsets = [0, 48], sizes = [17, 8], strides = [1, 1]} : vector<17x96xf32> to vector<17x8xf32>
      %375 = vector.shape_cast %374 : vector<17x8xf32> to vector<1x17x8xf32>
      %376 = vector.extract_strided_slice %369 {offsets = [0, 56], sizes = [17, 8], strides = [1, 1]} : vector<17x96xf32> to vector<17x8xf32>
      %377 = vector.shape_cast %376 : vector<17x8xf32> to vector<1x17x8xf32>
      %378 = vector.extract_strided_slice %349 {offsets = [17, 0], sizes = [17, 96], strides = [1, 1]} : vector<34x96xf32> to vector<17x96xf32>
      %379 = vector.extract_strided_slice %378 {offsets = [0, 32], sizes = [17, 8], strides = [1, 1]} : vector<17x96xf32> to vector<17x8xf32>
      %380 = vector.shape_cast %379 : vector<17x8xf32> to vector<1x17x8xf32>
      %381 = vector.extract_strided_slice %378 {offsets = [0, 40], sizes = [17, 8], strides = [1, 1]} : vector<17x96xf32> to vector<17x8xf32>
      %382 = vector.shape_cast %381 : vector<17x8xf32> to vector<1x17x8xf32>
      %383 = vector.extract_strided_slice %378 {offsets = [0, 48], sizes = [17, 8], strides = [1, 1]} : vector<17x96xf32> to vector<17x8xf32>
      %384 = vector.shape_cast %383 : vector<17x8xf32> to vector<1x17x8xf32>
      %385 = vector.extract_strided_slice %378 {offsets = [0, 56], sizes = [17, 8], strides = [1, 1]} : vector<17x96xf32> to vector<17x8xf32>
      %386 = vector.shape_cast %385 : vector<17x8xf32> to vector<1x17x8xf32>
      %387 = tpu.concatenate %371, %373, %375, %377, %380, %382, %384, %386 in 0 : vector<1x17x8xf32>, vector<1x17x8xf32>, vector<1x17x8xf32>, vector<1x17x8xf32>, vector<1x17x8xf32>, vector<1x17x8xf32>, vector<1x17x8xf32>, vector<1x17x8xf32> -> vector<8x17x8xf32>
      %388 = vector.extract_strided_slice %349 {offsets = [0, 0], sizes = [17, 96], strides = [1, 1]} : vector<34x96xf32> to vector<17x96xf32>
      %389 = vector.extract_strided_slice %388 {offsets = [0, 64], sizes = [17, 8], strides = [1, 1]} : vector<17x96xf32> to vector<17x8xf32>
      %390 = vector.shape_cast %389 : vector<17x8xf32> to vector<1x17x8xf32>
      %391 = vector.extract_strided_slice %388 {offsets = [0, 72], sizes = [17, 8], strides = [1, 1]} : vector<17x96xf32> to vector<17x8xf32>
      %392 = vector.shape_cast %391 : vector<17x8xf32> to vector<1x17x8xf32>
      %393 = vector.extract_strided_slice %388 {offsets = [0, 80], sizes = [17, 8], strides = [1, 1]} : vector<17x96xf32> to vector<17x8xf32>
      %394 = vector.shape_cast %393 : vector<17x8xf32> to vector<1x17x8xf32>
      %395 = vector.extract_strided_slice %388 {offsets = [0, 88], sizes = [17, 8], strides = [1, 1]} : vector<17x96xf32> to vector<17x8xf32>
      %396 = vector.shape_cast %395 : vector<17x8xf32> to vector<1x17x8xf32>
      %397 = vector.extract_strided_slice %349 {offsets = [17, 0], sizes = [17, 96], strides = [1, 1]} : vector<34x96xf32> to vector<17x96xf32>
      %398 = vector.extract_strided_slice %397 {offsets = [0, 64], sizes = [17, 8], strides = [1, 1]} : vector<17x96xf32> to vector<17x8xf32>
      %399 = vector.shape_cast %398 : vector<17x8xf32> to vector<1x17x8xf32>
      %400 = vector.extract_strided_slice %397 {offsets = [0, 72], sizes = [17, 8], strides = [1, 1]} : vector<17x96xf32> to vector<17x8xf32>
      %401 = vector.shape_cast %400 : vector<17x8xf32> to vector<1x17x8xf32>
      %402 = vector.extract_strided_slice %397 {offsets = [0, 80], sizes = [17, 8], strides = [1, 1]} : vector<17x96xf32> to vector<17x8xf32>
      %403 = vector.shape_cast %402 : vector<17x8xf32> to vector<1x17x8xf32>
      %404 = vector.extract_strided_slice %397 {offsets = [0, 88], sizes = [17, 8], strides = [1, 1]} : vector<17x96xf32> to vector<17x8xf32>
      %405 = vector.shape_cast %404 : vector<17x8xf32> to vector<1x17x8xf32>
      %406 = tpu.concatenate %390, %392, %394, %396, %399, %401, %403, %405 in 0 : vector<1x17x8xf32>, vector<1x17x8xf32>, vector<1x17x8xf32>, vector<1x17x8xf32>, vector<1x17x8xf32>, vector<1x17x8xf32>, vector<1x17x8xf32>, vector<1x17x8xf32> -> vector<8x17x8xf32>
      "tpu.trace_start"() <{level = 10 : i32, message = "gnd,gmd->gnm"}> : () -> ()
      %cst_142 = arith.constant dense<0.000000e+00> : vector<8x17x17xf32>
      %407 = tpu.matmul %368, %387, %cst_142 {dimension_numbers = #tpu.dot_dimension_numbers<[2], [2], [1], [1], [0, 0, 0, 1, 1, 1], [0], [0]>} : vector<8x17x8xf32>, vector<8x17x8xf32>, vector<8x17x17xf32> -> vector<8x17x17xf32>
      "tpu.trace_stop"() : () -> ()
      %cst_143 = arith.constant 0.353553385 : f32
      %408 = vector.broadcast %cst_143 : f32 to vector<8x17x17xf32>
      %409 = arith.mulf %407, %408 : vector<8x17x17xf32>
      %cst_144 = arith.constant dense<0xFF800000> : vector<8x17xf32>
      %410 = vector.multi_reduction <maximumf>, %409, %cst_144 [2] : vector<8x17x17xf32> to vector<8x17xf32>
      %411 = vector.shape_cast %410 : vector<8x17xf32> to vector<8x17x1xf32>
      %412 = vector.broadcast %411 : vector<8x17x1xf32> to vector<8x17x17xf32>
      %413 = arith.subf %409, %412 : vector<8x17x17xf32>
      %414 = math.exp %413 : vector<8x17x17xf32>
      %cst_145 = arith.constant dense<0.000000e+00> : vector<8x17xf32>
      %415 = vector.multi_reduction <add>, %414, %cst_145 [2] : vector<8x17x17xf32> to vector<8x17xf32>
      %416 = vector.shape_cast %415 : vector<8x17xf32> to vector<8x17x1xf32>
      %417 = vector.broadcast %416 : vector<8x17x1xf32> to vector<8x17x17xf32>
      %418 = arith.divf %414, %417 : vector<8x17x17xf32>
      "tpu.trace_start"() <{level = 10 : i32, message = "gnm,gmd->gnd"}> : () -> ()
      %cst_146 = arith.constant dense<0.000000e+00> : vector<8x17x8xf32>
      %419 = tpu.matmul %418, %406, %cst_146 {dimension_numbers = #tpu.dot_dimension_numbers<[2], [1], [1], [2], [0, 0, 0, 1, 1, 2], [0], [0]>} : vector<8x17x17xf32>, vector<8x17x8xf32>, vector<8x17x8xf32> -> vector<8x17x8xf32>
      "tpu.trace_stop"() : () -> ()
      %420 = arith.index_cast %arg22 : i32 to index
      %c0_147 = arith.constant 0 : index
      %c0_148 = arith.constant 0 : index
      %421 = vector.load %arg8[%420, %c0_147, %c0_148] : memref<12x32x32xf32, #tpu.memory_space<vmem>>, vector<1x32x32xf32>
      %422 = vector.shape_cast %421 : vector<1x32x32xf32> to vector<32x32xf32>
      %423 = arith.index_cast %arg22 : i32 to index
      %c0_149 = arith.constant 0 : index
      %c0_150 = arith.constant 0 : index
      %424 = vector.load %arg9[%423, %c0_149, %c0_150] : memref<12x1x32xf32, #tpu.memory_space<vmem>>, vector<1x1x32xf32>
      %425 = vector.shape_cast %424 : vector<1x1x32xf32> to vector<1x32xf32>
      %426 = vector.extract_strided_slice %419 {offsets = [0, 0, 0], sizes = [1, 17, 8], strides = [1, 1, 1]} : vector<8x17x8xf32> to vector<1x17x8xf32>
      %427 = vector.shape_cast %426 : vector<1x17x8xf32> to vector<17x8xf32>
      %428 = vector.extract_strided_slice %419 {offsets = [1, 0, 0], sizes = [1, 17, 8], strides = [1, 1, 1]} : vector<8x17x8xf32> to vector<1x17x8xf32>
      %429 = vector.shape_cast %428 : vector<1x17x8xf32> to vector<17x8xf32>
      %430 = vector.extract_strided_slice %419 {offsets = [2, 0, 0], sizes = [1, 17, 8], strides = [1, 1, 1]} : vector<8x17x8xf32> to vector<1x17x8xf32>
      %431 = vector.shape_cast %430 : vector<1x17x8xf32> to vector<17x8xf32>
      %432 = vector.extract_strided_slice %419 {offsets = [3, 0, 0], sizes = [1, 17, 8], strides = [1, 1, 1]} : vector<8x17x8xf32> to vector<1x17x8xf32>
      %433 = vector.shape_cast %432 : vector<1x17x8xf32> to vector<17x8xf32>
      %434 = tpu.concatenate %427, %429, %431, %433 in 1 : vector<17x8xf32>, vector<17x8xf32>, vector<17x8xf32>, vector<17x8xf32> -> vector<17x32xf32>
      %435 = vector.extract_strided_slice %419 {offsets = [4, 0, 0], sizes = [1, 17, 8], strides = [1, 1, 1]} : vector<8x17x8xf32> to vector<1x17x8xf32>
      %436 = vector.shape_cast %435 : vector<1x17x8xf32> to vector<17x8xf32>
      %437 = vector.extract_strided_slice %419 {offsets = [5, 0, 0], sizes = [1, 17, 8], strides = [1, 1, 1]} : vector<8x17x8xf32> to vector<1x17x8xf32>
      %438 = vector.shape_cast %437 : vector<1x17x8xf32> to vector<17x8xf32>
      %439 = vector.extract_strided_slice %419 {offsets = [6, 0, 0], sizes = [1, 17, 8], strides = [1, 1, 1]} : vector<8x17x8xf32> to vector<1x17x8xf32>
      %440 = vector.shape_cast %439 : vector<1x17x8xf32> to vector<17x8xf32>
      %441 = vector.extract_strided_slice %419 {offsets = [7, 0, 0], sizes = [1, 17, 8], strides = [1, 1, 1]} : vector<8x17x8xf32> to vector<1x17x8xf32>
      %442 = vector.shape_cast %441 : vector<1x17x8xf32> to vector<17x8xf32>
      %443 = tpu.concatenate %436, %438, %440, %442 in 1 : vector<17x8xf32>, vector<17x8xf32>, vector<17x8xf32>, vector<17x8xf32> -> vector<17x32xf32>
      %444 = tpu.concatenate %434, %443 in 0 : vector<17x32xf32>, vector<17x32xf32> -> vector<34x32xf32>
      %cst_151 = arith.constant dense<0.000000e+00> : vector<34x32xf32>
      %445 = tpu.matmul %444, %422, %cst_151 {dimension_numbers = #tpu.dot_dimension_numbers<[1], [0], [0], [1], [0, 0, 1, 1], [], []>} : vector<34x32xf32>, vector<32x32xf32>, vector<34x32xf32> -> vector<34x32xf32>
      %446 = vector.broadcast %425 : vector<1x32xf32> to vector<34x32xf32>
      %447 = arith.addf %445, %446 : vector<34x32xf32>
      %448 = arith.addf %arg23, %447 : vector<34x32xf32>
      %449 = arith.index_cast %arg22 : i32 to index
      %c0_152 = arith.constant 0 : index
      %c0_153 = arith.constant 0 : index
      %450 = vector.load %arg10[%449, %c0_152, %c0_153] : memref<12x1x32xf32, #tpu.memory_space<vmem>>, vector<1x1x32xf32>
      %451 = vector.shape_cast %450 : vector<1x1x32xf32> to vector<1x32xf32>
      %452 = arith.index_cast %arg22 : i32 to index
      %c0_154 = arith.constant 0 : index
      %c0_155 = arith.constant 0 : index
      %453 = vector.load %arg11[%452, %c0_154, %c0_155] : memref<12x1x32xf32, #tpu.memory_space<vmem>>, vector<1x1x32xf32>
      %454 = vector.shape_cast %453 : vector<1x1x32xf32> to vector<1x32xf32>
      %455 = arith.index_cast %arg22 : i32 to index
      %c0_156 = arith.constant 0 : index
      %c0_157 = arith.constant 0 : index
      %456 = vector.load %arg12[%455, %c0_156, %c0_157] : memref<12x32x128xf32, #tpu.memory_space<vmem>>, vector<1x32x128xf32>
      %457 = vector.shape_cast %456 : vector<1x32x128xf32> to vector<32x128xf32>
      %458 = arith.index_cast %arg22 : i32 to index
      %c0_158 = arith.constant 0 : index
      %c0_159 = arith.constant 0 : index
      %459 = vector.load %arg13[%458, %c0_158, %c0_159] : memref<12x1x128xf32, #tpu.memory_space<vmem>>, vector<1x1x128xf32>
      %460 = vector.shape_cast %459 : vector<1x1x128xf32> to vector<1x128xf32>
      %461 = arith.index_cast %arg22 : i32 to index
      %c0_160 = arith.constant 0 : index
      %c0_161 = arith.constant 0 : index
      %462 = vector.load %arg14[%461, %c0_160, %c0_161] : memref<12x128x32xf32, #tpu.memory_space<vmem>>, vector<1x128x32xf32>
      %463 = vector.shape_cast %462 : vector<1x128x32xf32> to vector<128x32xf32>
      %464 = arith.index_cast %arg22 : i32 to index
      %c0_162 = arith.constant 0 : index
      %c0_163 = arith.constant 0 : index
      %465 = vector.load %arg15[%464, %c0_162, %c0_163] : memref<12x1x32xf32, #tpu.memory_space<vmem>>, vector<1x1x32xf32>
      %466 = vector.shape_cast %465 : vector<1x1x32xf32> to vector<1x32xf32>
      %cst_164 = arith.constant dense<0.000000e+00> : vector<34xf32>
      %467 = vector.multi_reduction <add>, %448, %cst_164 [1] : vector<34x32xf32> to vector<34xf32>
      %468 = vector.shape_cast %467 : vector<34xf32> to vector<34x1xf32>
      %cst_165 = arith.constant 3.200000e+01 : f32
      %469 = vector.broadcast %cst_165 : f32 to vector<34x1xf32>
      %470 = arith.divf %468, %469 : vector<34x1xf32>
      %471 = vector.broadcast %470 : vector<34x1xf32> to vector<34x32xf32>
      %472 = arith.subf %448, %471 : vector<34x32xf32>
      %473 = arith.mulf %472, %472 : vector<34x32xf32>
      %cst_166 = arith.constant dense<0.000000e+00> : vector<34xf32>
      %474 = vector.multi_reduction <add>, %473, %cst_166 [1] : vector<34x32xf32> to vector<34xf32>
      %475 = vector.shape_cast %474 : vector<34xf32> to vector<34x1xf32>
      %cst_167 = arith.constant 3.200000e+01 : f32
      %476 = vector.broadcast %cst_167 : f32 to vector<34x1xf32>
      %477 = arith.divf %475, %476 : vector<34x1xf32>
      %cst_168 = arith.constant 9.99999974E-6 : f32
      %478 = vector.broadcast %cst_168 : f32 to vector<34x1xf32>
      %479 = arith.addf %477, %478 : vector<34x1xf32>
      %480 = math.rsqrt %479 : vector<34x1xf32>
      %481 = vector.broadcast %480 : vector<34x1xf32> to vector<34x32xf32>
      %482 = arith.mulf %472, %481 : vector<34x32xf32>
      %483 = vector.broadcast %451 : vector<1x32xf32> to vector<34x32xf32>
      %484 = arith.mulf %482, %483 : vector<34x32xf32>
      %485 = vector.broadcast %454 : vector<1x32xf32> to vector<34x32xf32>
      %486 = arith.addf %484, %485 : vector<34x32xf32>
      %cst_169 = arith.constant dense<0.000000e+00> : vector<34x128xf32>
      %487 = tpu.matmul %486, %457, %cst_169 {dimension_numbers = #tpu.dot_dimension_numbers<[1], [0], [0], [1], [0, 0, 1, 1], [], []>} : vector<34x32xf32>, vector<32x128xf32>, vector<34x128xf32> -> vector<34x128xf32>
      %488 = vector.broadcast %460 : vector<1x128xf32> to vector<34x128xf32>
      %489 = arith.addf %487, %488 : vector<34x128xf32>
      %cst_170 = arith.constant 5.000000e-01 : f32
      %490 = vector.broadcast %cst_170 : f32 to vector<34x128xf32>
      %491 = arith.mulf %490, %489 : vector<34x128xf32>
      %cst_171 = arith.constant 0.707106769 : f32
      %492 = vector.broadcast %cst_171 : f32 to vector<34x128xf32>
      %493 = arith.mulf %489, %492 : vector<34x128xf32>
      %494 = math.erf %493 : vector<34x128xf32>
      %cst_172 = arith.constant 1.000000e+00 : f32
      %495 = vector.broadcast %cst_172 : f32 to vector<34x128xf32>
      %496 = arith.addf %495, %494 : vector<34x128xf32>
      %497 = arith.mulf %491, %496 : vector<34x128xf32>
      %cst_173 = arith.constant dense<0.000000e+00> : vector<34x32xf32>
      %498 = tpu.matmul %497, %463, %cst_173 {dimension_numbers = #tpu.dot_dimension_numbers<[1], [0], [0], [1], [0, 0, 1, 1], [], []>} : vector<34x128xf32>, vector<128x32xf32>, vector<34x32xf32> -> vector<34x32xf32>
      %499 = vector.broadcast %466 : vector<1x32xf32> to vector<34x32xf32>
      %500 = arith.addf %498, %499 : vector<34x32xf32>
      %501 = arith.addf %448, %500 : vector<34x32xf32>
      scf.yield %501 : vector<34x32xf32>
    }
    %c10_i32_84 = arith.constant 10 : i32
    %c11 = arith.constant 11 : index
    %c0_85 = arith.constant 0 : index
    %c0_86 = arith.constant 0 : index
    %199 = vector.load %arg4[%c11, %c0_85, %c0_86] : memref<12x1x32xf32, #tpu.memory_space<vmem>>, vector<1x1x32xf32>
    %200 = vector.shape_cast %199 : vector<1x1x32xf32> to vector<1x32xf32>
    %c11_87 = arith.constant 11 : index
    %c0_88 = arith.constant 0 : index
    %c0_89 = arith.constant 0 : index
    %201 = vector.load %arg5[%c11_87, %c0_88, %c0_89] : memref<12x1x32xf32, #tpu.memory_space<vmem>>, vector<1x1x32xf32>
    %202 = vector.shape_cast %201 : vector<1x1x32xf32> to vector<1x32xf32>
    %c11_90 = arith.constant 11 : index
    %c0_91 = arith.constant 0 : index
    %c0_92 = arith.constant 0 : index
    %203 = vector.load %arg6[%c11_90, %c0_91, %c0_92] : memref<12x32x96xf32, #tpu.memory_space<vmem>>, vector<1x32x96xf32>
    %204 = vector.shape_cast %203 : vector<1x32x96xf32> to vector<32x96xf32>
    %c11_93 = arith.constant 11 : index
    %c0_94 = arith.constant 0 : index
    %c0_95 = arith.constant 0 : index
    %205 = vector.load %arg7[%c11_93, %c0_94, %c0_95] : memref<12x1x96xf32, #tpu.memory_space<vmem>>, vector<1x1x96xf32>
    %206 = vector.shape_cast %205 : vector<1x1x96xf32> to vector<1x96xf32>
    %cst_96 = arith.constant dense<0.000000e+00> : vector<34xf32>
    %207 = vector.multi_reduction <add>, %198, %cst_96 [1] : vector<34x32xf32> to vector<34xf32>
    %208 = vector.shape_cast %207 : vector<34xf32> to vector<34x1xf32>
    %cst_97 = arith.constant 3.200000e+01 : f32
    %209 = vector.broadcast %cst_97 : f32 to vector<34x1xf32>
    %210 = arith.divf %208, %209 : vector<34x1xf32>
    %211 = vector.broadcast %210 : vector<34x1xf32> to vector<34x32xf32>
    %212 = arith.subf %198, %211 : vector<34x32xf32>
    %213 = arith.mulf %212, %212 : vector<34x32xf32>
    %cst_98 = arith.constant dense<0.000000e+00> : vector<34xf32>
    %214 = vector.multi_reduction <add>, %213, %cst_98 [1] : vector<34x32xf32> to vector<34xf32>
    %215 = vector.shape_cast %214 : vector<34xf32> to vector<34x1xf32>
    %cst_99 = arith.constant 3.200000e+01 : f32
    %216 = vector.broadcast %cst_99 : f32 to vector<34x1xf32>
    %217 = arith.divf %215, %216 : vector<34x1xf32>
    %cst_100 = arith.constant 9.99999974E-6 : f32
    %218 = vector.broadcast %cst_100 : f32 to vector<34x1xf32>
    %219 = arith.addf %217, %218 : vector<34x1xf32>
    %220 = math.rsqrt %219 : vector<34x1xf32>
    %221 = vector.broadcast %220 : vector<34x1xf32> to vector<34x32xf32>
    %222 = arith.mulf %212, %221 : vector<34x32xf32>
    %223 = vector.broadcast %200 : vector<1x32xf32> to vector<34x32xf32>
    %224 = arith.mulf %222, %223 : vector<34x32xf32>
    %225 = vector.broadcast %202 : vector<1x32xf32> to vector<34x32xf32>
    %226 = arith.addf %224, %225 : vector<34x32xf32>
    %cst_101 = arith.constant dense<0.000000e+00> : vector<34x96xf32>
    %227 = tpu.matmul %226, %204, %cst_101 {dimension_numbers = #tpu.dot_dimension_numbers<[1], [0], [0], [1], [0, 0, 1, 1], [], []>} : vector<34x32xf32>, vector<32x96xf32>, vector<34x96xf32> -> vector<34x96xf32>
    %228 = vector.broadcast %206 : vector<1x96xf32> to vector<34x96xf32>
    %229 = arith.addf %227, %228 : vector<34x96xf32>
    %230 = vector.extract_strided_slice %229 {offsets = [0, 0], sizes = [17, 96], strides = [1, 1]} : vector<34x96xf32> to vector<17x96xf32>
    %231 = vector.extract_strided_slice %230 {offsets = [0, 0], sizes = [17, 16], strides = [1, 1]} : vector<17x96xf32> to vector<17x16xf32>
    %232 = vector.shape_cast %231 : vector<17x16xf32> to vector<1x17x16xf32>
    %233 = vector.extract_strided_slice %230 {offsets = [0, 16], sizes = [17, 16], strides = [1, 1]} : vector<17x96xf32> to vector<17x16xf32>
    %234 = vector.shape_cast %233 : vector<17x16xf32> to vector<1x17x16xf32>
    %235 = vector.extract_strided_slice %229 {offsets = [17, 0], sizes = [17, 96], strides = [1, 1]} : vector<34x96xf32> to vector<17x96xf32>
    %236 = vector.extract_strided_slice %235 {offsets = [0, 0], sizes = [17, 16], strides = [1, 1]} : vector<17x96xf32> to vector<17x16xf32>
    %237 = vector.shape_cast %236 : vector<17x16xf32> to vector<1x17x16xf32>
    %238 = vector.extract_strided_slice %235 {offsets = [0, 16], sizes = [17, 16], strides = [1, 1]} : vector<17x96xf32> to vector<17x16xf32>
    %239 = vector.shape_cast %238 : vector<17x16xf32> to vector<1x17x16xf32>
    %240 = tpu.concatenate %232, %234, %237, %239 in 0 : vector<1x17x16xf32>, vector<1x17x16xf32>, vector<1x17x16xf32>, vector<1x17x16xf32> -> vector<4x17x16xf32>
    %241 = vector.extract_strided_slice %229 {offsets = [0, 0], sizes = [17, 96], strides = [1, 1]} : vector<34x96xf32> to vector<17x96xf32>
    %242 = vector.extract_strided_slice %241 {offsets = [0, 32], sizes = [17, 16], strides = [1, 1]} : vector<17x96xf32> to vector<17x16xf32>
    %243 = vector.shape_cast %242 : vector<17x16xf32> to vector<1x17x16xf32>
    %244 = vector.extract_strided_slice %241 {offsets = [0, 48], sizes = [17, 16], strides = [1, 1]} : vector<17x96xf32> to vector<17x16xf32>
    %245 = vector.shape_cast %244 : vector<17x16xf32> to vector<1x17x16xf32>
    %246 = vector.extract_strided_slice %229 {offsets = [17, 0], sizes = [17, 96], strides = [1, 1]} : vector<34x96xf32> to vector<17x96xf32>
    %247 = vector.extract_strided_slice %246 {offsets = [0, 32], sizes = [17, 16], strides = [1, 1]} : vector<17x96xf32> to vector<17x16xf32>
    %248 = vector.shape_cast %247 : vector<17x16xf32> to vector<1x17x16xf32>
    %249 = vector.extract_strided_slice %246 {offsets = [0, 48], sizes = [17, 16], strides = [1, 1]} : vector<17x96xf32> to vector<17x16xf32>
    %250 = vector.shape_cast %249 : vector<17x16xf32> to vector<1x17x16xf32>
    %251 = tpu.concatenate %243, %245, %248, %250 in 0 : vector<1x17x16xf32>, vector<1x17x16xf32>, vector<1x17x16xf32>, vector<1x17x16xf32> -> vector<4x17x16xf32>
    %252 = vector.extract_strided_slice %229 {offsets = [0, 0], sizes = [17, 96], strides = [1, 1]} : vector<34x96xf32> to vector<17x96xf32>
    %253 = vector.extract_strided_slice %252 {offsets = [0, 64], sizes = [17, 16], strides = [1, 1]} : vector<17x96xf32> to vector<17x16xf32>
    %254 = vector.shape_cast %253 : vector<17x16xf32> to vector<1x17x16xf32>
    %255 = vector.extract_strided_slice %252 {offsets = [0, 80], sizes = [17, 16], strides = [1, 1]} : vector<17x96xf32> to vector<17x16xf32>
    %256 = vector.shape_cast %255 : vector<17x16xf32> to vector<1x17x16xf32>
    %257 = vector.extract_strided_slice %229 {offsets = [17, 0], sizes = [17, 96], strides = [1, 1]} : vector<34x96xf32> to vector<17x96xf32>
    %258 = vector.extract_strided_slice %257 {offsets = [0, 64], sizes = [17, 16], strides = [1, 1]} : vector<17x96xf32> to vector<17x16xf32>
    %259 = vector.shape_cast %258 : vector<17x16xf32> to vector<1x17x16xf32>
    %260 = vector.extract_strided_slice %257 {offsets = [0, 80], sizes = [17, 16], strides = [1, 1]} : vector<17x96xf32> to vector<17x16xf32>
    %261 = vector.shape_cast %260 : vector<17x16xf32> to vector<1x17x16xf32>
    %262 = tpu.concatenate %254, %256, %259, %261 in 0 : vector<1x17x16xf32>, vector<1x17x16xf32>, vector<1x17x16xf32>, vector<1x17x16xf32> -> vector<4x17x16xf32>
    %c0_102 = arith.constant 0 : index
    %c0_103 = arith.constant 0 : index
    %c0_104 = arith.constant 0 : index
    %263 = vector.load %arg18[%c0_102, %c0_103, %c0_104] : memref<4x17x17xf32, #tpu.memory_space<vmem>>, vector<4x17x17xf32>
    "tpu.trace_start"() <{level = 10 : i32, message = "gnd,gmd->gnm"}> : () -> ()
    %cst_105 = arith.constant dense<0.000000e+00> : vector<4x17x17xf32>
    %264 = tpu.matmul %240, %251, %cst_105 {dimension_numbers = #tpu.dot_dimension_numbers<[2], [2], [1], [1], [0, 0, 0, 1, 1, 1], [0], [0]>} : vector<4x17x16xf32>, vector<4x17x16xf32>, vector<4x17x17xf32> -> vector<4x17x17xf32>
    "tpu.trace_stop"() : () -> ()
    %cst_106 = arith.constant 2.500000e-01 : f32
    %265 = vector.broadcast %cst_106 : f32 to vector<4x17x17xf32>
    %266 = arith.mulf %264, %265 : vector<4x17x17xf32>
    %cst_107 = arith.constant dense<0xFF800000> : vector<4x17xf32>
    %267 = vector.multi_reduction <maximumf>, %266, %cst_107 [2] : vector<4x17x17xf32> to vector<4x17xf32>
    %268 = vector.shape_cast %267 : vector<4x17xf32> to vector<4x17x1xf32>
    %269 = vector.broadcast %268 : vector<4x17x1xf32> to vector<4x17x17xf32>
    %270 = arith.subf %266, %269 : vector<4x17x17xf32>
    %271 = math.exp %270 : vector<4x17x17xf32>
    %272 = vector.broadcast %268 : vector<4x17x1xf32> to vector<4x17x17xf32>
    %273 = arith.subf %266, %272 : vector<4x17x17xf32>
    %cst_108 = arith.constant dense<0.000000e+00> : vector<4x17xf32>
    %274 = vector.multi_reduction <add>, %271, %cst_108 [2] : vector<4x17x17xf32> to vector<4x17xf32>
    %275 = vector.shape_cast %274 : vector<4x17xf32> to vector<4x17x1xf32>
    %276 = math.log %275 : vector<4x17x1xf32>
    %277 = vector.broadcast %276 : vector<4x17x1xf32> to vector<4x17x17xf32>
    %278 = arith.subf %273, %277 : vector<4x17x17xf32>
    %cst_109 = arith.constant 0.000000e+00 : f32
    %279 = vector.broadcast %cst_109 : f32 to vector<4x17x17xf32>
    %280 = arith.subf %279, %263 : vector<4x17x17xf32>
    %281 = arith.mulf %280, %278 : vector<4x17x17xf32>
    %cst_110 = arith.constant dense<0.000000e+00> : vector<4x17xf32>
    %282 = vector.multi_reduction <add>, %281, %cst_110 [2] : vector<4x17x17xf32> to vector<4x17xf32>
    %283 = vector.shape_cast %282 : vector<4x17xf32> to vector<4x17x1xf32>
    %cst_111 = arith.constant dense<0.000000e+00> : vector<17x1xf32>
    %284 = vector.multi_reduction <add>, %283, %cst_111 [0] : vector<4x17x1xf32> to vector<17x1xf32>
    %cst_112 = arith.constant dense<0.000000e+00> : vector<1xf32>
    %285 = vector.multi_reduction <add>, %284, %cst_112 [0] : vector<17x1xf32> to vector<1xf32>
    %286 = vector.shape_cast %285 : vector<1xf32> to vector<1x1xf32>
    %287 = arith.addf %103, %286 : vector<1x1xf32>
    %c0_113 = arith.constant 0 : index
    %c0_114 = arith.constant 0 : index
    %c0_115 = arith.constant 0 : index
    %288 = vector.load %arg19[%c0_113, %c0_114, %c0_115] : memref<4x17x17xf32, #tpu.memory_space<vmem>>, vector<4x17x17xf32>
    "tpu.trace_start"() <{level = 10 : i32, message = "gnd,gmd->gnm"}> : () -> ()
    %cst_116 = arith.constant dense<0.000000e+00> : vector<4x17x17xf32>
    %289 = tpu.matmul %262, %262, %cst_116 {dimension_numbers = #tpu.dot_dimension_numbers<[2], [2], [1], [1], [0, 0, 0, 1, 1, 1], [0], [0]>} : vector<4x17x16xf32>, vector<4x17x16xf32>, vector<4x17x17xf32> -> vector<4x17x17xf32>
    "tpu.trace_stop"() : () -> ()
    %cst_117 = arith.constant 2.500000e-01 : f32
    %290 = vector.broadcast %cst_117 : f32 to vector<4x17x17xf32>
    %291 = arith.mulf %289, %290 : vector<4x17x17xf32>
    %cst_118 = arith.constant dense<0xFF800000> : vector<4x17xf32>
    %292 = vector.multi_reduction <maximumf>, %291, %cst_118 [2] : vector<4x17x17xf32> to vector<4x17xf32>
    %293 = vector.shape_cast %292 : vector<4x17xf32> to vector<4x17x1xf32>
    %294 = vector.broadcast %293 : vector<4x17x1xf32> to vector<4x17x17xf32>
    %295 = arith.subf %291, %294 : vector<4x17x17xf32>
    %296 = math.exp %295 : vector<4x17x17xf32>
    %297 = vector.broadcast %293 : vector<4x17x1xf32> to vector<4x17x17xf32>
    %298 = arith.subf %291, %297 : vector<4x17x17xf32>
    %cst_119 = arith.constant dense<0.000000e+00> : vector<4x17xf32>
    %299 = vector.multi_reduction <add>, %296, %cst_119 [2] : vector<4x17x17xf32> to vector<4x17xf32>
    %300 = vector.shape_cast %299 : vector<4x17xf32> to vector<4x17x1xf32>
    %301 = math.log %300 : vector<4x17x1xf32>
    %302 = vector.broadcast %301 : vector<4x17x1xf32> to vector<4x17x17xf32>
    %303 = arith.subf %298, %302 : vector<4x17x17xf32>
    %cst_120 = arith.constant 0.000000e+00 : f32
    %304 = vector.broadcast %cst_120 : f32 to vector<4x17x17xf32>
    %305 = arith.subf %304, %288 : vector<4x17x17xf32>
    %306 = arith.mulf %305, %303 : vector<4x17x17xf32>
    %cst_121 = arith.constant dense<0.000000e+00> : vector<4x17xf32>
    %307 = vector.multi_reduction <add>, %306, %cst_121 [2] : vector<4x17x17xf32> to vector<4x17xf32>
    %308 = vector.shape_cast %307 : vector<4x17xf32> to vector<4x17x1xf32>
    %cst_122 = arith.constant dense<0.000000e+00> : vector<17x1xf32>
    %309 = vector.multi_reduction <add>, %308, %cst_122 [0] : vector<4x17x1xf32> to vector<17x1xf32>
    %cst_123 = arith.constant dense<0.000000e+00> : vector<1xf32>
    %310 = vector.multi_reduction <add>, %309, %cst_123 [0] : vector<17x1xf32> to vector<1xf32>
    %311 = vector.shape_cast %310 : vector<1xf32> to vector<1x1xf32>
    %312 = arith.addf %127, %311 : vector<1x1xf32>
    %c0_124 = arith.constant 0 : index
    %c0_125 = arith.constant 0 : index
    %313 = vector.load %arg20[%c0_124, %c0_125] : memref<1x1xf32, #tpu.memory_space<vmem>>, vector<1x1xf32>
    tpu.vector_store %arg20[%c0_124, %c0_125], %287 {strides = array<i32>} : memref<1x1xf32, #tpu.memory_space<vmem>>, vector<1x1xf32>,
    %c0_126 = arith.constant 0 : index
    %c0_127 = arith.constant 0 : index
    %314 = vector.load %arg21[%c0_126, %c0_127] : memref<1x1xf32, #tpu.memory_space<vmem>>, vector<1x1xf32>
    tpu.vector_store %arg21[%c0_126, %c0_127], %312 {strides = array<i32>} : memref<1x1xf32, #tpu.memory_space<vmem>>, vector<1x1xf32>,
    return
  }
}

</mosaic_0001>

<llo_original>
// kernel: alivit_forward.1
$region0: #{alivit_forward.1}
  #allocation0 [shape = 'u32[]', space=smem, size = 0x4, offset = 0x4, fixed_abs, tag = 'smem constant byte address 0x4 - core index']
  #allocation1 [shape = 'u32[72,128]{1,0:T(1,128)}', space=vmem, size = 0x9000, scoped, tag = 'internal scratch']
  %s0 = inlined_call_operand.vmem [shape: f32[32,48], index: 0, kind: input, shape index: {}]
  %s1 = inlined_call_operand.vmem [shape: f32[48,32], index: 1, kind: input, shape index: {}]
  %s2 = inlined_call_operand.vmem [shape: f32[1,32], index: 2, kind: input, shape index: {}]
  %s3 = inlined_call_operand.vmem [shape: f32[17,32], index: 3, kind: input, shape index: {}]
  %s4 = inlined_call_operand.vmem [shape: f32[12,1,32], index: 4, kind: input, shape index: {}]
  %s5 = inlined_call_operand.vmem [shape: f32[12,1,32], index: 5, kind: input, shape index: {}]
  %s6 = inlined_call_operand.vmem [shape: f32[12,32,96], index: 6, kind: input, shape index: {}]
  %s7 = inlined_call_operand.vmem [shape: f32[12,1,96], index: 7, kind: input, shape index: {}]
  %s8 = inlined_call_operand.vmem [shape: f32[12,32,32], index: 8, kind: input, shape index: {}]
  %s9 = inlined_call_operand.vmem [shape: f32[12,1,32], index: 9, kind: input, shape index: {}]
  %s10 = inlined_call_operand.vmem [shape: f32[12,1,32], index: 10, kind: input, shape index: {}]
  %s11 = inlined_call_operand.vmem [shape: f32[12,1,32], index: 11, kind: input, shape index: {}]
  %s12 = inlined_call_operand.vmem [shape: f32[12,32,128], index: 12, kind: input, shape index: {}]
  %s13 = inlined_call_operand.vmem [shape: f32[12,1,128], index: 13, kind: input, shape index: {}]
  %s14 = inlined_call_operand.vmem [shape: f32[12,128,32], index: 14, kind: input, shape index: {}]
  %s15 = inlined_call_operand.vmem [shape: f32[12,1,32], index: 15, kind: input, shape index: {}]
  %s16 = inlined_call_operand.vmem [shape: f32[4,17,17], index: 16, kind: input, shape index: {}]
  %s17 = inlined_call_operand.vmem [shape: f32[4,17,17], index: 17, kind: input, shape index: {}]
  %s18 = inlined_call_operand.vmem [shape: f32[4,17,17], index: 18, kind: input, shape index: {}]
  %s19 = inlined_call_operand.vmem [shape: f32[4,17,17], index: 19, kind: input, shape index: {}]
  %s20 = inlined_call_operand.hbm [shape: f32[1,1], index: 20, kind: output, shape index: {0}]
  %s21 = inlined_call_operand.hbm [shape: f32[1,1], index: 21, kind: output, shape index: {1}]
  %22 = xla_tuple %s20, %s21
  %s23 = sld [smem:[#allocation0]]
  $region105: #{alivit_forward.1} parent=0
    _
  %s25 = ssub.s32 1, %s23
  %s26 = scalar_select 0, %s25, %s23
  $region1: #{alivit_forward.1} parent=0
    #allocation2 [shape = 'u8[512]{0}', space=vmem, size = 0x400, scoped, tag = 'output window, operand 0, single buffered']
    #allocation3 [shape = 's32[1]{0}', space=sflag, size = 0x4, scoped, tag = 'scoped memory for alivit_forward.1']
    #allocation4 [shape = 'u8[512]{0}', space=vmem, size = 0x400, scoped, tag = 'output window, operand 1, single buffered']
    #allocation5 [shape = 's32[1]{0}', space=sflag, size = 0x4, scoped, tag = 'scoped memory for alivit_forward.1']
    %27 = vsyncpa [#allocation3], 0
    %28 = vsyncpa [#allocation5], 0
    // Predicated region
    $region2: #{alivit_forward.1} parent=1 // pred_check
      _
    $region3: #{alivit_forward.1} parent=1 // pred_check_branch
      %30 = sbr.rel (0) target = $region5
    $region4: #{alivit_forward.1} parent=1 // pred_region
      _
    $region5: #{alivit_forward.1} parent=1 // pred_fallthru
      _
    // Predicated region
    $region6: #{alivit_forward.1} parent=1 // pred_check
      _
    $region7: #{alivit_forward.1} parent=1 // pred_check_branch
      %32 = sbr.rel (0) target = $region9
    $region8: #{alivit_forward.1} parent=1 // pred_region
      _
    $region9: #{alivit_forward.1} parent=1 // pred_fallthru
      _
    // Predicated region
    $region10: #{alivit_forward.1} parent=1 // pred_check
      _
    $region11: #{alivit_forward.1} parent=1 // pred_check_branch
      %34 = sbr.rel (0) target = $region13
    $region12: #{alivit_forward.1} parent=1 // pred_region
      _
    $region13: #{alivit_forward.1} parent=1 // pred_fallthru
      _
    // Predicated region
    $region14: #{alivit_forward.1} parent=1 // pred_check
      _
    $region15: #{alivit_forward.1} parent=1 // pred_check_branch
      %36 = sbr.rel (0) target = $region17
    $region16: #{alivit_forward.1} parent=1 // pred_region
      _
    $region17: #{alivit_forward.1} parent=1 // pred_fallthru
      _
    // Predicated region
    $region18: #{alivit_forward.1} parent=1 // pred_check
      _
    $region19: #{alivit_forward.1} parent=1 // pred_check_branch
      %38 = sbr.rel (0) target = $region21
    $region20: #{alivit_forward.1} parent=1 // pred_region
      _
    $region21: #{alivit_forward.1} parent=1 // pred_fallthru
      _
    // Predicated region
    $region22: #{alivit_forward.1} parent=1 // pred_check
      _
    $region23: #{alivit_forward.1} parent=1 // pred_check_branch
      %40 = sbr.rel (0) target = $region25
    $region24: #{alivit_forward.1} parent=1 // pred_region
      _
    $region25: #{alivit_forward.1} parent=1 // pred_fallthru
      _
    // Predicated region
    $region26: #{alivit_forward.1} parent=1 // pred_check
      _
    $region27: #{alivit_forward.1} parent=1 // pred_check_branch
      %42 = sbr.rel (0) target = $region29
    $region28: #{alivit_forward.1} parent=1 // pred_region
      _
    $region29: #{alivit_forward.1} parent=1 // pred_fallthru
      _
    // Predicated region
    $region30: #{alivit_forward.1} parent=1 // pred_check
      _
    $region31: #{alivit_forward.1} parent=1 // pred_check_branch
      %44 = sbr.rel (0) target = $region33
    $region32: #{alivit_forward.1} parent=1 // pred_region
      _
    $region33: #{alivit_forward.1} parent=1 // pred_fallthru
      _
    // Predicated region
    $region34: #{alivit_forward.1} parent=1 // pred_check
      _
    $region35: #{alivit_forward.1} parent=1 // pred_check_branch
      %46 = sbr.rel (0) target = $region37
    $region36: #{alivit_forward.1} parent=1 // pred_region
      _
    $region37: #{alivit_forward.1} parent=1 // pred_fallthru
      _
    // Predicated region
    $region38: #{alivit_forward.1} parent=1 // pred_check
      _
    $region39: #{alivit_forward.1} parent=1 // pred_check_branch
      %48 = sbr.rel (0) target = $region41
    $region40: #{alivit_forward.1} parent=1 // pred_region
      _
    $region41: #{alivit_forward.1} parent=1 // pred_fallthru
      _
    // Predicated region
    $region42: #{alivit_forward.1} parent=1 // pred_check
      _
    $region43: #{alivit_forward.1} parent=1 // pred_check_branch
      %50 = sbr.rel (0) target = $region45
    $region44: #{alivit_forward.1} parent=1 // pred_region
      _
    $region45: #{alivit_forward.1} parent=1 // pred_fallthru
      _
    // Predicated region
    $region46: #{alivit_forward.1} parent=1 // pred_check
      _
    $region47: #{alivit_forward.1} parent=1 // pred_check_branch
      %52 = sbr.rel (0) target = $region49
    $region48: #{alivit_forward.1} parent=1 // pred_region
      _
    $region49: #{alivit_forward.1} parent=1 // pred_fallthru
      _
    // Predicated region
    $region50: #{alivit_forward.1} parent=1 // pred_check
      _
    $region51: #{alivit_forward.1} parent=1 // pred_check_branch
      %54 = sbr.rel (0) target = $region53
    $region52: #{alivit_forward.1} parent=1 // pred_region
      _
    $region53: #{alivit_forward.1} parent=1 // pred_fallthru
      _
    // Predicated region
    $region54: #{alivit_forward.1} parent=1 // pred_check
      _
    $region55: #{alivit_forward.1} parent=1 // pred_check_branch
      %56 = sbr.rel (0) target = $region57
    $region56: #{alivit_forward.1} parent=1 // pred_region
      _
    $region57: #{alivit_forward.1} parent=1 // pred_fallthru
      _
    // Predicated region
    $region58: #{alivit_forward.1} parent=1 // pred_check
      _
    $region59: #{alivit_forward.1} parent=1 // pred_check_branch
      %58 = sbr.rel (0) target = $region61
    $region60: #{alivit_forward.1} parent=1 // pred_region
      _
    $region61: #{alivit_forward.1} parent=1 // pred_fallthru
      _
    // Predicated region
    $region62: #{alivit_forward.1} parent=1 // pred_check
      _
    $region63: #{alivit_forward.1} parent=1 // pred_check_branch
      %60 = sbr.rel (0) target = $region65
    $region64: #{alivit_forward.1} parent=1 // pred_region
      _
    $region65: #{alivit_forward.1} parent=1 // pred_fallthru
      _
    // Predicated region
    $region66: #{alivit_forward.1} parent=1 // pred_check
      _
    $region67: #{alivit_forward.1} parent=1 // pred_check_branch
      %62 = sbr.rel (0) target = $region69
    $region68: #{alivit_forward.1} parent=1 // pred_region
      _
    $region69: #{alivit_forward.1} parent=1 // pred_fallthru
      _
    // Predicated region
    $region70: #{alivit_forward.1} parent=1 // pred_check
      _
    $region71: #{alivit_forward.1} parent=1 // pred_check_branch
      %64 = sbr.rel (0) target = $region73
    $region72: #{alivit_forward.1} parent=1 // pred_region
      _
    $region73: #{alivit_forward.1} parent=1 // pred_fallthru
      _
    // Predicated region
    $region74: #{alivit_forward.1} parent=1 // pred_check
      _
    $region75: #{alivit_forward.1} parent=1 // pred_check_branch
      %66 = sbr.rel (0) target = $region77
    $region76: #{alivit_forward.1} parent=1 // pred_region
      _
    $region77: #{alivit_forward.1} parent=1 // pred_fallthru
      _
    // Predicated region
    $region78: #{alivit_forward.1} parent=1 // pred_check
      _
    $region79: #{alivit_forward.1} parent=1 // pred_check_branch
      %68 = sbr.rel (0) target = $region81
    $region80: #{alivit_forward.1} parent=1 // pred_region
      _
    $region81: #{alivit_forward.1} parent=1 // pred_fallthru
      _
    %v69 = vld [vmem:[%s0] sm:$0xff]
    %v70 = vld [vmem:[%s0 + $0x8] sm:$0xff]
    %v71 = vld [vmem:[%s0 + $0x10] sm:$0xff]
    %v72 = vld [vmem:[%s0 + $0x18] sm:$0xff]
    %v73 = vld [vmem:[%s1] sm:$0xff]
    %v74 = vld [vmem:[%s1 + $0x8] sm:$0xff]
    %v75 = vld [vmem:[%s1 + $0x10] sm:$0xff]
    %v76 = vld [vmem:[%s1 + $0x18] sm:$0xff]
    %v77 = vld [vmem:[%s1 + $0x20] sm:$0xff]
    %v78 = vld [vmem:[%s1 + $0x28] sm:$0xff]
    %v79 = vld [vmem:[%s2] sm:$0x1]
    %v81 = vperm.slane %v79, 0
    %vm83 = vcmask 392192
    %v85 = vsel %vm83, %v69, 0
    %v88 = vsel %vm83, %v70, 0
    %v91 = vsel %vm83, %v71, 0
    %v94 = vsel %vm83, %v72, 0
    %96 = vmatpush.msra.mxu0 0.0
    %97 = vmatpush.msra.mxu0 0.0
    %98 = vmatpush.msra.mxu0 0.0
    %99 = vmatpush.msra.mxu0 0.0
    %100 = vmatpush.msra.mxu0 0.0
    %101 = vmatpush.msra.mxu0 0.0
    %102 = vmatpush.msra.mxu0 0.0
    %103 = vmatpush.msra.mxu0 0.0
    %104 = vmatpush.msra.mxu0 0.0
    %105 = vmatpush.msra.mxu0 0.0
    %106 = vmatpush.msra.mxu0 %v78
    %107 = vmatpush.msra.mxu0 %v77
    %108 = vmatpush.msra.mxu0 %v76
    %109 = vmatpush.msra.mxu0 %v75
    %110 = vmatpush.msra.mxu0 %v74
    %111 = vmatpush.msra.mxu0 %v73
    %112 = vmatmul.f32.gmra.mxu0 %v85
    %v113 = vpop.f32.mrf.mxu0
    %v114 = vadd.f32 %v81, %v113
    %115 = vmatmul.f32.gmra.mxu0 %v88
    %v116 = vpop.f32.mrf.mxu0
    %v117 = vadd.f32 %v81, %v116
    %118 = vmatmul.f32.gmra.mxu0 %v91
    %v119 = vpop.f32.mrf.mxu0
    %v120 = vadd.f32 %v81, %v119
    %121 = vmatmul.f32.gmra.mxu0 %v94
    %v122 = vpop.f32.mrf.mxu0
    %v123 = vadd.f32 %v81, %v122
    %124 = vdwg.mxu0
    %v125 = vld [vmem:[%s3] sm:$0xff]
    %v126 = vld [vmem:[%s3 + $0x8] sm:$0xff]
    %v127 = vld [vmem:[%s3 + $0x10] sm:$0x1]
    %vm130 = vcmask 1040384
    %v131 = vrot.slane %v114, 7
    %v132 = vrot.slane %v117, 7
    %v133 = vsel %vm130, %v131, %v132
    %v137 = vadd.f32 %v125, %v131
    %v138 = vadd.f32 %v126, %v133
    %v139 = vadd.f32 %v127, %v132
    %v142 = vrot.slane %v120, 7
    %v143 = vrot.slane %v123, 7
    %v144 = vsel %vm130, %v142, %v143
    %v148 = vadd.f32 %v125, %v142
    %v149 = vadd.f32 %v126, %v144
    %v150 = vadd.f32 %v127, %v143
    %v152 = vrot.slane %v125, 7
    %v157 = vrot.slane %v148, 7
    %v158 = vrot.slane %v149, 7
    %v159 = vsel %vm130, %v157, %v158
    %v160 = vrot.slane %v150, 7
    %v161 = vsel %vm130, %v158, %v160
    %v165 = vsel %vm130, %v125, %v137
    %v166 = vsel %vm130, %v139, %v152
    %vm167 = vcmask 1041408
    %v168 = vsel %vm167, %v166, %v157
    %v169 = vld [vmem:[%s4] sm:$0x1]
    %v170 = vld [vmem:[%s5] sm:$0x1]
    %v171 = vld [vmem:[%s6] sm:$0xff]
    %v172 = vld [vmem:[%s6 + $0x8] sm:$0xff]
    %v173 = vld [vmem:[%s6 + $0x10] sm:$0xff]
    %v174 = vld [vmem:[%s6 + $0x18] sm:$0xff]
    %v175 = vld [vmem:[%s7] sm:$0x1]
    %vm176 = vcmask 261120
    %v177 = vsel %vm176, %v165, 0.0
    %178 = vadd.xlane.f32.xlu0 %v177
    %v179 = vpop.xlane.xlu0 %178
    %v180 = vsel %vm176, %v138, 0.0
    %181 = vadd.xlane.f32.xlu0 %v180
    %v182 = vpop.xlane.xlu0 %181
    %v183 = vsel %vm176, %v168, 0.0
    %184 = vadd.xlane.f32.xlu0 %v183
    %v185 = vpop.xlane.xlu0 %184
    %v186 = vsel %vm176, %v159, 0.0
    %187 = vadd.xlane.f32.xlu0 %v186
    %v188 = vpop.xlane.xlu0 %187
    %vm189 = vcmask 254976
    %v190 = vsel %vm189, %v161, 0.0
    %191 = vadd.xlane.f32.xlu0 %v190
    %v192 = vpop.xlane.xlu0 %191
    %v193 = vrcp.pop 32.0
    %v194 = vmul.f32 32.0, %v193
    %v195 = vsub.f32 1.0, %v194
    %v196 = vmul.f32 %v193, %v195
    %v197 = vadd.f32 %v193, %v196
    %vm198 = vweird.f32 %v193
    %v199 = vsel %vm198, %v193, %v197
    %v200 = vmul.f32 %v179, %v199
    %v201 = vmul.f32 %v182, %v199
    %v202 = vmul.f32 %v185, %v199
    %v203 = vmul.f32 %v188, %v199
    %v204 = vmul.f32 %v192, %v199
    %v205 = vsub.f32 %v165, %v200
    %v206 = vsub.f32 %v138, %v201
    %v207 = vsub.f32 %v168, %v202
    %v208 = vsub.f32 %v159, %v203
    %v209 = vsub.f32 %v161, %v204
    %v210 = vmul.f32 %v205, %v205
    %v211 = vmul.f32 %v206, %v206
    %v212 = vmul.f32 %v207, %v207
    %v213 = vmul.f32 %v208, %v208
    %v214 = vmul.f32 %v209, %v209
    %v215 = vsel %vm176, %v210, 0.0
    %216 = vadd.xlane.f32.xlu0 %v215
    %v217 = vpop.xlane.xlu0 %216
    %v218 = vsel %vm176, %v211, 0.0
    %219 = vadd.xlane.f32.xlu0 %v218
    %v220 = vpop.xlane.xlu0 %219
    %v221 = vsel %vm176, %v212, 0.0
    %222 = vadd.xlane.f32.xlu0 %v221
    %v223 = vpop.xlane.xlu0 %222
    %v224 = vsel %vm176, %v213, 0.0
    %225 = vadd.xlane.f32.xlu0 %v224
    %v226 = vpop.xlane.xlu0 %225
    %v227 = vsel %vm189, %v214, 0.0
    %228 = vadd.xlane.f32.xlu0 %v227
    %v229 = vpop.xlane.xlu0 %228
    %v230 = vmul.f32 %v217, %v199
    %v231 = vmul.f32 %v220, %v199
    %v232 = vmul.f32 %v223, %v199
    %v233 = vmul.f32 %v226, %v199
    %v234 = vmul.f32 %v229, %v199
    %v235 = vadd.f32 %v230, 1e-05
    %v236 = vadd.f32 %v231, 1e-05
    %v237 = vadd.f32 %v232, 1e-05
    %v238 = vadd.f32 %v233, 1e-05
    %v239 = vadd.f32 %v234, 1e-05
    %v240 = vrsqrt.pop %v235
    %v241 = vmul.f32 %v240, %v235
    %v242 = vmul.f32 %v241, %v240
    %v243 = vmul.f32 0.5, %v242
    %v244 = vsub.f32 1.5, %v243
    %v245 = vmul.f32 %v240, %v244
    %vm246 = vweird.f32 %v235
    %vm247 = vweird.f32 %v240
    %vm248 = vmor %vm246, %vm247
    %v249 = vsel %vm248, %v240, %v245
    %v250 = vrsqrt.pop %v236
    %v251 = vmul.f32 %v250, %v236
    %v252 = vmul.f32 %v251, %v250
    %v253 = vmul.f32 0.5, %v252
    %v254 = vsub.f32 1.5, %v253
    %v255 = vmul.f32 %v250, %v254
    %vm256 = vweird.f32 %v236
    %vm257 = vweird.f32 %v250
    %vm258 = vmor %vm256, %vm257
    %v259 = vsel %vm258, %v250, %v255
    %v260 = vrsqrt.pop %v237
    %v261 = vmul.f32 %v260, %v237
    %v262 = vmul.f32 %v261, %v260
    %v263 = vmul.f32 0.5, %v262
    %v264 = vsub.f32 1.5, %v263
    %v265 = vmul.f32 %v260, %v264
    %vm266 = vweird.f32 %v237
    %vm267 = vweird.f32 %v260
    %vm268 = vmor %vm266, %vm267
    %v269 = vsel %vm268, %v260, %v265
    %v270 = vrsqrt.pop %v238
    %v271 = vmul.f32 %v270, %v238
    %v272 = vmul.f32 %v271, %v270
    %v273 = vmul.f32 0.5, %v272
    %v274 = vsub.f32 1.5, %v273
    %v275 = vmul.f32 %v270, %v274
    %vm276 = vweird.f32 %v238
    %vm277 = vweird.f32 %v270
    %vm278 = vmor %vm276, %vm277
    %v279 = vsel %vm278, %v270, %v275
    %v280 = vrsqrt.pop %v239
    %v281 = vmul.f32 %v280, %v239
    %v282 = vmul.f32 %v281, %v280
    %v283 = vmul.f32 0.5, %v282
    %v284 = vsub.f32 1.5, %v283
    %v285 = vmul.f32 %v280, %v284
    %vm286 = vweird.f32 %v239
    %vm287 = vweird.f32 %v280
    %vm288 = vmor %vm286, %vm287
    %v289 = vsel %vm288, %v280, %v285
    %v290 = vmul.f32 %v205, %v249
    %v291 = vmul.f32 %v206, %v259
    %v292 = vmul.f32 %v207, %v269
    %v293 = vmul.f32 %v208, %v279
    %v294 = vmul.f32 %v209, %v289
    %v296 = vperm.slane %v169, 0
    %v298 = vmul.f32 %v290, %v296
    %v299 = vmul.f32 %v291, %v296
    %v300 = vmul.f32 %v292, %v296
    %v301 = vmul.f32 %v293, %v296
    %v302 = vmul.f32 %v294, %v296
    %v304 = vperm.slane %v170, 0
    %v306 = vadd.f32 %v298, %v304
    %v307 = vadd.f32 %v299, %v304
    %v308 = vadd.f32 %v300, %v304
    %v309 = vadd.f32 %v301, %v304
    %v310 = vadd.f32 %v302, %v304
    %v312 = vperm.slane %v175, 0
    %v315 = vsel %vm176, %v306, 0
    %v318 = vsel %vm176, %v307, 0
    %v321 = vsel %vm176, %v308, 0
    %v324 = vsel %vm176, %v309, 0
    %v327 = vsel %vm176, %v310, 0
    %329 = vmatpush.msra.mxu0 0.0
    %330 = vmatpush.msra.mxu0 0.0
    %331 = vmatpush.msra.mxu0 0.0
    %332 = vmatpush.msra.mxu0 0.0
    %333 = vmatpush.msra.mxu0 0.0
    %334 = vmatpush.msra.mxu0 0.0
    %335 = vmatpush.msra.mxu0 0.0
    %336 = vmatpush.msra.mxu0 0.0
    %337 = vmatpush.msra.mxu0 0.0
    %338 = vmatpush.msra.mxu0 0.0
    %339 = vmatpush.msra.mxu0 0.0
    %340 = vmatpush.msra.mxu0 0.0
    %341 = vmatpush.msra.mxu0 %v174
    %342 = vmatpush.msra.mxu0 %v173
    %343 = vmatpush.msra.mxu0 %v172
    %344 = vmatpush.msra.mxu0 %v171
    %345 = vmatmul.f32.gmra.mxu0 %v315
    %v346 = vpop.f32.mrf.mxu0
    %v347 = vadd.f32 %v312, %v346
    %348 = vmatmul.f32.gmra.mxu0 %v318
    %v349 = vpop.f32.mrf.mxu0
    %v350 = vadd.f32 %v312, %v349
    %351 = vmatmul.f32.gmra.mxu0 %v321
    %v352 = vpop.f32.mrf.mxu0
    %v353 = vadd.f32 %v312, %v352
    %354 = vmatmul.f32.gmra.mxu0 %v324
    %v355 = vpop.f32.mrf.mxu0
    %v356 = vadd.f32 %v312, %v355
    %357 = vmatmul.f32.gmra.mxu0 %v327
    %v358 = vpop.f32.mrf.mxu0
    %v359 = vadd.f32 %v312, %v358
    %360 = vdwg.mxu0
    %364 = vrot.lane.b32.xlu0 %v347, 112
    %v365 = vpop.permute.xlu0 %364
    %366 = vrot.lane.b32.xlu0 %v350, 112
    %v367 = vpop.permute.xlu0 %366
    %368 = vrot.lane.b32.xlu0 %v353, 112
    %v369 = vpop.permute.xlu0 %368
    %vm372 = vcmask 1046528
    %v373 = vrot.slane %v353, 1
    %v374 = vrot.slane %v356, 1
    %v375 = vsel %vm372, %v373, %v374
    %v376 = vrot.slane %v359, 1
    %v377 = vsel %vm372, %v374, %v376
    %378 = vrot.lane.b32.xlu0 %v375, 112
    %v379 = vpop.permute.xlu0 %378
    %380 = vrot.lane.b32.xlu0 %v377, 112
    %v381 = vpop.permute.xlu0 %380
    %382 = vrot.lane.b32.xlu0 %v376, 112
    %v383 = vpop.permute.xlu0 %382
    %384 = vrot.lane.b32.xlu0 %v347, 96
    %v385 = vpop.permute.xlu0 %384
    %386 = vrot.lane.b32.xlu0 %v350, 96
    %v387 = vpop.permute.xlu0 %386
    %388 = vrot.lane.b32.xlu0 %v353, 96
    %v389 = vpop.permute.xlu0 %388
    %vm390 = vcmask 130048
    %v391 = vsel %vm390, %v347, 0
    %v393 = vsel %vm390, %v350, 0
    %v395 = vsel %vm390, %v353, 0
    %v397 = vsel %vm390, %v385, 0
    %v399 = vsel %vm390, %v387, 0
    %v401 = vsel %vm390, %v389, 0
    %403 = vmatpush.xpose.msra.mxu0 0.0
    %404 = vmatpush.xpose.msra.mxu0 0.0
    %405 = vmatpush.xpose.msra.mxu0 0.0
    %406 = vmatpush.xpose.msra.mxu0 0.0
    %407 = vmatpush.xpose.msra.mxu0 0.0
    %408 = vmatpush.xpose.msra.mxu0 0.0
    %409 = vmatpush.xpose.msra.mxu0 0.0
    %410 = vmatpush.xpose.msra.mxu0 0.0
    %411 = vmatpush.xpose.msra.mxu0 0.0
    %412 = vmatpush.xpose.msra.mxu0 0.0
    %413 = vmatpush.xpose.msra.mxu0 0.0
    %414 = vmatpush.xpose.msra.mxu0 0.0
    %415 = vmatpush.xpose.msra.mxu0 0.0
    %416 = vmatpush.xpose.msra.mxu0 %v401
    %417 = vmatpush.xpose.msra.mxu0 %v399
    %418 = vmatpush.xpose.msra.mxu0 %v397
    %419 = vmatmul.f32.gmra.mxu0 %v391
    %v420 = vpop.f32.mrf.mxu0
    %v421 = vadd.f32 0.0, %v420
    %422 = vmatmul.f32.gmra.mxu0 %v393
    %v423 = vpop.f32.mrf.mxu0
    %v424 = vadd.f32 0.0, %v423
    %425 = vmatmul.f32.gmra.mxu0 %v395
    %v426 = vpop.f32.mrf.mxu0
    %v427 = vadd.f32 0.0, %v426
    %428 = vdwg.mxu0
    %429 = vrot.lane.b32.xlu0 %v365, 96
    %v430 = vpop.permute.xlu0 %429
    %431 = vrot.lane.b32.xlu0 %v367, 96
    %v432 = vpop.permute.xlu0 %431
    %433 = vrot.lane.b32.xlu0 %v369, 96
    %v434 = vpop.permute.xlu0 %433
    %v435 = vsel %vm390, %v365, 0
    %v437 = vsel %vm390, %v367, 0
    %v439 = vsel %vm390, %v369, 0
    %v441 = vsel %vm390, %v430, 0
    %v443 = vsel %vm390, %v432, 0
    %v445 = vsel %vm390, %v434, 0
    %447 = vmatpush.xpose.msra.mxu0 0.0
    %448 = vmatpush.xpose.msra.mxu0 0.0
    %449 = vmatpush.xpose.msra.mxu0 0.0
    %450 = vmatpush.xpose.msra.mxu0 0.0
    %451 = vmatpush.xpose.msra.mxu0 0.0
    %452 = vmatpush.xpose.msra.mxu0 0.0
    %453 = vmatpush.xpose.msra.mxu0 0.0
    %454 = vmatpush.xpose.msra.mxu0 0.0
    %455 = vmatpush.xpose.msra.mxu0 0.0
    %456 = vmatpush.xpose.msra.mxu0 0.0
    %457 = vmatpush.xpose.msra.mxu0 0.0
    %458 = vmatpush.xpose.msra.mxu0 0.0
    %459 = vmatpush.xpose.msra.mxu0 0.0
    %460 = vmatpush.xpose.msra.mxu0 %v445
    %461 = vmatpush.xpose.msra.mxu0 %v443
    %462 = vmatpush.xpose.msra.mxu0 %v441
    %463 = vmatmul.f32.gmra.mxu0 %v435
    %v464 = vpop.f32.mrf.mxu0
    %v465 = vadd.f32 0.0, %v464
    %466 = vmatmul.f32.gmra.mxu0 %v437
    %v467 = vpop.f32.mrf.mxu0
    %v468 = vadd.f32 0.0, %v467
    %469 = vmatmul.f32.gmra.mxu0 %v439
    %v470 = vpop.f32.mrf.mxu0
    %v471 = vadd.f32 0.0, %v470
    %472 = vdwg.mxu0
    %473 = vrot.lane.b32.xlu0 %v375, 96
    %v474 = vpop.permute.xlu0 %473
    %475 = vrot.lane.b32.xlu0 %v377, 96
    %v476 = vpop.permute.xlu0 %475
    %477 = vrot.lane.b32.xlu0 %v376, 96
    %v478 = vpop.permute.xlu0 %477
    %v479 = vsel %vm390, %v375, 0
    %v481 = vsel %vm390, %v377, 0
    %v483 = vsel %vm390, %v376, 0
    %v485 = vsel %vm390, %v474, 0
    %v487 = vsel %vm390, %v476, 0
    %v489 = vsel %vm390, %v478, 0
    %491 = vmatpush.xpose.msra.mxu0 0.0
    %492 = vmatpush.xpose.msra.mxu0 0.0
    %493 = vmatpush.xpose.msra.mxu0 0.0
    %494 = vmatpush.xpose.msra.mxu0 0.0
    %495 = vmatpush.xpose.msra.mxu0 0.0
    %496 = vmatpush.xpose.msra.mxu0 0.0
    %497 = vmatpush.xpose.msra.mxu0 0.0
    %498 = vmatpush.xpose.msra.mxu0 0.0
    %499 = vmatpush.xpose.msra.mxu0 0.0
    %500 = vmatpush.xpose.msra.mxu0 0.0
    %501 = vmatpush.xpose.msra.mxu0 0.0
    %502 = vmatpush.xpose.msra.mxu0 0.0
    %503 = vmatpush.xpose.msra.mxu0 0.0
    %504 = vmatpush.xpose.msra.mxu0 %v489
    %505 = vmatpush.xpose.msra.mxu0 %v487
    %506 = vmatpush.xpose.msra.mxu0 %v485
    %507 = vmatmul.f32.gmra.mxu0 %v479
    %v508 = vpop.f32.mrf.mxu0
    %v509 = vadd.f32 0.0, %v508
    %510 = vmatmul.f32.gmra.mxu0 %v481
    %v511 = vpop.f32.mrf.mxu0
    %v512 = vadd.f32 0.0, %v511
    %513 = vmatmul.f32.gmra.mxu0 %v483
    %v514 = vpop.f32.mrf.mxu0
    %v515 = vadd.f32 0.0, %v514
    %516 = vdwg.mxu0
    %517 = vrot.lane.b32.xlu0 %v379, 96
    %v518 = vpop.permute.xlu0 %517
    %519 = vrot.lane.b32.xlu0 %v381, 96
    %v520 = vpop.permute.xlu0 %519
    %521 = vrot.lane.b32.xlu0 %v383, 96
    %v522 = vpop.permute.xlu0 %521
    %v523 = vsel %vm390, %v379, 0
    %v525 = vsel %vm390, %v381, 0
    %v527 = vsel %vm390, %v383, 0
    %v529 = vsel %vm390, %v518, 0
    %v531 = vsel %vm390, %v520, 0
    %v533 = vsel %vm390, %v522, 0
    %535 = vmatpush.xpose.msra.mxu0 0.0
    %536 = vmatpush.xpose.msra.mxu0 0.0
    %537 = vmatpush.xpose.msra.mxu0 0.0
    %538 = vmatpush.xpose.msra.mxu0 0.0
    %539 = vmatpush.xpose.msra.mxu0 0.0
    %540 = vmatpush.xpose.msra.mxu0 0.0
    %541 = vmatpush.xpose.msra.mxu0 0.0
    %542 = vmatpush.xpose.msra.mxu0 0.0
    %543 = vmatpush.xpose.msra.mxu0 0.0
    %544 = vmatpush.xpose.msra.mxu0 0.0
    %545 = vmatpush.xpose.msra.mxu0 0.0
    %546 = vmatpush.xpose.msra.mxu0 0.0
    %547 = vmatpush.xpose.msra.mxu0 0.0
    %548 = vmatpush.xpose.msra.mxu0 %v533
    %549 = vmatpush.xpose.msra.mxu0 %v531
    %550 = vmatpush.xpose.msra.mxu0 %v529
    %551 = vmatmul.f32.gmra.mxu0 %v523
    %v552 = vpop.f32.mrf.mxu0
    %v553 = vadd.f32 0.0, %v552
    %554 = vmatmul.f32.gmra.mxu0 %v525
    %v555 = vpop.f32.mrf.mxu0
    %v556 = vadd.f32 0.0, %v555
    %557 = vmatmul.f32.gmra.mxu0 %v527
    %v558 = vpop.f32.mrf.mxu0
    %v559 = vadd.f32 0.0, %v558
    %560 = vdwg.mxu0
    %v561 = vmul.f32 %v421, 0.25
    %v562 = vmul.f32 %v424, 0.25
    %v563 = vmul.f32 %v427, 0.25
    %v564 = vmul.f32 %v465, 0.25
    %v565 = vmul.f32 %v468, 0.25
    %v566 = vmul.f32 %v471, 0.25
    %v567 = vmul.f32 %v509, 0.25
    %v568 = vmul.f32 %v512, 0.25
    %v569 = vmul.f32 %v515, 0.25
    %v570 = vmul.f32 %v553, 0.25
    %v571 = vmul.f32 %v556, 0.25
    %v572 = vmul.f32 %v559, 0.25
    %vm573 = vcmask 138240
    %v574 = vsel %vm573, %v561, -inf
    %575 = vmax.xlane.f32.xlu0 %v574
    %v576 = vpop.xlane.xlu0 %575
    %v577 = vsel %vm573, %v562, -inf
    %578 = vmax.xlane.f32.xlu0 %v577
    %v579 = vpop.xlane.xlu0 %578
    %vm580 = vcmask 131072
    %v581 = vsel %vm580, %v563, -inf
    %582 = vmax.xlane.f32.xlu0 %v581
    %v583 = vpop.xlane.xlu0 %582
    %v584 = vsel %vm573, %v564, -inf
    %585 = vmax.xlane.f32.xlu0 %v584
    %v586 = vpop.xlane.xlu0 %585
    %v587 = vsel %vm573, %v565, -inf
    %588 = vmax.xlane.f32.xlu0 %v587
    %v589 = vpop.xlane.xlu0 %588
    %v590 = vsel %vm580, %v566, -inf
    %591 = vmax.xlane.f32.xlu0 %v590
    %v592 = vpop.xlane.xlu0 %591
    %v593 = vsel %vm573, %v567, -inf
    %594 = vmax.xlane.f32.xlu0 %v593
    %v595 = vpop.xlane.xlu0 %594
    %v596 = vsel %vm573, %v568, -inf
    %597 = vmax.xlane.f32.xlu0 %v596
    %v598 = vpop.xlane.xlu0 %597
    %v599 = vsel %vm580, %v569, -inf
    %600 = vmax.xlane.f32.xlu0 %v599
    %v601 = vpop.xlane.xlu0 %600
    %v602 = vsel %vm573, %v570, -inf
    %603 = vmax.xlane.f32.xlu0 %v602
    %v604 = vpop.xlane.xlu0 %603
    %v605 = vsel %vm573, %v571, -inf
    %606 = vmax.xlane.f32.xlu0 %v605
    %v607 = vpop.xlane.xlu0 %606
    %v608 = vsel %vm580, %v572, -inf
    %609 = vmax.xlane.f32.xlu0 %v608
    %v610 = vpop.xlane.xlu0 %609
    %v611 = vsub.f32 %v561, %v576
    %v612 = vsub.f32 %v562, %v579
    %v613 = vsub.f32 %v563, %v583
    %v614 = vsub.f32 %v564, %v586
    %v615 = vsub.f32 %v565, %v589
    %v616 = vsub.f32 %v566, %v592
    %v617 = vsub.f32 %v567, %v595
    %v618 = vsub.f32 %v568, %v598
    %v619 = vsub.f32 %v569, %v601
    %v620 = vsub.f32 %v570, %v604
    %v621 = vsub.f32 %v571, %v607
    %v622 = vsub.f32 %v572, %v610
    %v623 = vmul.f32 %v611, 1.442695
    %v624 = vpow.pop %v623
    %v625 = vmul.f32 %v612, 1.442695
    %v626 = vpow.pop %v625
    %v627 = vmul.f32 %v613, 1.442695
    %v628 = vpow.pop %v627
    %v629 = vmul.f32 %v614, 1.442695
    %v630 = vpow.pop %v629
    %v631 = vmul.f32 %v615, 1.442695
    %v632 = vpow.pop %v631
    %v633 = vmul.f32 %v616, 1.442695
    %v634 = vpow.pop %v633
    %v635 = vmul.f32 %v617, 1.442695
    %v636 = vpow.pop %v635
    %v637 = vmul.f32 %v618, 1.442695
    %v638 = vpow.pop %v637
    %v639 = vmul.f32 %v619, 1.442695
    %v640 = vpow.pop %v639
    %v641 = vmul.f32 %v620, 1.442695
    %v642 = vpow.pop %v641
    %v643 = vmul.f32 %v621, 1.442695
    %v644 = vpow.pop %v643
    %v645 = vmul.f32 %v622, 1.442695
    %v646 = vpow.pop %v645
    %v647 = vsel %vm573, %v624, 0.0
    %648 = vadd.xlane.f32.xlu0 %v647
    %v649 = vpop.xlane.xlu0 %648
    %v650 = vsel %vm573, %v626, 0.0
    %651 = vadd.xlane.f32.xlu0 %v650
    %v652 = vpop.xlane.xlu0 %651
    %v653 = vsel %vm580, %v628, 0.0
    %654 = vadd.xlane.f32.xlu0 %v653
    %v655 = vpop.xlane.xlu0 %654
    %v656 = vsel %vm573, %v630, 0.0
    %657 = vadd.xlane.f32.xlu0 %v656
    %v658 = vpop.xlane.xlu0 %657
    %v659 = vsel %vm573, %v632, 0.0
    %660 = vadd.xlane.f32.xlu0 %v659
    %v661 = vpop.xlane.xlu0 %660
    %v662 = vsel %vm580, %v634, 0.0
    %663 = vadd.xlane.f32.xlu0 %v662
    %v664 = vpop.xlane.xlu0 %663
    %v665 = vsel %vm573, %v636, 0.0
    %666 = vadd.xlane.f32.xlu0 %v665
    %v667 = vpop.xlane.xlu0 %666
    %v668 = vsel %vm573, %v638, 0.0
    %669 = vadd.xlane.f32.xlu0 %v668
    %v670 = vpop.xlane.xlu0 %669
    %v671 = vsel %vm580, %v640, 0.0
    %672 = vadd.xlane.f32.xlu0 %v671
    %v673 = vpop.xlane.xlu0 %672
    %v674 = vsel %vm573, %v642, 0.0
    %675 = vadd.xlane.f32.xlu0 %v674
    %v676 = vpop.xlane.xlu0 %675
    %v677 = vsel %vm573, %v644, 0.0
    %678 = vadd.xlane.f32.xlu0 %v677
    %v679 = vpop.xlane.xlu0 %678
    %v680 = vsel %vm580, %v646, 0.0
    %681 = vadd.xlane.f32.xlu0 %v680
    %v682 = vpop.xlane.xlu0 %681
    %v683 = vlog2.pop %v649
    %v684 = vmul.f32 %v683, 0.6931472
    %v685 = vlog2.pop %v652
    %v686 = vmul.f32 %v685, 0.6931472
    %v687 = vlog2.pop %v655
    %v688 = vmul.f32 %v687, 0.6931472
    %v689 = vlog2.pop %v658
    %v690 = vmul.f32 %v689, 0.6931472
    %v691 = vlog2.pop %v661
    %v692 = vmul.f32 %v691, 0.6931472
    %v693 = vlog2.pop %v664
    %v694 = vmul.f32 %v693, 0.6931472
    %v695 = vlog2.pop %v667
    %v696 = vmul.f32 %v695, 0.6931472
    %v697 = vlog2.pop %v670
    %v698 = vmul.f32 %v697, 0.6931472
    %v699 = vlog2.pop %v673
    %v700 = vmul.f32 %v699, 0.6931472
    %v701 = vlog2.pop %v676
    %v702 = vmul.f32 %v701, 0.6931472
    %v703 = vlog2.pop %v679
    %v704 = vmul.f32 %v703, 0.6931472
    %v705 = vlog2.pop %v682
    %v706 = vmul.f32 %v705, 0.6931472
    %v707 = vsub.f32 %v611, %v684
    %v708 = vsub.f32 %v612, %v686
    %v709 = vsub.f32 %v613, %v688
    %v710 = vsub.f32 %v614, %v690
    %v711 = vsub.f32 %v615, %v692
    %v712 = vsub.f32 %v616, %v694
    %v713 = vsub.f32 %v617, %v696
    %v714 = vsub.f32 %v618, %v698
    %v715 = vsub.f32 %v619, %v700
    %v716 = vsub.f32 %v620, %v702
    %v717 = vsub.f32 %v621, %v704
    %v718 = vsub.f32 %v622, %v706
    %v719 = vld [vmem:[%s16] sm:$0xff]
    %v720 = vld [vmem:[%s16 + $0x8] sm:$0xff]
    %v721 = vld [vmem:[%s16 + $0x10] sm:$0x1]
    %v722 = vld [vmem:[%s16 + $0x18] sm:$0xff]
    %v723 = vld [vmem:[%s16 + $0x20] sm:$0xff]
    %v724 = vld [vmem:[%s16 + $0x28] sm:$0x1]
    %v725 = vld [vmem:[%s16 + $0x30] sm:$0xff]
    %v726 = vld [vmem:[%s16 + $0x38] sm:$0xff]
    %v727 = vld [vmem:[%s16 + $0x40] sm:$0x1]
    %v728 = vld [vmem:[%s16 + $0x48] sm:$0xff]
    %v729 = vld [vmem:[%s16 + $0x50] sm:$0xff]
    %v730 = vld [vmem:[%s16 + $0x58] sm:$0x1]
    %v731 = vsub.f32 0.0, %v719
    %v732 = vsub.f32 0.0, %v720
    %v733 = vsub.f32 0.0, %v721
    %v734 = vsub.f32 0.0, %v722
    %v735 = vsub.f32 0.0, %v723
    %v736 = vsub.f32 0.0, %v724
    %v737 = vsub.f32 0.0, %v725
    %v738 = vsub.f32 0.0, %v726
    %v739 = vsub.f32 0.0, %v727
    %v740 = vsub.f32 0.0, %v728
    %v741 = vsub.f32 0.0, %v729
    %v742 = vsub.f32 0.0, %v730
    %v743 = vmul.f32 %v731, %v707
    %v744 = vmul.f32 %v732, %v708
    %v745 = vmul.f32 %v733, %v709
    %v746 = vmul.f32 %v734, %v710
    %v747 = vmul.f32 %v735, %v711
    %v748 = vmul.f32 %v736, %v712
    %v749 = vmul.f32 %v737, %v713
    %v750 = vmul.f32 %v738, %v714
    %v751 = vmul.f32 %v739, %v715
    %v752 = vmul.f32 %v740, %v716
    %v753 = vmul.f32 %v741, %v717
    %v754 = vmul.f32 %v742, %v718
    %v755 = vsel %vm573, %v743, 0.0
    %756 = vadd.xlane.f32.xlu0 %v755
    %v757 = vpop.xlane.xlu0 %756
    %v758 = vsel %vm573, %v744, 0.0
    %759 = vadd.xlane.f32.xlu0 %v758
    %v760 = vpop.xlane.xlu0 %759
    %v761 = vsel %vm580, %v745, 0.0
    %762 = vadd.xlane.f32.xlu0 %v761
    %v763 = vpop.xlane.xlu0 %762
    %v764 = vsel %vm573, %v746, 0.0
    %765 = vadd.xlane.f32.xlu0 %v764
    %v766 = vpop.xlane.xlu0 %765
    %v767 = vsel %vm573, %v747, 0.0
    %768 = vadd.xlane.f32.xlu0 %v767
    %v769 = vpop.xlane.xlu0 %768
    %v770 = vsel %vm580, %v748, 0.0
    %771 = vadd.xlane.f32.xlu0 %v770
    %v772 = vpop.xlane.xlu0 %771
    %v773 = vsel %vm573, %v749, 0.0
    %774 = vadd.xlane.f32.xlu0 %v773
    %v775 = vpop.xlane.xlu0 %774
    %v776 = vsel %vm573, %v750, 0.0
    %777 = vadd.xlane.f32.xlu0 %v776
    %v778 = vpop.xlane.xlu0 %777
    %v779 = vsel %vm580, %v751, 0.0
    %780 = vadd.xlane.f32.xlu0 %v779
    %v781 = vpop.xlane.xlu0 %780
    %v782 = vsel %vm573, %v752, 0.0
    %783 = vadd.xlane.f32.xlu0 %v782
    %v784 = vpop.xlane.xlu0 %783
    %v785 = vsel %vm573, %v753, 0.0
    %786 = vadd.xlane.f32.xlu0 %v785
    %v787 = vpop.xlane.xlu0 %786
    %v788 = vsel %vm580, %v754, 0.0
    %789 = vadd.xlane.f32.xlu0 %v788
    %v790 = vpop.xlane.xlu0 %789
    %v791 = vadd.f32 %v757, %v766
    %v792 = vadd.f32 %v791, %v775
    %v793 = vadd.f32 %v792, %v784
    %v794 = vadd.f32 %v760, %v769
    %v795 = vadd.f32 %v794, %v778
    %v796 = vadd.f32 %v795, %v787
    %v797 = vsel %vm130, %v763, 0.0
    %v798 = vsel %vm130, %v772, 0.0
    %v799 = vadd.f32 %v797, %v798
    %v800 = vsel %vm130, %v781, 0.0
    %v801 = vadd.f32 %v799, %v800
    %v802 = vsel %vm130, %v790, 0.0
    %v803 = vadd.f32 %v801, %v802
    %v804 = vadd.f32 %v793, %v796
    %v805 = vsel %vm130, %v803, 0.0
    %v806 = vadd.f32 %v804, %v805
    %v807 = vrot.slane %v806, 4
    %v808 = vadd.f32 %v806, %v807
    %v809 = vrot.slane %v808, 2
    %v810 = vadd.f32 %v808, %v809
    %v811 = vrot.slane %v810, 1
    %v812 = vadd.f32 %v810, %v811
    %v813 = vld [vmem:[%s17] sm:$0xff]
    %v814 = vld [vmem:[%s17 + $0x8] sm:$0xff]
    %v815 = vld [vmem:[%s17 + $0x10] sm:$0x1]
    %v816 = vld [vmem:[%s17 + $0x18] sm:$0xff]
    %v817 = vld [vmem:[%s17 + $0x20] sm:$0xff]
    %v818 = vld [vmem:[%s17 + $0x28] sm:$0x1]
    %v819 = vld [vmem:[%s17 + $0x30] sm:$0xff]
    %v820 = vld [vmem:[%s17 + $0x38] sm:$0xff]
    %v821 = vld [vmem:[%s17 + $0x40] sm:$0x1]
    %v822 = vld [vmem:[%s17 + $0x48] sm:$0xff]
    %v823 = vld [vmem:[%s17 + $0x50] sm:$0xff]
    %v824 = vld [vmem:[%s17 + $0x58] sm:$0x1]
    %825 = vrot.lane.b32.xlu0 %v347, 64
    %v826 = vpop.permute.xlu0 %825
    %827 = vrot.lane.b32.xlu0 %v350, 64
    %v828 = vpop.permute.xlu0 %827
    %829 = vrot.lane.b32.xlu0 %v353, 64
    %v830 = vpop.permute.xlu0 %829
    %v831 = vsel %vm390, %v826, 0
    %v833 = vsel %vm390, %v828, 0
    %v835 = vsel %vm390, %v830, 0
    %837 = vmatpush.xpose.msra.mxu0 0.0
    %838 = vmatpush.xpose.msra.mxu0 0.0
    %839 = vmatpush.xpose.msra.mxu0 0.0
    %840 = vmatpush.xpose.msra.mxu0 0.0
    %841 = vmatpush.xpose.msra.mxu0 0.0
    %842 = vmatpush.xpose.msra.mxu0 0.0
    %843 = vmatpush.xpose.msra.mxu0 0.0
    %844 = vmatpush.xpose.msra.mxu0 0.0
    %845 = vmatpush.xpose.msra.mxu0 0.0
    %846 = vmatpush.xpose.msra.mxu0 0.0
    %847 = vmatpush.xpose.msra.mxu0 0.0
    %848 = vmatpush.xpose.msra.mxu0 0.0
    %849 = vmatpush.xpose.msra.mxu0 0.0
    %850 = vmatpush.xpose.msra.mxu0 %v835
    %851 = vmatpush.xpose.msra.mxu0 %v833
    %852 = vmatpush.xpose.msra.mxu0 %v831
    %853 = vmatmul.f32.gmra.mxu0 %v831
    %v854 = vpop.f32.mrf.mxu0
    %v855 = vadd.f32 0.0, %v854
    %856 = vmatmul.f32.gmra.mxu0 %v833
    %v857 = vpop.f32.mrf.mxu0
    %v858 = vadd.f32 0.0, %v857
    %859 = vmatmul.f32.gmra.mxu0 %v835
    %v860 = vpop.f32.mrf.mxu0
    %v861 = vadd.f32 0.0, %v860
    %862 = vdwg.mxu0
    %863 = vrot.lane.b32.xlu0 %v365, 64
    %v864 = vpop.permute.xlu0 %863
    %865 = vrot.lane.b32.xlu0 %v367, 64
    %v866 = vpop.permute.xlu0 %865
    %867 = vrot.lane.b32.xlu0 %v369, 64
    %v868 = vpop.permute.xlu0 %867
    %v869 = vsel %vm390, %v864, 0
    %v871 = vsel %vm390, %v866, 0
    %v873 = vsel %vm390, %v868, 0
    %875 = vmatpush.xpose.msra.mxu0 0.0
    %876 = vmatpush.xpose.msra.mxu0 0.0
    %877 = vmatpush.xpose.msra.mxu0 0.0
    %878 = vmatpush.xpose.msra.mxu0 0.0
    %879 = vmatpush.xpose.msra.mxu0 0.0
    %880 = vmatpush.xpose.msra.mxu0 0.0
    %881 = vmatpush.xpose.msra.mxu0 0.0
    %882 = vmatpush.xpose.msra.mxu0 0.0
    %883 = vmatpush.xpose.msra.mxu0 0.0
    %884 = vmatpush.xpose.msra.mxu0 0.0
    %885 = vmatpush.xpose.msra.mxu0 0.0
    %886 = vmatpush.xpose.msra.mxu0 0.0
    %887 = vmatpush.xpose.msra.mxu0 0.0
    %888 = vmatpush.xpose.msra.mxu0 %v873
    %889 = vmatpush.xpose.msra.mxu0 %v871
    %890 = vmatpush.xpose.msra.mxu0 %v869
    %891 = vmatmul.f32.gmra.mxu0 %v869
    %v892 = vpop.f32.mrf.mxu0
    %v893 = vadd.f32 0.0, %v892
    %894 = vmatmul.f32.gmra.mxu0 %v871
    %v895 = vpop.f32.mrf.mxu0
    %v896 = vadd.f32 0.0, %v895
    %897 = vmatmul.f32.gmra.mxu0 %v873
    %v898 = vpop.f32.mrf.mxu0
    %v899 = vadd.f32 0.0, %v898
    %900 = vdwg.mxu0
    %901 = vrot.lane.b32.xlu0 %v375, 64
    %v902 = vpop.permute.xlu0 %901
    %903 = vrot.lane.b32.xlu0 %v377, 64
    %v904 = vpop.permute.xlu0 %903
    %905 = vrot.lane.b32.xlu0 %v376, 64
    %v906 = vpop.permute.xlu0 %905
    %v907 = vsel %vm390, %v902, 0
    %v909 = vsel %vm390, %v904, 0
    %v911 = vsel %vm390, %v906, 0
    %913 = vmatpush.xpose.msra.mxu0 0.0
    %914 = vmatpush.xpose.msra.mxu0 0.0
    %915 = vmatpush.xpose.msra.mxu0 0.0
    %916 = vmatpush.xpose.msra.mxu0 0.0
    %917 = vmatpush.xpose.msra.mxu0 0.0
    %918 = vmatpush.xpose.msra.mxu0 0.0
    %919 = vmatpush.xpose.msra.mxu0 0.0
    %920 = vmatpush.xpose.msra.mxu0 0.0
    %921 = vmatpush.xpose.msra.mxu0 0.0
    %922 = vmatpush.xpose.msra.mxu0 0.0
    %923 = vmatpush.xpose.msra.mxu0 0.0
    %924 = vmatpush.xpose.msra.mxu0 0.0
    %925 = vmatpush.xpose.msra.mxu0 0.0
    %926 = vmatpush.xpose.msra.mxu0 %v911
    %927 = vmatpush.xpose.msra.mxu0 %v909
    %928 = vmatpush.xpose.msra.mxu0 %v907
    %929 = vmatmul.f32.gmra.mxu0 %v907
    %v930 = vpop.f32.mrf.mxu0
    %v931 = vadd.f32 0.0, %v930
    %932 = vmatmul.f32.gmra.mxu0 %v909
    %v933 = vpop.f32.mrf.mxu0
    %v934 = vadd.f32 0.0, %v933
    %935 = vmatmul.f32.gmra.mxu0 %v911
    %v936 = vpop.f32.mrf.mxu0
    %v937 = vadd.f32 0.0, %v936
    %938 = vdwg.mxu0
    %939 = vrot.lane.b32.xlu0 %v379, 64
    %v940 = vpop.permute.xlu0 %939
    %941 = vrot.lane.b32.xlu0 %v381, 64
    %v942 = vpop.permute.xlu0 %941
    %943 = vrot.lane.b32.xlu0 %v383, 64
    %v944 = vpop.permute.xlu0 %943
    %v945 = vsel %vm390, %v940, 0
    %v947 = vsel %vm390, %v942, 0
    %v949 = vsel %vm390, %v944, 0
    %951 = vmatpush.xpose.msra.mxu0 0.0
    %952 = vmatpush.xpose.msra.mxu0 0.0
    %953 = vmatpush.xpose.msra.mxu0 0.0
    %954 = vmatpush.xpose.msra.mxu0 0.0
    %955 = vmatpush.xpose.msra.mxu0 0.0
    %956 = vmatpush.xpose.msra.mxu0 0.0
    %957 = vmatpush.xpose.msra.mxu0 0.0
    %958 = vmatpush.xpose.msra.mxu0 0.0
    %959 = vmatpush.xpose.msra.mxu0 0.0
    %960 = vmatpush.xpose.msra.mxu0 0.0
    %961 = vmatpush.xpose.msra.mxu0 0.0
    %962 = vmatpush.xpose.msra.mxu0 0.0
    %963 = vmatpush.xpose.msra.mxu0 0.0
    %964 = vmatpush.xpose.msra.mxu0 %v949
    %965 = vmatpush.xpose.msra.mxu0 %v947
    %966 = vmatpush.xpose.msra.mxu0 %v945
    %967 = vmatmul.f32.gmra.mxu0 %v945
    %v968 = vpop.f32.mrf.mxu0
    %v969 = vadd.f32 0.0, %v968
    %970 = vmatmul.f32.gmra.mxu0 %v947
    %v971 = vpop.f32.mrf.mxu0
    %v972 = vadd.f32 0.0, %v971
    %973 = vmatmul.f32.gmra.mxu0 %v949
    %v974 = vpop.f32.mrf.mxu0
    %v975 = vadd.f32 0.0, %v974
    %976 = vdwg.mxu0
    %v977 = vmul.f32 %v855, 0.25
    %v978 = vmul.f32 %v858, 0.25
    %v979 = vmul.f32 %v861, 0.25
    %v980 = vmul.f32 %v893, 0.25
    %v981 = vmul.f32 %v896, 0.25
    %v982 = vmul.f32 %v899, 0.25
    %v983 = vmul.f32 %v931, 0.25
    %v984 = vmul.f32 %v934, 0.25
    %v985 = vmul.f32 %v937, 0.25
    %v986 = vmul.f32 %v969, 0.25
    %v987 = vmul.f32 %v972, 0.25
    %v988 = vmul.f32 %v975, 0.25
    %v989 = vsel %vm573, %v977, -inf
    %990 = vmax.xlane.f32.xlu0 %v989
    %v991 = vpop.xlane.xlu0 %990
    %v992 = vsel %vm573, %v978, -inf
    %993 = vmax.xlane.f32.xlu0 %v992
    %v994 = vpop.xlane.xlu0 %993
    %v995 = vsel %vm580, %v979, -inf
    %996 = vmax.xlane.f32.xlu0 %v995
    %v997 = vpop.xlane.xlu0 %996
    %v998 = vsel %vm573, %v980, -inf
    %999 = vmax.xlane.f32.xlu0 %v998
    %v1000 = vpop.xlane.xlu0 %999
    %v1001 = vsel %vm573, %v981, -inf
    %1002 = vmax.xlane.f32.xlu0 %v1001
    %v1003 = vpop.xlane.xlu0 %1002
    %v1004 = vsel %vm580, %v982, -inf
    %1005 = vmax.xlane.f32.xlu0 %v1004
    %v1006 = vpop.xlane.xlu0 %1005
    %v1007 = vsel %vm573, %v983, -inf
    %1008 = vmax.xlane.f32.xlu0 %v1007
    %v1009 = vpop.xlane.xlu0 %1008
    %v1010 = vsel %vm573, %v984, -inf
    %1011 = vmax.xlane.f32.xlu0 %v1010
    %v1012 = vpop.xlane.xlu0 %1011
    %v1013 = vsel %vm580, %v985, -inf
    %1014 = vmax.xlane.f32.xlu0 %v1013
    %v1015 = vpop.xlane.xlu0 %1014
    %v1016 = vsel %vm573, %v986, -inf
    %1017 = vmax.xlane.f32.xlu0 %v1016
    %v1018 = vpop.xlane.xlu0 %1017
    %v1019 = vsel %vm573, %v987, -inf
    %1020 = vmax.xlane.f32.xlu0 %v1019
    %v1021 = vpop.xlane.xlu0 %1020
    %v1022 = vsel %vm580, %v988, -inf
    %1023 = vmax.xlane.f32.xlu0 %v1022
    %v1024 = vpop.xlane.xlu0 %1023
    %v1025 = vsub.f32 %v977, %v991
    %v1026 = vsub.f32 %v978, %v994
    %v1027 = vsub.f32 %v979, %v997
    %v1028 = vsub.f32 %v980, %v1000
    %v1029 = vsub.f32 %v981, %v1003
    %v1030 = vsub.f32 %v982, %v1006
    %v1031 = vsub.f32 %v983, %v1009
    %v1032 = vsub.f32 %v984, %v1012
    %v1033 = vsub.f32 %v985, %v1015
    %v1034 = vsub.f32 %v986, %v1018
    %v1035 = vsub.f32 %v987, %v1021
    %v1036 = vsub.f32 %v988, %v1024
    %v1037 = vmul.f32 %v1025, 1.442695
    %v1038 = vpow.pop %v1037
    %v1039 = vmul.f32 %v1026, 1.442695
    %v1040 = vpow.pop %v1039
    %v1041 = vmul.f32 %v1027, 1.442695
    %v1042 = vpow.pop %v1041
    %v1043 = vmul.f32 %v1028, 1.442695
    %v1044 = vpow.pop %v1043
    %v1045 = vmul.f32 %v1029, 1.442695
    %v1046 = vpow.pop %v1045
    %v1047 = vmul.f32 %v1030, 1.442695
    %v1048 = vpow.pop %v1047
    %v1049 = vmul.f32 %v1031, 1.442695
    %v1050 = vpow.pop %v1049
    %v1051 = vmul.f32 %v1032, 1.442695
    %v1052 = vpow.pop %v1051
    %v1053 = vmul.f32 %v1033, 1.442695
    %v1054 = vpow.pop %v1053
    %v1055 = vmul.f32 %v1034, 1.442695
    %v1056 = vpow.pop %v1055
    %v1057 = vmul.f32 %v1035, 1.442695
    %v1058 = vpow.pop %v1057
    %v1059 = vmul.f32 %v1036, 1.442695
    %v1060 = vpow.pop %v1059
    %v1061 = vsel %vm573, %v1038, 0.0
    %1062 = vadd.xlane.f32.xlu0 %v1061
    %v1063 = vpop.xlane.xlu0 %1062
    %v1064 = vsel %vm573, %v1040, 0.0
    %1065 = vadd.xlane.f32.xlu0 %v1064
    %v1066 = vpop.xlane.xlu0 %1065
    %v1067 = vsel %vm580, %v1042, 0.0
    %1068 = vadd.xlane.f32.xlu0 %v1067
    %v1069 = vpop.xlane.xlu0 %1068
    %v1070 = vsel %vm573, %v1044, 0.0
    %1071 = vadd.xlane.f32.xlu0 %v1070
    %v1072 = vpop.xlane.xlu0 %1071
    %v1073 = vsel %vm573, %v1046, 0.0
    %1074 = vadd.xlane.f32.xlu0 %v1073
    %v1075 = vpop.xlane.xlu0 %1074
    %v1076 = vsel %vm580, %v1048, 0.0
    %1077 = vadd.xlane.f32.xlu0 %v1076
    %v1078 = vpop.xlane.xlu0 %1077
    %v1079 = vsel %vm573, %v1050, 0.0
    %1080 = vadd.xlane.f32.xlu0 %v1079
    %v1081 = vpop.xlane.xlu0 %1080
    %v1082 = vsel %vm573, %v1052, 0.0
    %1083 = vadd.xlane.f32.xlu0 %v1082
    %v1084 = vpop.xlane.xlu0 %1083
    %v1085 = vsel %vm580, %v1054, 0.0
    %1086 = vadd.xlane.f32.xlu0 %v1085
    %v1087 = vpop.xlane.xlu0 %1086
    %v1088 = vsel %vm573, %v1056, 0.0
    %1089 = vadd.xlane.f32.xlu0 %v1088
    %v1090 = vpop.xlane.xlu0 %1089
    %v1091 = vsel %vm573, %v1058, 0.0
    %1092 = vadd.xlane.f32.xlu0 %v1091
    %v1093 = vpop.xlane.xlu0 %1092
    %v1094 = vsel %vm580, %v1060, 0.0
    %1095 = vadd.xlane.f32.xlu0 %v1094
    %v1096 = vpop.xlane.xlu0 %1095
    %v1097 = vlog2.pop %v1063
    %v1098 = vmul.f32 %v1097, 0.6931472
    %v1099 = vlog2.pop %v1066
    %v1100 = vmul.f32 %v1099, 0.6931472
    %v1101 = vlog2.pop %v1069
    %v1102 = vmul.f32 %v1101, 0.6931472
    %v1103 = vlog2.pop %v1072
    %v1104 = vmul.f32 %v1103, 0.6931472
    %v1105 = vlog2.pop %v1075
    %v1106 = vmul.f32 %v1105, 0.6931472
    %v1107 = vlog2.pop %v1078
    %v1108 = vmul.f32 %v1107, 0.6931472
    %v1109 = vlog2.pop %v1081
    %v1110 = vmul.f32 %v1109, 0.6931472
    %v1111 = vlog2.pop %v1084
    %v1112 = vmul.f32 %v1111, 0.6931472
    %v1113 = vlog2.pop %v1087
    %v1114 = vmul.f32 %v1113, 0.6931472
    %v1115 = vlog2.pop %v1090
    %v1116 = vmul.f32 %v1115, 0.6931472
    %v1117 = vlog2.pop %v1093
    %v1118 = vmul.f32 %v1117, 0.6931472
    %v1119 = vlog2.pop %v1096
    %v1120 = vmul.f32 %v1119, 0.6931472
    %v1121 = vsub.f32 %v1025, %v1098
    %v1122 = vsub.f32 %v1026, %v1100
    %v1123 = vsub.f32 %v1027, %v1102
    %v1124 = vsub.f32 %v1028, %v1104
    %v1125 = vsub.f32 %v1029, %v1106
    %v1126 = vsub.f32 %v1030, %v1108
    %v1127 = vsub.f32 %v1031, %v1110
    %v1128 = vsub.f32 %v1032, %v1112
    %v1129 = vsub.f32 %v1033, %v1114
    %v1130 = vsub.f32 %v1034, %v1116
    %v1131 = vsub.f32 %v1035, %v1118
    %v1132 = vsub.f32 %v1036, %v1120
    %v1133 = vsub.f32 0.0, %v813
    %v1134 = vsub.f32 0.0, %v814
    %v1135 = vsub.f32 0.0, %v815
    %v1136 = vsub.f32 0.0, %v816
    %v1137 = vsub.f32 0.0, %v817
    %v1138 = vsub.f32 0.0, %v818
    %v1139 = vsub.f32 0.0, %v819
    %v1140 = vsub.f32 0.0, %v820
    %v1141 = vsub.f32 0.0, %v821
    %v1142 = vsub.f32 0.0, %v822
    %v1143 = vsub.f32 0.0, %v823
    %v1144 = vsub.f32 0.0, %v824
    %v1145 = vmul.f32 %v1133, %v1121
    %v1146 = vmul.f32 %v1134, %v1122
    %v1147 = vmul.f32 %v1135, %v1123
    %v1148 = vmul.f32 %v1136, %v1124
    %v1149 = vmul.f32 %v1137, %v1125
    %v1150 = vmul.f32 %v1138, %v1126
    %v1151 = vmul.f32 %v1139, %v1127
    %v1152 = vmul.f32 %v1140, %v1128
    %v1153 = vmul.f32 %v1141, %v1129
    %v1154 = vmul.f32 %v1142, %v1130
    %v1155 = vmul.f32 %v1143, %v1131
    %v1156 = vmul.f32 %v1144, %v1132
    %v1157 = vsel %vm573, %v1145, 0.0
    %1158 = vadd.xlane.f32.xlu0 %v1157
    %v1159 = vpop.xlane.xlu0 %1158
    %v1160 = vsel %vm573, %v1146, 0.0
    %1161 = vadd.xlane.f32.xlu0 %v1160
    %v1162 = vpop.xlane.xlu0 %1161
    %v1163 = vsel %vm580, %v1147, 0.0
    %1164 = vadd.xlane.f32.xlu0 %v1163
    %v1165 = vpop.xlane.xlu0 %1164
    %v1166 = vsel %vm573, %v1148, 0.0
    %1167 = vadd.xlane.f32.xlu0 %v1166
    %v1168 = vpop.xlane.xlu0 %1167
    %v1169 = vsel %vm573, %v1149, 0.0
    %1170 = vadd.xlane.f32.xlu0 %v1169
    %v1171 = vpop.xlane.xlu0 %1170
    %v1172 = vsel %vm580, %v1150, 0.0
    %1173 = vadd.xlane.f32.xlu0 %v1172
    %v1174 = vpop.xlane.xlu0 %1173
    %v1175 = vsel %vm573, %v1151, 0.0
    %1176 = vadd.xlane.f32.xlu0 %v1175
    %v1177 = vpop.xlane.xlu0 %1176
    %v1178 = vsel %vm573, %v1152, 0.0
    %1179 = vadd.xlane.f32.xlu0 %v1178
    %v1180 = vpop.xlane.xlu0 %1179
    %v1181 = vsel %vm580, %v1153, 0.0
    %1182 = vadd.xlane.f32.xlu0 %v1181
    %v1183 = vpop.xlane.xlu0 %1182
    %v1184 = vsel %vm573, %v1154, 0.0
    %1185 = vadd.xlane.f32.xlu0 %v1184
    %v1186 = vpop.xlane.xlu0 %1185
    %v1187 = vsel %vm573, %v1155, 0.0
    %1188 = vadd.xlane.f32.xlu0 %v1187
    %v1189 = vpop.xlane.xlu0 %1188
    %v1190 = vsel %vm580, %v1156, 0.0
    %1191 = vadd.xlane.f32.xlu0 %v1190
    %v1192 = vpop.xlane.xlu0 %1191
    %v1193 = vadd.f32 %v1159, %v1168
    %v1194 = vadd.f32 %v1193, %v1177
    %v1195 = vadd.f32 %v1194, %v1186
    %v1196 = vadd.f32 %v1162, %v1171
    %v1197 = vadd.f32 %v1196, %v1180
    %v1198 = vadd.f32 %v1197, %v1189
    %v1199 = vsel %vm130, %v1165, 0.0
    %v1200 = vsel %vm130, %v1174, 0.0
    %v1201 = vadd.f32 %v1199, %v1200
    %v1202 = vsel %vm130, %v1183, 0.0
    %v1203 = vadd.f32 %v1201, %v1202
    %v1204 = vsel %vm130, %v1192, 0.0
    %v1205 = vadd.f32 %v1203, %v1204
    %v1206 = vadd.f32 %v1195, %v1198
    %v1207 = vsel %vm130, %v1205, 0.0
    %v1208 = vadd.f32 %v1206, %v1207
    %v1209 = vrot.slane %v1208, 4
    %v1210 = vadd.f32 %v1208, %v1209
    %v1211 = vrot.slane %v1210, 2
    %v1212 = vadd.f32 %v1210, %v1211
    %v1213 = vrot.slane %v1212, 1
    %v1214 = vadd.f32 %v1212, %v1213
    %v1215 = vrcp.pop %v649
    %v1216 = vmul.f32 %v649, %v1215
    %v1217 = vsub.f32 1.0, %v1216
    %v1218 = vmul.f32 %v1215, %v1217
    %v1219 = vadd.f32 %v1215, %v1218
    %vm1220 = vweird.f32 %v649
    %vm1221 = vweird.f32 %v1215
    %vm1222 = vmor %vm1220, %vm1221
    %v1223 = vsel %vm1222, %v1215, %v1219
    %v1224 = vand.u32 2147483647, %v649
    %vm1225 = vcmp.eq.f32.partialorder %v1224, 8.507059e+37
    %v1226 = vand.u32 %v649, 2147483648
    %v1227 = vor.u32 1.1754944e-38, %v1226
    %v1228 = vsel %vm1225, %v1227, %v1223
    %v1229 = vmul.f32 %v624, %v1228
    %v1230 = vrcp.pop %v652
    %v1231 = vmul.f32 %v652, %v1230
    %v1232 = vsub.f32 1.0, %v1231
    %v1233 = vmul.f32 %v1230, %v1232
    %v1234 = vadd.f32 %v1230, %v1233
    %vm1235 = vweird.f32 %v652
    %vm1236 = vweird.f32 %v1230
    %vm1237 = vmor %vm1235, %vm1236
    %v1238 = vsel %vm1237, %v1230, %v1234
    %v1239 = vand.u32 2147483647, %v652
    %vm1240 = vcmp.eq.f32.partialorder %v1239, 8.507059e+37
    %v1241 = vand.u32 %v652, 2147483648
    %v1242 = vor.u32 1.1754944e-38, %v1241
    %v1243 = vsel %vm1240, %v1242, %v1238
    %v1244 = vmul.f32 %v626, %v1243
    %v1245 = vrcp.pop %v655
    %v1246 = vmul.f32 %v655, %v1245
    %v1247 = vsub.f32 1.0, %v1246
    %v1248 = vmul.f32 %v1245, %v1247
    %v1249 = vadd.f32 %v1245, %v1248
    %vm1250 = vweird.f32 %v655
    %vm1251 = vweird.f32 %v1245
    %vm1252 = vmor %vm1250, %vm1251
    %v1253 = vsel %vm1252, %v1245, %v1249
    %v1254 = vand.u32 2147483647, %v655
    %vm1255 = vcmp.eq.f32.partialorder %v1254, 8.507059e+37
    %v1256 = vand.u32 %v655, 2147483648
    %v1257 = vor.u32 1.1754944e-38, %v1256
    %v1258 = vsel %vm1255, %v1257, %v1253
    %v1259 = vmul.f32 %v628, %v1258
    %v1260 = vrcp.pop %v658
    %v1261 = vmul.f32 %v658, %v1260
    %v1262 = vsub.f32 1.0, %v1261
    %v1263 = vmul.f32 %v1260, %v1262
    %v1264 = vadd.f32 %v1260, %v1263
    %vm1265 = vweird.f32 %v658
    %vm1266 = vweird.f32 %v1260
    %vm1267 = vmor %vm1265, %vm1266
    %v1268 = vsel %vm1267, %v1260, %v1264
    %v1269 = vand.u32 2147483647, %v658
    %vm1270 = vcmp.eq.f32.partialorder %v1269, 8.507059e+37
    %v1271 = vand.u32 %v658, 2147483648
    %v1272 = vor.u32 1.1754944e-38, %v1271
    %v1273 = vsel %vm1270, %v1272, %v1268
    %v1274 = vmul.f32 %v630, %v1273
    %v1275 = vrcp.pop %v661
    %v1276 = vmul.f32 %v661, %v1275
    %v1277 = vsub.f32 1.0, %v1276
    %v1278 = vmul.f32 %v1275, %v1277
    %v1279 = vadd.f32 %v1275, %v1278
    %vm1280 = vweird.f32 %v661
    %vm1281 = vweird.f32 %v1275
    %vm1282 = vmor %vm1280, %vm1281
    %v1283 = vsel %vm1282, %v1275, %v1279
    %v1284 = vand.u32 2147483647, %v661
    %vm1285 = vcmp.eq.f32.partialorder %v1284, 8.507059e+37
    %v1286 = vand.u32 %v661, 2147483648
    %v1287 = vor.u32 1.1754944e-38, %v1286
    %v1288 = vsel %vm1285, %v1287, %v1283
    %v1289 = vmul.f32 %v632, %v1288
    %v1290 = vrcp.pop %v664
    %v1291 = vmul.f32 %v664, %v1290
    %v1292 = vsub.f32 1.0, %v1291
    %v1293 = vmul.f32 %v1290, %v1292
    %v1294 = vadd.f32 %v1290, %v1293
    %vm1295 = vweird.f32 %v664
    %vm1296 = vweird.f32 %v1290
    %vm1297 = vmor %vm1295, %vm1296
    %v1298 = vsel %vm1297, %v1290, %v1294
    %v1299 = vand.u32 2147483647, %v664
    %vm1300 = vcmp.eq.f32.partialorder %v1299, 8.507059e+37
    %v1301 = vand.u32 %v664, 2147483648
    %v1302 = vor.u32 1.1754944e-38, %v1301
    %v1303 = vsel %vm1300, %v1302, %v1298
    %v1304 = vmul.f32 %v634, %v1303
    %v1305 = vrcp.pop %v667
    %v1306 = vmul.f32 %v667, %v1305
    %v1307 = vsub.f32 1.0, %v1306
    %v1308 = vmul.f32 %v1305, %v1307
    %v1309 = vadd.f32 %v1305, %v1308
    %vm1310 = vweird.f32 %v667
    %vm1311 = vweird.f32 %v1305
    %vm1312 = vmor %vm1310, %vm1311
    %v1313 = vsel %vm1312, %v1305, %v1309
    %v1314 = vand.u32 2147483647, %v667
    %vm1315 = vcmp.eq.f32.partialorder %v1314, 8.507059e+37
    %v1316 = vand.u32 %v667, 2147483648
    %v1317 = vor.u32 1.1754944e-38, %v1316
    %v1318 = vsel %vm1315, %v1317, %v1313
    %v1319 = vmul.f32 %v636, %v1318
    %v1320 = vrcp.pop %v670
    %v1321 = vmul.f32 %v670, %v1320
    %v1322 = vsub.f32 1.0, %v1321
    %v1323 = vmul.f32 %v1320, %v1322
    %v1324 = vadd.f32 %v1320, %v1323
    %vm1325 = vweird.f32 %v670
    %vm1326 = vweird.f32 %v1320
    %vm1327 = vmor %vm1325, %vm1326
    %v1328 = vsel %vm1327, %v1320, %v1324
    %v1329 = vand.u32 2147483647, %v670
    %vm1330 = vcmp.eq.f32.partialorder %v1329, 8.507059e+37
    %v1331 = vand.u32 %v670, 2147483648
    %v1332 = vor.u32 1.1754944e-38, %v1331
    %v1333 = vsel %vm1330, %v1332, %v1328
    %v1334 = vmul.f32 %v638, %v1333
    %v1335 = vrcp.pop %v673
    %v1336 = vmul.f32 %v673, %v1335
    %v1337 = vsub.f32 1.0, %v1336
    %v1338 = vmul.f32 %v1335, %v1337
    %v1339 = vadd.f32 %v1335, %v1338
    %vm1340 = vweird.f32 %v673
    %vm1341 = vweird.f32 %v1335
    %vm1342 = vmor %vm1340, %vm1341
    %v1343 = vsel %vm1342, %v1335, %v1339
    %v1344 = vand.u32 2147483647, %v673
    %vm1345 = vcmp.eq.f32.partialorder %v1344, 8.507059e+37
    %v1346 = vand.u32 %v673, 2147483648
    %v1347 = vor.u32 1.1754944e-38, %v1346
    %v1348 = vsel %vm1345, %v1347, %v1343
    %v1349 = vmul.f32 %v640, %v1348
    %v1350 = vrcp.pop %v676
    %v1351 = vmul.f32 %v676, %v1350
    %v1352 = vsub.f32 1.0, %v1351
    %v1353 = vmul.f32 %v1350, %v1352
    %v1354 = vadd.f32 %v1350, %v1353
    %vm1355 = vweird.f32 %v676
    %vm1356 = vweird.f32 %v1350
    %vm1357 = vmor %vm1355, %vm1356
    %v1358 = vsel %vm1357, %v1350, %v1354
    %v1359 = vand.u32 2147483647, %v676
    %vm1360 = vcmp.eq.f32.partialorder %v1359, 8.507059e+37
    %v1361 = vand.u32 %v676, 2147483648
    %v1362 = vor.u32 1.1754944e-38, %v1361
    %v1363 = vsel %vm1360, %v1362, %v1358
    %v1364 = vmul.f32 %v642, %v1363
    %v1365 = vrcp.pop %v679
    %v1366 = vmul.f32 %v679, %v1365
    %v1367 = vsub.f32 1.0, %v1366
    %v1368 = vmul.f32 %v1365, %v1367
    %v1369 = vadd.f32 %v1365, %v1368
    %vm1370 = vweird.f32 %v679
    %vm1371 = vweird.f32 %v1365
    %vm1372 = vmor %vm1370, %vm1371
    %v1373 = vsel %vm1372, %v1365, %v1369
    %v1374 = vand.u32 2147483647, %v679
    %vm1375 = vcmp.eq.f32.partialorder %v1374, 8.507059e+37
    %v1376 = vand.u32 %v679, 2147483648
    %v1377 = vor.u32 1.1754944e-38, %v1376
    %v1378 = vsel %vm1375, %v1377, %v1373
    %v1379 = vmul.f32 %v644, %v1378
    %v1380 = vrcp.pop %v682
    %v1381 = vmul.f32 %v682, %v1380
    %v1382 = vsub.f32 1.0, %v1381
    %v1383 = vmul.f32 %v1380, %v1382
    %v1384 = vadd.f32 %v1380, %v1383
    %vm1385 = vweird.f32 %v682
    %vm1386 = vweird.f32 %v1380
    %vm1387 = vmor %vm1385, %vm1386
    %v1388 = vsel %vm1387, %v1380, %v1384
    %v1389 = vand.u32 2147483647, %v682
    %vm1390 = vcmp.eq.f32.partialorder %v1389, 8.507059e+37
    %v1391 = vand.u32 %v682, 2147483648
    %v1392 = vor.u32 1.1754944e-38, %v1391
    %v1393 = vsel %vm1390, %v1392, %v1388
    %v1394 = vmul.f32 %v646, %v1393
    %v1398 = vsel %vm573, %v1229, 0
    %v1401 = vsel %vm573, %v1244, 0
    %v1404 = vsel %vm573, %v1259, 0
    %v1406 = vsel %vm130, %v830, 0
    %1408 = vmatpush.msra.mxu0 0.0
    %1409 = vmatpush.msra.mxu0 0.0
    %1410 = vmatpush.msra.mxu0 0.0
    %1411 = vmatpush.msra.mxu0 0.0
    %1412 = vmatpush.msra.mxu0 0.0
    %1413 = vmatpush.msra.mxu0 0.0
    %1414 = vmatpush.msra.mxu0 0.0
    %1415 = vmatpush.msra.mxu0 0.0
    %1416 = vmatpush.msra.mxu0 0.0
    %1417 = vmatpush.msra.mxu0 0.0
    %1418 = vmatpush.msra.mxu0 0.0
    %1419 = vmatpush.msra.mxu0 0.0
    %1420 = vmatpush.msra.mxu0 0.0
    %1421 = vmatpush.msra.mxu0 %v1406
    %1422 = vmatpush.msra.mxu0 %v828
    %1423 = vmatpush.msra.mxu0 %v826
    %1424 = vmatmul.f32.gmra.mxu0 %v1398
    %v1425 = vpop.f32.mrf.mxu0
    %v1426 = vadd.f32 0.0, %v1425
    %1427 = vmatmul.f32.gmra.mxu0 %v1401
    %v1428 = vpop.f32.mrf.mxu0
    %v1429 = vadd.f32 0.0, %v1428
    %1430 = vmatmul.f32.gmra.mxu0 %v1404
    %v1431 = vpop.f32.mrf.mxu0
    %v1432 = vadd.f32 0.0, %v1431
    %1433 = vdwg.mxu0
    %v1437 = vsel %vm573, %v1274, 0
    %v1440 = vsel %vm573, %v1289, 0
    %v1443 = vsel %vm573, %v1304, 0
    %v1445 = vsel %vm130, %v868, 0
    %1447 = vmatpush.msra.mxu0 0.0
    %1448 = vmatpush.msra.mxu0 0.0
    %1449 = vmatpush.msra.mxu0 0.0
    %1450 = vmatpush.msra.mxu0 0.0
    %1451 = vmatpush.msra.mxu0 0.0
    %1452 = vmatpush.msra.mxu0 0.0
    %1453 = vmatpush.msra.mxu0 0.0
    %1454 = vmatpush.msra.mxu0 0.0
    %1455 = vmatpush.msra.mxu0 0.0
    %1456 = vmatpush.msra.mxu0 0.0
    %1457 = vmatpush.msra.mxu0 0.0
    %1458 = vmatpush.msra.mxu0 0.0
    %1459 = vmatpush.msra.mxu0 0.0
    %1460 = vmatpush.msra.mxu0 %v1445
    %1461 = vmatpush.msra.mxu0 %v866
    %1462 = vmatpush.msra.mxu0 %v864
    %1463 = vmatmul.f32.gmra.mxu0 %v1437
    %v1464 = vpop.f32.mrf.mxu0
    %v1465 = vadd.f32 0.0, %v1464
    %1466 = vmatmul.f32.gmra.mxu0 %v1440
    %v1467 = vpop.f32.mrf.mxu0
    %v1468 = vadd.f32 0.0, %v1467
    %1469 = vmatmul.f32.gmra.mxu0 %v1443
    %v1470 = vpop.f32.mrf.mxu0
    %v1471 = vadd.f32 0.0, %v1470
    %1472 = vdwg.mxu0
    %v1476 = vsel %vm573, %v1319, 0
    %v1479 = vsel %vm573, %v1334, 0
    %v1482 = vsel %vm573, %v1349, 0
    %v1484 = vsel %vm130, %v906, 0
    %1486 = vmatpush.msra.mxu0 0.0
    %1487 = vmatpush.msra.mxu0 0.0
    %1488 = vmatpush.msra.mxu0 0.0
    %1489 = vmatpush.msra.mxu0 0.0
    %1490 = vmatpush.msra.mxu0 0.0
    %1491 = vmatpush.msra.mxu0 0.0
    %1492 = vmatpush.msra.mxu0 0.0
    %1493 = vmatpush.msra.mxu0 0.0
    %1494 = vmatpush.msra.mxu0 0.0
    %1495 = vmatpush.msra.mxu0 0.0
    %1496 = vmatpush.msra.mxu0 0.0
    %1497 = vmatpush.msra.mxu0 0.0
    %1498 = vmatpush.msra.mxu0 0.0
    %1499 = vmatpush.msra.mxu0 %v1484
    %1500 = vmatpush.msra.mxu0 %v904
    %1501 = vmatpush.msra.mxu0 %v902
    %1502 = vmatmul.f32.gmra.mxu0 %v1476
    %v1503 = vpop.f32.mrf.mxu0
    %v1504 = vadd.f32 0.0, %v1503
    %1505 = vmatmul.f32.gmra.mxu0 %v1479
    %v1506 = vpop.f32.mrf.mxu0
    %v1507 = vadd.f32 0.0, %v1506
    %1508 = vmatmul.f32.gmra.mxu0 %v1482
    %v1509 = vpop.f32.mrf.mxu0
    %v1510 = vadd.f32 0.0, %v1509
    %1511 = vdwg.mxu0
    %v1515 = vsel %vm573, %v1364, 0
    %v1518 = vsel %vm573, %v1379, 0
    %v1521 = vsel %vm573, %v1394, 0
    %v1523 = vsel %vm130, %v944, 0
    %1525 = vmatpush.msra.mxu0 0.0
    %1526 = vmatpush.msra.mxu0 0.0
    %1527 = vmatpush.msra.mxu0 0.0
    %1528 = vmatpush.msra.mxu0 0.0
    %1529 = vmatpush.msra.mxu0 0.0
    %1530 = vmatpush.msra.mxu0 0.0
    %1531 = vmatpush.msra.mxu0 0.0
    %1532 = vmatpush.msra.mxu0 0.0
    %1533 = vmatpush.msra.mxu0 0.0
    %1534 = vmatpush.msra.mxu0 0.0
    %1535 = vmatpush.msra.mxu0 0.0
    %1536 = vmatpush.msra.mxu0 0.0
    %1537 = vmatpush.msra.mxu0 0.0
    %1538 = vmatpush.msra.mxu0 %v1523
    %1539 = vmatpush.msra.mxu0 %v942
    %1540 = vmatpush.msra.mxu0 %v940
    %1541 = vmatmul.f32.gmra.mxu0 %v1515
    %v1542 = vpop.f32.mrf.mxu0
    %v1543 = vadd.f32 0.0, %v1542
    %1544 = vmatmul.f32.gmra.mxu0 %v1518
    %v1545 = vpop.f32.mrf.mxu0
    %v1546 = vadd.f32 0.0, %v1545
    %1547 = vmatmul.f32.gmra.mxu0 %v1521
    %v1548 = vpop.f32.mrf.mxu0
    %v1549 = vadd.f32 0.0, %v1548
    %1550 = vdwg.mxu0
    %v1551 = vld [vmem:[%s8] sm:$0xff]
    %v1552 = vld [vmem:[%s8 + $0x8] sm:$0xff]
    %v1553 = vld [vmem:[%s8 + $0x10] sm:$0xff]
    %v1554 = vld [vmem:[%s8 + $0x18] sm:$0xff]
    %v1555 = vld [vmem:[%s9] sm:$0x1]
    %1559 = vrot.lane.b32.xlu0 %v1465, 16
    %v1560 = vpop.permute.xlu0 %1559
    %1561 = vrot.lane.b32.xlu0 %v1468, 16
    %v1562 = vpop.permute.xlu0 %1561
    %1563 = vrot.lane.b32.xlu0 %v1471, 16
    %v1564 = vpop.permute.xlu0 %1563
    %v1568 = vsel %vm390, %v1426, %v1560
    %v1569 = vsel %vm390, %v1429, %v1562
    %v1570 = vsel %vm390, %v1432, %v1564
    %1574 = vrot.lane.b32.xlu0 %v1543, 16
    %v1575 = vpop.permute.xlu0 %1574
    %1576 = vrot.lane.b32.xlu0 %v1546, 16
    %v1577 = vpop.permute.xlu0 %1576
    %1578 = vrot.lane.b32.xlu0 %v1549, 16
    %v1579 = vpop.permute.xlu0 %1578
    %v1583 = vsel %vm390, %v1504, %v1575
    %v1584 = vsel %vm390, %v1507, %v1577
    %v1585 = vsel %vm390, %v1510, %v1579
    %v1589 = vrot.slane %v1583, 7
    %v1590 = vrot.slane %v1584, 7
    %v1591 = vsel %vm130, %v1589, %v1590
    %v1592 = vrot.slane %v1585, 7
    %v1593 = vsel %vm130, %v1590, %v1592
    %v1595 = vsel %vm130, %v1570, %v1589
    %v1597 = vperm.slane %v1555, 0
    %v1600 = vsel %vm176, %v1568, 0
    %v1603 = vsel %vm176, %v1569, 0
    %v1606 = vsel %vm176, %v1595, 0
    %v1608 = vsel %vm176, %v1591, 0
    %v1610 = vsel %vm176, %v1593, 0
    %1612 = vmatpush.msra.mxu0 0.0
    %1613 = vmatpush.msra.mxu0 0.0
    %1614 = vmatpush.msra.mxu0 0.0
    %1615 = vmatpush.msra.mxu0 0.0
    %1616 = vmatpush.msra.mxu0 0.0
    %1617 = vmatpush.msra.mxu0 0.0
    %1618 = vmatpush.msra.mxu0 0.0
    %1619 = vmatpush.msra.mxu0 0.0
    %1620 = vmatpush.msra.mxu0 0.0
    %1621 = vmatpush.msra.mxu0 0.0
    %1622 = vmatpush.msra.mxu0 0.0
    %1623 = vmatpush.msra.mxu0 0.0
    %1624 = vmatpush.msra.mxu0 %v1554
    %1625 = vmatpush.msra.mxu0 %v1553
    %1626 = vmatpush.msra.mxu0 %v1552
    %1627 = vmatpush.msra.mxu0 %v1551
    %1628 = vmatmul.f32.gmra.mxu0 %v1600
    %v1629 = vpop.f32.mrf.mxu0
    %v1630 = vadd.f32 %v1597, %v1629
    %1631 = vmatmul.f32.gmra.mxu0 %v1603
    %v1632 = vpop.f32.mrf.mxu0
    %v1633 = vadd.f32 %v1597, %v1632
    %1634 = vmatmul.f32.gmra.mxu0 %v1606
    %v1635 = vpop.f32.mrf.mxu0
    %v1636 = vadd.f32 %v1597, %v1635
    %1637 = vmatmul.f32.gmra.mxu0 %v1608
    %v1638 = vpop.f32.mrf.mxu0
    %v1639 = vadd.f32 %v1597, %v1638
    %1640 = vmatmul.f32.gmra.mxu0 %v1610
    %v1641 = vpop.f32.mrf.mxu0
    %v1642 = vadd.f32 %v1597, %v1641
    %1643 = vdwg.mxu0
    %v1644 = vadd.f32 %v165, %v1630
    %v1645 = vadd.f32 %v138, %v1633
    %v1646 = vadd.f32 %v168, %v1636
    %v1647 = vadd.f32 %v159, %v1639
    %v1648 = vadd.f32 %v161, %v1642
    %v1649 = vld [vmem:[%s10] sm:$0x1]
    %v1650 = vld [vmem:[%s11] sm:$0x1]
    %v1651 = vld [vmem:[%s12] sm:$0xff]
    %v1652 = vld [vmem:[%s12 + $0x8] sm:$0xff]
    %v1653 = vld [vmem:[%s12 + $0x10] sm:$0xff]
    %v1654 = vld [vmem:[%s12 + $0x18] sm:$0xff]
    %v1655 = vld [vmem:[%s13] sm:$0x1]
    %v1656 = vld [vmem:[%s14] sm:$0xff]
    %v1657 = vld [vmem:[%s14 + $0x8] sm:$0xff]
    %v1658 = vld [vmem:[%s14 + $0x10] sm:$0xff]
    %v1659 = vld [vmem:[%s14 + $0x18] sm:$0xff]
    %v1660 = vld [vmem:[%s14 + $0x20] sm:$0xff]
    %v1661 = vld [vmem:[%s14 + $0x28] sm:$0xff]
    %v1662 = vld [vmem:[%s14 + $0x30] sm:$0xff]
    %v1663 = vld [vmem:[%s14 + $0x38] sm:$0xff]
    %v1664 = vld [vmem:[%s14 + $0x40] sm:$0xff]
    %v1665 = vld [vmem:[%s14 + $0x48] sm:$0xff]
    %v1666 = vld [vmem:[%s14 + $0x50] sm:$0xff]
    %v1667 = vld [vmem:[%s14 + $0x58] sm:$0xff]
    %v1668 = vld [vmem:[%s14 + $0x60] sm:$0xff]
    %v1669 = vld [vmem:[%s14 + $0x68] sm:$0xff]
    %v1670 = vld [vmem:[%s14 + $0x70] sm:$0xff]
    %v1671 = vld [vmem:[%s14 + $0x78] sm:$0xff]
    %v1672 = vld [vmem:[%s15] sm:$0x1]
    %v1673 = vsel %vm176, %v1644, 0.0
    %1674 = vadd.xlane.f32.xlu0 %v1673
    %v1675 = vpop.xlane.xlu0 %1674
    %v1676 = vsel %vm176, %v1645, 0.0
    %1677 = vadd.xlane.f32.xlu0 %v1676
    %v1678 = vpop.xlane.xlu0 %1677
    %v1679 = vsel %vm176, %v1646, 0.0
    %1680 = vadd.xlane.f32.xlu0 %v1679
    %v1681 = vpop.xlane.xlu0 %1680
    %v1682 = vsel %vm176, %v1647, 0.0
    %1683 = vadd.xlane.f32.xlu0 %v1682
    %v1684 = vpop.xlane.xlu0 %1683
    %v1685 = vsel %vm189, %v1648, 0.0
    %1686 = vadd.xlane.f32.xlu0 %v1685
    %v1687 = vpop.xlane.xlu0 %1686
    %v1688 = vmul.f32 %v1675, %v199
    %v1689 = vmul.f32 %v1678, %v199
    %v1690 = vmul.f32 %v1681, %v199
    %v1691 = vmul.f32 %v1684, %v199
    %v1692 = vmul.f32 %v1687, %v199
    %v1693 = vsub.f32 %v1644, %v1688
    %v1694 = vsub.f32 %v1645, %v1689
    %v1695 = vsub.f32 %v1646, %v1690
    %v1696 = vsub.f32 %v1647, %v1691
    %v1697 = vsub.f32 %v1648, %v1692
    %v1698 = vmul.f32 %v1693, %v1693
    %v1699 = vmul.f32 %v1694, %v1694
    %v1700 = vmul.f32 %v1695, %v1695
    %v1701 = vmul.f32 %v1696, %v1696
    %v1702 = vmul.f32 %v1697, %v1697
    %v1703 = vsel %vm176, %v1698, 0.0
    %1704 = vadd.xlane.f32.xlu0 %v1703
    %v1705 = vpop.xlane.xlu0 %1704
    %v1706 = vsel %vm176, %v1699, 0.0
    %1707 = vadd.xlane.f32.xlu0 %v1706
    %v1708 = vpop.xlane.xlu0 %1707
    %v1709 = vsel %vm176, %v1700, 0.0
    %1710 = vadd.xlane.f32.xlu0 %v1709
    %v1711 = vpop.xlane.xlu0 %1710
    %v1712 = vsel %vm176, %v1701, 0.0
    %1713 = vadd.xlane.f32.xlu0 %v1712
    %v1714 = vpop.xlane.xlu0 %1713
    %v1715 = vsel %vm189, %v1702, 0.0
    %1716 = vadd.xlane.f32.xlu0 %v1715
    %v1717 = vpop.xlane.xlu0 %1716
    %v1718 = vmul.f32 %v1705, %v199
    %v1719 = vmul.f32 %v1708, %v199
    %v1720 = vmul.f32 %v1711, %v199
    %v1721 = vmul.f32 %v1714, %v199
    %v1722 = vmul.f32 %v1717, %v199
    %v1723 = vadd.f32 %v1718, 1e-05
    %v1724 = vadd.f32 %v1719, 1e-05
    %v1725 = vadd.f32 %v1720, 1e-05
    %v1726 = vadd.f32 %v1721, 1e-05
    %v1727 = vadd.f32 %v1722, 1e-05
    %v1728 = vrsqrt.pop %v1723
    %v1729 = vmul.f32 %v1728, %v1723
    %v1730 = vmul.f32 %v1729, %v1728
    %v1731 = vmul.f32 0.5, %v1730
    %v1732 = vsub.f32 1.5, %v1731
    %v1733 = vmul.f32 %v1728, %v1732
    %vm1734 = vweird.f32 %v1723
    %vm1735 = vweird.f32 %v1728
    %vm1736 = vmor %vm1734, %vm1735
    %v1737 = vsel %vm1736, %v1728, %v1733
    %v1738 = vrsqrt.pop %v1724
    %v1739 = vmul.f32 %v1738, %v1724
    %v1740 = vmul.f32 %v1739, %v1738
    %v1741 = vmul.f32 0.5, %v1740
    %v1742 = vsub.f32 1.5, %v1741
    %v1743 = vmul.f32 %v1738, %v1742
    %vm1744 = vweird.f32 %v1724
    %vm1745 = vweird.f32 %v1738
    %vm1746 = vmor %vm1744, %vm1745
    %v1747 = vsel %vm1746, %v1738, %v1743
    %v1748 = vrsqrt.pop %v1725
    %v1749 = vmul.f32 %v1748, %v1725
    %v1750 = vmul.f32 %v1749, %v1748
    %v1751 = vmul.f32 0.5, %v1750
    %v1752 = vsub.f32 1.5, %v1751
    %v1753 = vmul.f32 %v1748, %v1752
    %vm1754 = vweird.f32 %v1725
    %vm1755 = vweird.f32 %v1748
    %vm1756 = vmor %vm1754, %vm1755
    %v1757 = vsel %vm1756, %v1748, %v1753
    %v1758 = vrsqrt.pop %v1726
    %v1759 = vmul.f32 %v1758, %v1726
    %v1760 = vmul.f32 %v1759, %v1758
    %v1761 = vmul.f32 0.5, %v1760
    %v1762 = vsub.f32 1.5, %v1761
    %v1763 = vmul.f32 %v1758, %v1762
    %vm1764 = vweird.f32 %v1726
    %vm1765 = vweird.f32 %v1758
    %vm1766 = vmor %vm1764, %vm1765
    %v1767 = vsel %vm1766, %v1758, %v1763
    %v1768 = vrsqrt.pop %v1727
    %v1769 = vmul.f32 %v1768, %v1727
    %v1770 = vmul.f32 %v1769, %v1768
    %v1771 = vmul.f32 0.5, %v1770
    %v1772 = vsub.f32 1.5, %v1771
    %v1773 = vmul.f32 %v1768, %v1772
    %vm1774 = vweird.f32 %v1727
    %vm1775 = vweird.f32 %v1768
    %vm1776 = vmor %vm1774, %vm1775
    %v1777 = vsel %vm1776, %v1768, %v1773
    %v1778 = vmul.f32 %v1693, %v1737
    %v1779 = vmul.f32 %v1694, %v1747
    %v1780 = vmul.f32 %v1695, %v1757
    %v1781 = vmul.f32 %v1696, %v1767
    %v1782 = vmul.f32 %v1697, %v1777
    %v1784 = vperm.slane %v1649, 0
    %v1786 = vmul.f32 %v1778, %v1784
    %v1787 = vmul.f32 %v1779, %v1784
    %v1788 = vmul.f32 %v1780, %v1784
    %v1789 = vmul.f32 %v1781, %v1784
    %v1790 = vmul.f32 %v1782, %v1784
    %v1792 = vperm.slane %v1650, 0
    %v1794 = vadd.f32 %v1786, %v1792
    %v1795 = vadd.f32 %v1787, %v1792
    %v1796 = vadd.f32 %v1788, %v1792
    %v1797 = vadd.f32 %v1789, %v1792
    %v1798 = vadd.f32 %v1790, %v1792
    %v1800 = vperm.slane %v1655, 0
    %v1803 = vsel %vm176, %v1794, 0
    %v1806 = vsel %vm176, %v1795, 0
    %v1809 = vsel %vm176, %v1796, 0
    %v1812 = vsel %vm176, %v1797, 0
    %v1815 = vsel %vm176, %v1798, 0
    %1817 = vmatpush.msra.mxu0 0.0
    %1818 = vmatpush.msra.mxu0 0.0
    %1819 = vmatpush.msra.mxu0 0.0
    %1820 = vmatpush.msra.mxu0 0.0
    %1821 = vmatpush.msra.mxu0 0.0
    %1822 = vmatpush.msra.mxu0 0.0
    %1823 = vmatpush.msra.mxu0 0.0
    %1824 = vmatpush.msra.mxu0 0.0
    %1825 = vmatpush.msra.mxu0 0.0
    %1826 = vmatpush.msra.mxu0 0.0
    %1827 = vmatpush.msra.mxu0 0.0
    %1828 = vmatpush.msra.mxu0 0.0
    %1829 = vmatpush.msra.mxu0 %v1654
    %1830 = vmatpush.msra.mxu0 %v1653
    %1831 = vmatpush.msra.mxu0 %v1652
    %1832 = vmatpush.msra.mxu0 %v1651
    %1833 = vmatmul.f32.gmra.mxu0 %v1803
    %v1834 = vpop.f32.mrf.mxu0
    %v1835 = vadd.f32 %v1800, %v1834
    %1836 = vmatmul.f32.gmra.mxu0 %v1806
    %v1837 = vpop.f32.mrf.mxu0
    %v1838 = vadd.f32 %v1800, %v1837
    %1839 = vmatmul.f32.gmra.mxu0 %v1809
    %v1840 = vpop.f32.mrf.mxu0
    %v1841 = vadd.f32 %v1800, %v1840
    %1842 = vmatmul.f32.gmra.mxu0 %v1812
    %v1843 = vpop.f32.mrf.mxu0
    %v1844 = vadd.f32 %v1800, %v1843
    %1845 = vmatmul.f32.gmra.mxu0 %v1815
    %v1846 = vpop.f32.mrf.mxu0
    %v1847 = vadd.f32 %v1800, %v1846
    %1848 = vdwg.mxu0
    %v1849 = vmul.f32 %v1835, 0.5
    %v1850 = vmul.f32 %v1838, 0.5
    %v1851 = vmul.f32 %v1841, 0.5
    %v1852 = vmul.f32 %v1844, 0.5
    %v1853 = vmul.f32 %v1847, 0.5
    %v1854 = vmul.f32 %v1835, 0.70710677
    %v1855 = vmul.f32 %v1838, 0.70710677
    %v1856 = vmul.f32 %v1841, 0.70710677
    %v1857 = vmul.f32 %v1844, 0.70710677
    %v1858 = vmul.f32 %v1847, 0.70710677
    %v1859 = vmul.f32 %v1854, %v1854
    %v1860 = vmin.f32 16.0, %v1859
    %v1861 = vmul.f32 %v1860, 2.1237322e-06
    %v1862 = vadd.f32 %v1861, 0.00028619796
    %v1863 = vmul.f32 %v1860, %v1862
    %v1864 = vadd.f32 %v1863, 0.0036580483
    %v1865 = vmul.f32 %v1860, %v1864
    %v1866 = vadd.f32 %v1865, 0.05243302
    %v1867 = vmul.f32 %v1860, %v1866
    %v1868 = vadd.f32 %v1867, 0.18741608
    %v1869 = vmul.f32 %v1860, %v1868
    %v1870 = vadd.f32 %v1869, 1.1283791
    %v1871 = vmul.f32 %v1854, %v1870
    %v1872 = vmul.f32 %v1860, 3.8918573e-05
    %v1873 = vadd.f32 %v1872, 0.001143296
    %v1874 = vmul.f32 %v1860, %v1873
    %v1875 = vadd.f32 %v1874, 0.014752088
    %v1876 = vmul.f32 %v1860, %v1875
    %v1877 = vadd.f32 %v1876, 0.112945676
    %v1878 = vmul.f32 %v1860, %v1877
    %v1879 = vadd.f32 %v1878, 0.4994258
    %v1880 = vmul.f32 %v1860, %v1879
    %v1881 = vadd.f32 %v1880, 1.0
    %v1882 = vrcp.pop %v1881
    %v1883 = vmul.f32 %v1881, %v1882
    %v1884 = vsub.f32 1.0, %v1883
    %v1885 = vmul.f32 %v1882, %v1884
    %v1886 = vadd.f32 %v1882, %v1885
    %vm1887 = vweird.f32 %v1881
    %vm1888 = vweird.f32 %v1882
    %vm1889 = vmor %vm1887, %vm1888
    %v1890 = vsel %vm1889, %v1882, %v1886
    %v1891 = vand.u32 2147483647, %v1881
    %vm1892 = vcmp.eq.f32.partialorder %v1891, 8.507059e+37
    %v1893 = vand.u32 %v1881, 2147483648
    %v1894 = vor.u32 1.1754944e-38, %v1893
    %v1895 = vsel %vm1892, %v1894, %v1890
    %v1896 = vmul.f32 %v1871, %v1895
    %v1897 = vmin.f32 %v1896, 1.0
    %v1898 = vmax.f32 %v1897, -1.0
    %v1899 = vmul.f32 %v1855, %v1855
    %v1900 = vmin.f32 16.0, %v1899
    %v1901 = vmul.f32 %v1900, 2.1237322e-06
    %v1902 = vadd.f32 %v1901, 0.00028619796
    %v1903 = vmul.f32 %v1900, %v1902
    %v1904 = vadd.f32 %v1903, 0.0036580483
    %v1905 = vmul.f32 %v1900, %v1904
    %v1906 = vadd.f32 %v1905, 0.05243302
    %v1907 = vmul.f32 %v1900, %v1906
    %v1908 = vadd.f32 %v1907, 0.18741608
    %v1909 = vmul.f32 %v1900, %v1908
    %v1910 = vadd.f32 %v1909, 1.1283791
    %v1911 = vmul.f32 %v1855, %v1910
    %v1912 = vmul.f32 %v1900, 3.8918573e-05
    %v1913 = vadd.f32 %v1912, 0.001143296
    %v1914 = vmul.f32 %v1900, %v1913
    %v1915 = vadd.f32 %v1914, 0.014752088
    %v1916 = vmul.f32 %v1900, %v1915
    %v1917 = vadd.f32 %v1916, 0.112945676
    %v1918 = vmul.f32 %v1900, %v1917
    %v1919 = vadd.f32 %v1918, 0.4994258
    %v1920 = vmul.f32 %v1900, %v1919
    %v1921 = vadd.f32 %v1920, 1.0
    %v1922 = vrcp.pop %v1921
    %v1923 = vmul.f32 %v1921, %v1922
    %v1924 = vsub.f32 1.0, %v1923
    %v1925 = vmul.f32 %v1922, %v1924
    %v1926 = vadd.f32 %v1922, %v1925
    %vm1927 = vweird.f32 %v1921
    %vm1928 = vweird.f32 %v1922
    %vm1929 = vmor %vm1927, %vm1928
    %v1930 = vsel %vm1929, %v1922, %v1926
    %v1931 = vand.u32 2147483647, %v1921
    %vm1932 = vcmp.eq.f32.partialorder %v1931, 8.507059e+37
    %v1933 = vand.u32 %v1921, 2147483648
    %v1934 = vor.u32 1.1754944e-38, %v1933
    %v1935 = vsel %vm1932, %v1934, %v1930
    %v1936 = vmul.f32 %v1911, %v1935
    %v1937 = vmin.f32 %v1936, 1.0
    %v1938 = vmax.f32 %v1937, -1.0
    %v1939 = vmul.f32 %v1856, %v1856
    %v1940 = vmin.f32 16.0, %v1939
    %v1941 = vmul.f32 %v1940, 2.1237322e-06
    %v1942 = vadd.f32 %v1941, 0.00028619796
    %v1943 = vmul.f32 %v1940, %v1942
    %v1944 = vadd.f32 %v1943, 0.0036580483
    %v1945 = vmul.f32 %v1940, %v1944
    %v1946 = vadd.f32 %v1945, 0.05243302
    %v1947 = vmul.f32 %v1940, %v1946
    %v1948 = vadd.f32 %v1947, 0.18741608
    %v1949 = vmul.f32 %v1940, %v1948
    %v1950 = vadd.f32 %v1949, 1.1283791
    %v1951 = vmul.f32 %v1856, %v1950
    %v1952 = vmul.f32 %v1940, 3.8918573e-05
    %v1953 = vadd.f32 %v1952, 0.001143296
    %v1954 = vmul.f32 %v1940, %v1953
    %v1955 = vadd.f32 %v1954, 0.014752088
    %v1956 = vmul.f32 %v1940, %v1955
    %v1957 = vadd.f32 %v1956, 0.112945676
    %v1958 = vmul.f32 %v1940, %v1957
    %v1959 = vadd.f32 %v1958, 0.4994258
    %v1960 = vmul.f32 %v1940, %v1959
    %v1961 = vadd.f32 %v1960, 1.0
    %v1962 = vrcp.pop %v1961
    %v1963 = vmul.f32 %v1961, %v1962
    %v1964 = vsub.f32 1.0, %v1963
    %v1965 = vmul.f32 %v1962, %v1964
    %v1966 = vadd.f32 %v1962, %v1965
    %vm1967 = vweird.f32 %v1961
    %vm1968 = vweird.f32 %v1962
    %vm1969 = vmor %vm1967, %vm1968
    %v1970 = vsel %vm1969, %v1962, %v1966
    %v1971 = vand.u32 2147483647, %v1961
    %vm1972 = vcmp.eq.f32.partialorder %v1971, 8.507059e+37
    %v1973 = vand.u32 %v1961, 2147483648
    %v1974 = vor.u32 1.1754944e-38, %v1973
    %v1975 = vsel %vm1972, %v1974, %v1970
    %v1976 = vmul.f32 %v1951, %v1975
    %v1977 = vmin.f32 %v1976, 1.0
    %v1978 = vmax.f32 %v1977, -1.0
    %v1979 = vmul.f32 %v1857, %v1857
    %v1980 = vmin.f32 16.0, %v1979
    %v1981 = vmul.f32 %v1980, 2.1237322e-06
    %v1982 = vadd.f32 %v1981, 0.00028619796
    %v1983 = vmul.f32 %v1980, %v1982
    %v1984 = vadd.f32 %v1983, 0.0036580483
    %v1985 = vmul.f32 %v1980, %v1984
    %v1986 = vadd.f32 %v1985, 0.05243302
    %v1987 = vmul.f32 %v1980, %v1986
    %v1988 = vadd.f32 %v1987, 0.18741608
    %v1989 = vmul.f32 %v1980, %v1988
    %v1990 = vadd.f32 %v1989, 1.1283791
    %v1991 = vmul.f32 %v1857, %v1990
    %v1992 = vmul.f32 %v1980, 3.8918573e-05
    %v1993 = vadd.f32 %v1992, 0.001143296
    %v1994 = vmul.f32 %v1980, %v1993
    %v1995 = vadd.f32 %v1994, 0.014752088
    %v1996 = vmul.f32 %v1980, %v1995
    %v1997 = vadd.f32 %v1996, 0.112945676
    %v1998 = vmul.f32 %v1980, %v1997
    %v1999 = vadd.f32 %v1998, 0.4994258
    %v2000 = vmul.f32 %v1980, %v1999
    %v2001 = vadd.f32 %v2000, 1.0
    %v2002 = vrcp.pop %v2001
    %v2003 = vmul.f32 %v2001, %v2002
    %v2004 = vsub.f32 1.0, %v2003
    %v2005 = vmul.f32 %v2002, %v2004
    %v2006 = vadd.f32 %v2002, %v2005
    %vm2007 = vweird.f32 %v2001
    %vm2008 = vweird.f32 %v2002
    %vm2009 = vmor %vm2007, %vm2008
    %v2010 = vsel %vm2009, %v2002, %v2006
    %v2011 = vand.u32 2147483647, %v2001
    %vm2012 = vcmp.eq.f32.partialorder %v2011, 8.507059e+37
    %v2013 = vand.u32 %v2001, 2147483648
    %v2014 = vor.u32 1.1754944e-38, %v2013
    %v2015 = vsel %vm2012, %v2014, %v2010
    %v2016 = vmul.f32 %v1991, %v2015
    %v2017 = vmin.f32 %v2016, 1.0
    %v2018 = vmax.f32 %v2017, -1.0
    %v2019 = vmul.f32 %v1858, %v1858
    %v2020 = vmin.f32 16.0, %v2019
    %v2021 = vmul.f32 %v2020, 2.1237322e-06
    %v2022 = vadd.f32 %v2021, 0.00028619796
    %v2023 = vmul.f32 %v2020, %v2022
    %v2024 = vadd.f32 %v2023, 0.0036580483
    %v2025 = vmul.f32 %v2020, %v2024
    %v2026 = vadd.f32 %v2025, 0.05243302
    %v2027 = vmul.f32 %v2020, %v2026
    %v2028 = vadd.f32 %v2027, 0.18741608
    %v2029 = vmul.f32 %v2020, %v2028
    %v2030 = vadd.f32 %v2029, 1.1283791
    %v2031 = vmul.f32 %v1858, %v2030
    %v2032 = vmul.f32 %v2020, 3.8918573e-05
    %v2033 = vadd.f32 %v2032, 0.001143296
    %v2034 = vmul.f32 %v2020, %v2033
    %v2035 = vadd.f32 %v2034, 0.014752088
    %v2036 = vmul.f32 %v2020, %v2035
    %v2037 = vadd.f32 %v2036, 0.112945676
    %v2038 = vmul.f32 %v2020, %v2037
    %v2039 = vadd.f32 %v2038, 0.4994258
    %v2040 = vmul.f32 %v2020, %v2039
    %v2041 = vadd.f32 %v2040, 1.0
    %v2042 = vrcp.pop %v2041
    %v2043 = vmul.f32 %v2041, %v2042
    %v2044 = vsub.f32 1.0, %v2043
    %v2045 = vmul.f32 %v2042, %v2044
    %v2046 = vadd.f32 %v2042, %v2045
    %vm2047 = vweird.f32 %v2041
    %vm2048 = vweird.f32 %v2042
    %vm2049 = vmor %vm2047, %vm2048
    %v2050 = vsel %vm2049, %v2042, %v2046
    %v2051 = vand.u32 2147483647, %v2041
    %vm2052 = vcmp.eq.f32.partialorder %v2051, 8.507059e+37
    %v2053 = vand.u32 %v2041, 2147483648
    %v2054 = vor.u32 1.1754944e-38, %v2053
    %v2055 = vsel %vm2052, %v2054, %v2050
    %v2056 = vmul.f32 %v2031, %v2055
    %v2057 = vmin.f32 %v2056, 1.0
    %v2058 = vmax.f32 %v2057, -1.0
    %v2059 = vadd.f32 %v1898, 1.0
    %v2060 = vadd.f32 %v1938, 1.0
    %v2061 = vadd.f32 %v1978, 1.0
    %v2062 = vadd.f32 %v2018, 1.0
    %v2063 = vadd.f32 %v2058, 1.0
    %v2064 = vmul.f32 %v1849, %v2059
    %v2065 = vmul.f32 %v1850, %v2060
    %v2066 = vmul.f32 %v1851, %v2061
    %v2067 = vmul.f32 %v1852, %v2062
    %v2068 = vmul.f32 %v1853, %v2063
    %v2070 = vperm.slane %v1672, 0
    %2072 = vmatpush.msra.mxu0 %v1671
    %2073 = vmatpush.msra.mxu0 %v1670
    %2074 = vmatpush.msra.mxu0 %v1669
    %2075 = vmatpush.msra.mxu0 %v1668
    %2076 = vmatpush.msra.mxu0 %v1667
    %2077 = vmatpush.msra.mxu0 %v1666
    %2078 = vmatpush.msra.mxu0 %v1665
    %2079 = vmatpush.msra.mxu0 %v1664
    %2080 = vmatpush.msra.mxu0 %v1663
    %2081 = vmatpush.msra.mxu0 %v1662
    %2082 = vmatpush.msra.mxu0 %v1661
    %2083 = vmatpush.msra.mxu0 %v1660
    %2084 = vmatpush.msra.mxu0 %v1659
    %2085 = vmatpush.msra.mxu0 %v1658
    %2086 = vmatpush.msra.mxu0 %v1657
    %2087 = vmatpush.msra.mxu0 %v1656
    %2088 = vmatmul.f32.gmra.mxu0 %v2064
    %v2089 = vpop.f32.mrf.mxu0
    %v2090 = vadd.f32 %v2070, %v2089
    %2091 = vmatmul.f32.gmra.mxu0 %v2065
    %v2092 = vpop.f32.mrf.mxu0
    %v2093 = vadd.f32 %v2070, %v2092
    %2094 = vmatmul.f32.gmra.mxu0 %v2066
    %v2095 = vpop.f32.mrf.mxu0
    %v2096 = vadd.f32 %v2070, %v2095
    %2097 = vmatmul.f32.gmra.mxu0 %v2067
    %v2098 = vpop.f32.mrf.mxu0
    %v2099 = vadd.f32 %v2070, %v2098
    %2100 = vmatmul.f32.gmra.mxu0 %v2068
    %v2101 = vpop.f32.mrf.mxu0
    %v2102 = vadd.f32 %v2070, %v2101
    %2103 = vdwg.mxu0
    %v2104 = vadd.f32 %v1644, %v2090
    %v2105 = vadd.f32 %v1645, %v2093
    %v2106 = vadd.f32 %v1646, %v2096
    %v2107 = vadd.f32 %v1647, %v2099
    %v2108 = vadd.f32 %v1648, %v2102
    loop: start=1, step=1, limit=11
    $region82: #{alivit_forward.1} parent=1 // loop_pre_header
      _
    $region83: #{alivit_forward.1} parent=1 // loop_header
      %s2110 = sphi 1, %s2114
      %p2111 = scmp.ge.s32.totalorder %s2110, 11
      %v2115 = vphi %v2104, %v4290
      %v2116 = vphi %v2105, %v4291
      %v2117 = vphi %v2106, %v4292
      %v2118 = vphi %v2107, %v4293
      %v2119 = vphi %v2108, %v4294
    $region84: #{alivit_forward.1} parent=1 // loop_header_branch
      %2113 = sbr.rel (%p2111) target = $region88
    $region85: #{alivit_forward.1} parent=1 // loop_body
      %s2120 = scalar_lea.vmem %s4, %s2110
      %v2121 = vld [vmem:[%s2120] sm:$0x1]
      %s2122 = scalar_lea.vmem %s5, %s2110
      %v2123 = vld [vmem:[%s2122] sm:$0x1]
      %s2124 = smul.u32 %s2110, 32
      %s2125 = scalar_lea.vmem %s6, %s2124
      %v2126 = vld [vmem:[%s2125] sm:$0xff]
      %v2127 = vld [vmem:[%s2125 + $0x8] sm:$0xff]
      %v2128 = vld [vmem:[%s2125 + $0x10] sm:$0xff]
      %v2129 = vld [vmem:[%s2125 + $0x18] sm:$0xff]
      %s2130 = scalar_lea.vmem %s7, %s2110
      %v2131 = vld [vmem:[%s2130] sm:$0x1]
      %v2132 = vsel %vm176, %v2115, 0.0
      %2133 = vadd.xlane.f32.xlu0 %v2132
      %v2134 = vpop.xlane.xlu0 %2133
      %v2135 = vsel %vm176, %v2116, 0.0
      %2136 = vadd.xlane.f32.xlu0 %v2135
      %v2137 = vpop.xlane.xlu0 %2136
      %v2138 = vsel %vm176, %v2117, 0.0
      %2139 = vadd.xlane.f32.xlu0 %v2138
      %v2140 = vpop.xlane.xlu0 %2139
      %v2141 = vsel %vm176, %v2118, 0.0
      %2142 = vadd.xlane.f32.xlu0 %v2141
      %v2143 = vpop.xlane.xlu0 %2142
      %v2144 = vsel %vm189, %v2119, 0.0
      %2145 = vadd.xlane.f32.xlu0 %v2144
      %v2146 = vpop.xlane.xlu0 %2145
      %v2147 = vmul.f32 %v2134, %v199
      %v2148 = vmul.f32 %v2137, %v199
      %v2149 = vmul.f32 %v2140, %v199
      %v2150 = vmul.f32 %v2143, %v199
      %v2151 = vmul.f32 %v2146, %v199
      %v2152 = vsub.f32 %v2115, %v2147
      %v2153 = vsub.f32 %v2116, %v2148
      %v2154 = vsub.f32 %v2117, %v2149
      %v2155 = vsub.f32 %v2118, %v2150
      %v2156 = vsub.f32 %v2119, %v2151
      %v2157 = vmul.f32 %v2152, %v2152
      %v2158 = vmul.f32 %v2153, %v2153
      %v2159 = vmul.f32 %v2154, %v2154
      %v2160 = vmul.f32 %v2155, %v2155
      %v2161 = vmul.f32 %v2156, %v2156
      %v2162 = vsel %vm176, %v2157, 0.0
      %2163 = vadd.xlane.f32.xlu0 %v2162
      %v2164 = vpop.xlane.xlu0 %2163
      %v2165 = vsel %vm176, %v2158, 0.0
      %2166 = vadd.xlane.f32.xlu0 %v2165
      %v2167 = vpop.xlane.xlu0 %2166
      %v2168 = vsel %vm176, %v2159, 0.0
      %2169 = vadd.xlane.f32.xlu0 %v2168
      %v2170 = vpop.xlane.xlu0 %2169
      %v2171 = vsel %vm176, %v2160, 0.0
      %2172 = vadd.xlane.f32.xlu0 %v2171
      %v2173 = vpop.xlane.xlu0 %2172
      %v2174 = vsel %vm189, %v2161, 0.0
      %2175 = vadd.xlane.f32.xlu0 %v2174
      %v2176 = vpop.xlane.xlu0 %2175
      %v2177 = vmul.f32 %v2164, %v199
      %v2178 = vmul.f32 %v2167, %v199
      %v2179 = vmul.f32 %v2170, %v199
      %v2180 = vmul.f32 %v2173, %v199
      %v2181 = vmul.f32 %v2176, %v199
      %v2182 = vadd.f32 %v2177, 1e-05
      %v2183 = vadd.f32 %v2178, 1e-05
      %v2184 = vadd.f32 %v2179, 1e-05
      %v2185 = vadd.f32 %v2180, 1e-05
      %v2186 = vadd.f32 %v2181, 1e-05
      %v2187 = vrsqrt.pop %v2182
      %v2188 = vmul.f32 %v2187, %v2182
      %v2189 = vmul.f32 %v2188, %v2187
      %v2190 = vmul.f32 0.5, %v2189
      %v2191 = vsub.f32 1.5, %v2190
      %v2192 = vmul.f32 %v2187, %v2191
      %vm2193 = vweird.f32 %v2182
      %vm2194 = vweird.f32 %v2187
      %vm2195 = vmor %vm2193, %vm2194
      %v2196 = vsel %vm2195, %v2187, %v2192
      %v2197 = vrsqrt.pop %v2183
      %v2198 = vmul.f32 %v2197, %v2183
      %v2199 = vmul.f32 %v2198, %v2197
      %v2200 = vmul.f32 0.5, %v2199
      %v2201 = vsub.f32 1.5, %v2200
      %v2202 = vmul.f32 %v2197, %v2201
      %vm2203 = vweird.f32 %v2183
      %vm2204 = vweird.f32 %v2197
      %vm2205 = vmor %vm2203, %vm2204
      %v2206 = vsel %vm2205, %v2197, %v2202
      %v2207 = vrsqrt.pop %v2184
      %v2208 = vmul.f32 %v2207, %v2184
      %v2209 = vmul.f32 %v2208, %v2207
      %v2210 = vmul.f32 0.5, %v2209
      %v2211 = vsub.f32 1.5, %v2210
      %v2212 = vmul.f32 %v2207, %v2211
      %vm2213 = vweird.f32 %v2184
      %vm2214 = vweird.f32 %v2207
      %vm2215 = vmor %vm2213, %vm2214
      %v2216 = vsel %vm2215, %v2207, %v2212
      %v2217 = vrsqrt.pop %v2185
      %v2218 = vmul.f32 %v2217, %v2185
      %v2219 = vmul.f32 %v2218, %v2217
      %v2220 = vmul.f32 0.5, %v2219
      %v2221 = vsub.f32 1.5, %v2220
      %v2222 = vmul.f32 %v2217, %v2221
      %vm2223 = vweird.f32 %v2185
      %vm2224 = vweird.f32 %v2217
      %vm2225 = vmor %vm2223, %vm2224
      %v2226 = vsel %vm2225, %v2217, %v2222
      %v2227 = vrsqrt.pop %v2186
      %v2228 = vmul.f32 %v2227, %v2186
      %v2229 = vmul.f32 %v2228, %v2227
      %v2230 = vmul.f32 0.5, %v2229
      %v2231 = vsub.f32 1.5, %v2230
      %v2232 = vmul.f32 %v2227, %v2231
      %vm2233 = vweird.f32 %v2186
      %vm2234 = vweird.f32 %v2227
      %vm2235 = vmor %vm2233, %vm2234
      %v2236 = vsel %vm2235, %v2227, %v2232
      %v2237 = vmul.f32 %v2152, %v2196
      %v2238 = vmul.f32 %v2153, %v2206
      %v2239 = vmul.f32 %v2154, %v2216
      %v2240 = vmul.f32 %v2155, %v2226
      %v2241 = vmul.f32 %v2156, %v2236
      %v2243 = vperm.slane %v2121, 0
      %v2245 = vmul.f32 %v2237, %v2243
      %v2246 = vmul.f32 %v2238, %v2243
      %v2247 = vmul.f32 %v2239, %v2243
      %v2248 = vmul.f32 %v2240, %v2243
      %v2249 = vmul.f32 %v2241, %v2243
      %v2251 = vperm.slane %v2123, 0
      %v2253 = vadd.f32 %v2245, %v2251
      %v2254 = vadd.f32 %v2246, %v2251
      %v2255 = vadd.f32 %v2247, %v2251
      %v2256 = vadd.f32 %v2248, %v2251
      %v2257 = vadd.f32 %v2249, %v2251
      %v2259 = vperm.slane %v2131, 0
      %v2262 = vsel %vm176, %v2253, 0
      %v2265 = vsel %vm176, %v2254, 0
      %v2268 = vsel %vm176, %v2255, 0
      %v2271 = vsel %vm176, %v2256, 0
      %v2274 = vsel %vm176, %v2257, 0
      %2276 = vmatpush.msra.mxu0 0.0
      %2277 = vmatpush.msra.mxu0 0.0
      %2278 = vmatpush.msra.mxu0 0.0
      %2279 = vmatpush.msra.mxu0 0.0
      %2280 = vmatpush.msra.mxu0 0.0
      %2281 = vmatpush.msra.mxu0 0.0
      %2282 = vmatpush.msra.mxu0 0.0
      %2283 = vmatpush.msra.mxu0 0.0
      %2284 = vmatpush.msra.mxu0 0.0
      %2285 = vmatpush.msra.mxu0 0.0
      %2286 = vmatpush.msra.mxu0 0.0
      %2287 = vmatpush.msra.mxu0 0.0
      %2288 = vmatpush.msra.mxu0 %v2129
      %2289 = vmatpush.msra.mxu0 %v2128
      %2290 = vmatpush.msra.mxu0 %v2127
      %2291 = vmatpush.msra.mxu0 %v2126
      %2292 = vmatmul.f32.gmra.mxu0 %v2262
      %v2293 = vpop.f32.mrf.mxu0
      %v2294 = vadd.f32 %v2259, %v2293
      %2295 = vmatmul.f32.gmra.mxu0 %v2265
      %v2296 = vpop.f32.mrf.mxu0
      %v2297 = vadd.f32 %v2259, %v2296
      %2298 = vmatmul.f32.gmra.mxu0 %v2268
      %v2299 = vpop.f32.mrf.mxu0
      %v2300 = vadd.f32 %v2259, %v2299
      %2301 = vmatmul.f32.gmra.mxu0 %v2271
      %v2302 = vpop.f32.mrf.mxu0
      %v2303 = vadd.f32 %v2259, %v2302
      %2304 = vmatmul.f32.gmra.mxu0 %v2274
      %v2305 = vpop.f32.mrf.mxu0
      %v2306 = vadd.f32 %v2259, %v2305
      %2307 = vdwg.mxu0
      %2311 = vrot.lane.b32.xlu0 %v2294, 120
      %v2312 = vpop.permute.xlu0 %2311
      %2313 = vrot.lane.b32.xlu0 %v2297, 120
      %v2314 = vpop.permute.xlu0 %2313
      %2315 = vrot.lane.b32.xlu0 %v2300, 120
      %v2316 = vpop.permute.xlu0 %2315
      %2317 = vrot.lane.b32.xlu0 %v2294, 112
      %v2318 = vpop.permute.xlu0 %2317
      %2319 = vrot.lane.b32.xlu0 %v2297, 112
      %v2320 = vpop.permute.xlu0 %2319
      %2321 = vrot.lane.b32.xlu0 %v2300, 112
      %v2322 = vpop.permute.xlu0 %2321
      %2323 = vrot.lane.b32.xlu0 %v2294, 104
      %v2324 = vpop.permute.xlu0 %2323
      %2325 = vrot.lane.b32.xlu0 %v2297, 104
      %v2326 = vpop.permute.xlu0 %2325
      %2327 = vrot.lane.b32.xlu0 %v2300, 104
      %v2328 = vpop.permute.xlu0 %2327
      %v2331 = vrot.slane %v2300, 1
      %v2332 = vrot.slane %v2303, 1
      %v2333 = vsel %vm372, %v2331, %v2332
      %v2334 = vrot.slane %v2306, 1
      %v2335 = vsel %vm372, %v2332, %v2334
      %2336 = vrot.lane.b32.xlu0 %v2333, 120
      %v2337 = vpop.permute.xlu0 %2336
      %2338 = vrot.lane.b32.xlu0 %v2335, 120
      %v2339 = vpop.permute.xlu0 %2338
      %2340 = vrot.lane.b32.xlu0 %v2334, 120
      %v2341 = vpop.permute.xlu0 %2340
      %2342 = vrot.lane.b32.xlu0 %v2333, 112
      %v2343 = vpop.permute.xlu0 %2342
      %2344 = vrot.lane.b32.xlu0 %v2335, 112
      %v2345 = vpop.permute.xlu0 %2344
      %2346 = vrot.lane.b32.xlu0 %v2334, 112
      %v2347 = vpop.permute.xlu0 %2346
      %2348 = vrot.lane.b32.xlu0 %v2333, 104
      %v2349 = vpop.permute.xlu0 %2348
      %2350 = vrot.lane.b32.xlu0 %v2335, 104
      %v2351 = vpop.permute.xlu0 %2350
      %2352 = vrot.lane.b32.xlu0 %v2334, 104
      %v2353 = vpop.permute.xlu0 %2352
      %2354 = vrot.lane.b32.xlu0 %v2294, 96
      %v2355 = vpop.permute.xlu0 %2354
      %2356 = vrot.lane.b32.xlu0 %v2297, 96
      %v2357 = vpop.permute.xlu0 %2356
      %2358 = vrot.lane.b32.xlu0 %v2300, 96
      %v2359 = vpop.permute.xlu0 %2358
      %vm2360 = vcmask 64512
      %v2361 = vsel %vm2360, %v2294, 0
      %v2363 = vsel %vm2360, %v2297, 0
      %v2365 = vsel %vm2360, %v2300, 0
      %v2367 = vsel %vm2360, %v2355, 0
      %v2369 = vsel %vm2360, %v2357, 0
      %v2371 = vsel %vm2360, %v2359, 0
      %2373 = vmatpush.xpose.msra.mxu0 0.0
      %2374 = vmatpush.xpose.msra.mxu0 0.0
      %2375 = vmatpush.xpose.msra.mxu0 0.0
      %2376 = vmatpush.xpose.msra.mxu0 0.0
      %2377 = vmatpush.xpose.msra.mxu0 0.0
      %2378 = vmatpush.xpose.msra.mxu0 0.0
      %2379 = vmatpush.xpose.msra.mxu0 0.0
      %2380 = vmatpush.xpose.msra.mxu0 0.0
      %2381 = vmatpush.xpose.msra.mxu0 0.0
      %2382 = vmatpush.xpose.msra.mxu0 0.0
      %2383 = vmatpush.xpose.msra.mxu0 0.0
      %2384 = vmatpush.xpose.msra.mxu0 0.0
      %2385 = vmatpush.xpose.msra.mxu0 0.0
      %2386 = vmatpush.xpose.msra.mxu0 %v2371
      %2387 = vmatpush.xpose.msra.mxu0 %v2369
      %2388 = vmatpush.xpose.msra.mxu0 %v2367
      %2389 = vmatmul.f32.gmra.mxu0 %v2361
      %v2390 = vpop.f32.mrf.mxu0
      %v2391 = vadd.f32 0.0, %v2390
      %2392 = vmatmul.f32.gmra.mxu0 %v2363
      %v2393 = vpop.f32.mrf.mxu0
      %v2394 = vadd.f32 0.0, %v2393
      %2395 = vmatmul.f32.gmra.mxu0 %v2365
      %v2396 = vpop.f32.mrf.mxu0
      %v2397 = vadd.f32 0.0, %v2396
      %2398 = vdwg.mxu0
      %2399 = vrot.lane.b32.xlu0 %v2312, 96
      %v2400 = vpop.permute.xlu0 %2399
      %2401 = vrot.lane.b32.xlu0 %v2314, 96
      %v2402 = vpop.permute.xlu0 %2401
      %2403 = vrot.lane.b32.xlu0 %v2316, 96
      %v2404 = vpop.permute.xlu0 %2403
      %v2405 = vsel %vm2360, %v2312, 0
      %v2407 = vsel %vm2360, %v2314, 0
      %v2409 = vsel %vm2360, %v2316, 0
      %v2411 = vsel %vm2360, %v2400, 0
      %v2413 = vsel %vm2360, %v2402, 0
      %v2415 = vsel %vm2360, %v2404, 0
      %2417 = vmatpush.xpose.msra.mxu0 0.0
      %2418 = vmatpush.xpose.msra.mxu0 0.0
      %2419 = vmatpush.xpose.msra.mxu0 0.0
      %2420 = vmatpush.xpose.msra.mxu0 0.0
      %2421 = vmatpush.xpose.msra.mxu0 0.0
      %2422 = vmatpush.xpose.msra.mxu0 0.0
      %2423 = vmatpush.xpose.msra.mxu0 0.0
      %2424 = vmatpush.xpose.msra.mxu0 0.0
      %2425 = vmatpush.xpose.msra.mxu0 0.0
      %2426 = vmatpush.xpose.msra.mxu0 0.0
      %2427 = vmatpush.xpose.msra.mxu0 0.0
      %2428 = vmatpush.xpose.msra.mxu0 0.0
      %2429 = vmatpush.xpose.msra.mxu0 0.0
      %2430 = vmatpush.xpose.msra.mxu0 %v2415
      %2431 = vmatpush.xpose.msra.mxu0 %v2413
      %2432 = vmatpush.xpose.msra.mxu0 %v2411
      %2433 = vmatmul.f32.gmra.mxu0 %v2405
      %v2434 = vpop.f32.mrf.mxu0
      %v2435 = vadd.f32 0.0, %v2434
      %2436 = vmatmul.f32.gmra.mxu0 %v2407
      %v2437 = vpop.f32.mrf.mxu0
      %v2438 = vadd.f32 0.0, %v2437
      %2439 = vmatmul.f32.gmra.mxu0 %v2409
      %v2440 = vpop.f32.mrf.mxu0
      %v2441 = vadd.f32 0.0, %v2440
      %2442 = vdwg.mxu0
      %2443 = vrot.lane.b32.xlu0 %v2318, 96
      %v2444 = vpop.permute.xlu0 %2443
      %2445 = vrot.lane.b32.xlu0 %v2320, 96
      %v2446 = vpop.permute.xlu0 %2445
      %2447 = vrot.lane.b32.xlu0 %v2322, 96
      %v2448 = vpop.permute.xlu0 %2447
      %v2449 = vsel %vm2360, %v2318, 0
      %v2451 = vsel %vm2360, %v2320, 0
      %v2453 = vsel %vm2360, %v2322, 0
      %v2455 = vsel %vm2360, %v2444, 0
      %v2457 = vsel %vm2360, %v2446, 0
      %v2459 = vsel %vm2360, %v2448, 0
      %2461 = vmatpush.xpose.msra.mxu0 0.0
      %2462 = vmatpush.xpose.msra.mxu0 0.0
      %2463 = vmatpush.xpose.msra.mxu0 0.0
      %2464 = vmatpush.xpose.msra.mxu0 0.0
      %2465 = vmatpush.xpose.msra.mxu0 0.0
      %2466 = vmatpush.xpose.msra.mxu0 0.0
      %2467 = vmatpush.xpose.msra.mxu0 0.0
      %2468 = vmatpush.xpose.msra.mxu0 0.0
      %2469 = vmatpush.xpose.msra.mxu0 0.0
      %2470 = vmatpush.xpose.msra.mxu0 0.0
      %2471 = vmatpush.xpose.msra.mxu0 0.0
      %2472 = vmatpush.xpose.msra.mxu0 0.0
      %2473 = vmatpush.xpose.msra.mxu0 0.0
      %2474 = vmatpush.xpose.msra.mxu0 %v2459
      %2475 = vmatpush.xpose.msra.mxu0 %v2457
      %2476 = vmatpush.xpose.msra.mxu0 %v2455
      %2477 = vmatmul.f32.gmra.mxu0 %v2449
      %v2478 = vpop.f32.mrf.mxu0
      %v2479 = vadd.f32 0.0, %v2478
      %2480 = vmatmul.f32.gmra.mxu0 %v2451
      %v2481 = vpop.f32.mrf.mxu0
      %v2482 = vadd.f32 0.0, %v2481
      %2483 = vmatmul.f32.gmra.mxu0 %v2453
      %v2484 = vpop.f32.mrf.mxu0
      %v2485 = vadd.f32 0.0, %v2484
      %2486 = vdwg.mxu0
      %2487 = vrot.lane.b32.xlu0 %v2324, 96
      %v2488 = vpop.permute.xlu0 %2487
      %2489 = vrot.lane.b32.xlu0 %v2326, 96
      %v2490 = vpop.permute.xlu0 %2489
      %2491 = vrot.lane.b32.xlu0 %v2328, 96
      %v2492 = vpop.permute.xlu0 %2491
      %v2493 = vsel %vm2360, %v2324, 0
      %v2495 = vsel %vm2360, %v2326, 0
      %v2497 = vsel %vm2360, %v2328, 0
      %v2499 = vsel %vm2360, %v2488, 0
      %v2501 = vsel %vm2360, %v2490, 0
      %v2503 = vsel %vm2360, %v2492, 0
      %2505 = vmatpush.xpose.msra.mxu0 0.0
      %2506 = vmatpush.xpose.msra.mxu0 0.0
      %2507 = vmatpush.xpose.msra.mxu0 0.0
      %2508 = vmatpush.xpose.msra.mxu0 0.0
      %2509 = vmatpush.xpose.msra.mxu0 0.0
      %2510 = vmatpush.xpose.msra.mxu0 0.0
      %2511 = vmatpush.xpose.msra.mxu0 0.0
      %2512 = vmatpush.xpose.msra.mxu0 0.0
      %2513 = vmatpush.xpose.msra.mxu0 0.0
      %2514 = vmatpush.xpose.msra.mxu0 0.0
      %2515 = vmatpush.xpose.msra.mxu0 0.0
      %2516 = vmatpush.xpose.msra.mxu0 0.0
      %2517 = vmatpush.xpose.msra.mxu0 0.0
      %2518 = vmatpush.xpose.msra.mxu0 %v2503
      %2519 = vmatpush.xpose.msra.mxu0 %v2501
      %2520 = vmatpush.xpose.msra.mxu0 %v2499
      %2521 = vmatmul.f32.gmra.mxu0 %v2493
      %v2522 = vpop.f32.mrf.mxu0
      %v2523 = vadd.f32 0.0, %v2522
      %2524 = vmatmul.f32.gmra.mxu0 %v2495
      %v2525 = vpop.f32.mrf.mxu0
      %v2526 = vadd.f32 0.0, %v2525
      %2527 = vmatmul.f32.gmra.mxu0 %v2497
      %v2528 = vpop.f32.mrf.mxu0
      %v2529 = vadd.f32 0.0, %v2528
      %2530 = vdwg.mxu0
      %2531 = vrot.lane.b32.xlu0 %v2333, 96
      %v2532 = vpop.permute.xlu0 %2531
      %2533 = vrot.lane.b32.xlu0 %v2335, 96
      %v2534 = vpop.permute.xlu0 %2533
      %2535 = vrot.lane.b32.xlu0 %v2334, 96
      %v2536 = vpop.permute.xlu0 %2535
      %v2537 = vsel %vm2360, %v2333, 0
      %v2539 = vsel %vm2360, %v2335, 0
      %v2541 = vsel %vm2360, %v2334, 0
      %v2543 = vsel %vm2360, %v2532, 0
      %v2545 = vsel %vm2360, %v2534, 0
      %v2547 = vsel %vm2360, %v2536, 0
      %2549 = vmatpush.xpose.msra.mxu0 0.0
      %2550 = vmatpush.xpose.msra.mxu0 0.0
      %2551 = vmatpush.xpose.msra.mxu0 0.0
      %2552 = vmatpush.xpose.msra.mxu0 0.0
      %2553 = vmatpush.xpose.msra.mxu0 0.0
      %2554 = vmatpush.xpose.msra.mxu0 0.0
      %2555 = vmatpush.xpose.msra.mxu0 0.0
      %2556 = vmatpush.xpose.msra.mxu0 0.0
      %2557 = vmatpush.xpose.msra.mxu0 0.0
      %2558 = vmatpush.xpose.msra.mxu0 0.0
      %2559 = vmatpush.xpose.msra.mxu0 0.0
      %2560 = vmatpush.xpose.msra.mxu0 0.0
      %2561 = vmatpush.xpose.msra.mxu0 0.0
      %2562 = vmatpush.xpose.msra.mxu0 %v2547
      %2563 = vmatpush.xpose.msra.mxu0 %v2545
      %2564 = vmatpush.xpose.msra.mxu0 %v2543
      %2565 = vmatmul.f32.gmra.mxu0 %v2537
      %v2566 = vpop.f32.mrf.mxu0
      %v2567 = vadd.f32 0.0, %v2566
      %2568 = vmatmul.f32.gmra.mxu0 %v2539
      %v2569 = vpop.f32.mrf.mxu0
      %v2570 = vadd.f32 0.0, %v2569
      %2571 = vmatmul.f32.gmra.mxu0 %v2541
      %v2572 = vpop.f32.mrf.mxu0
      %v2573 = vadd.f32 0.0, %v2572
      %2574 = vdwg.mxu0
      %2575 = vrot.lane.b32.xlu0 %v2337, 96
      %v2576 = vpop.permute.xlu0 %2575
      %2577 = vrot.lane.b32.xlu0 %v2339, 96
      %v2578 = vpop.permute.xlu0 %2577
      %2579 = vrot.lane.b32.xlu0 %v2341, 96
      %v2580 = vpop.permute.xlu0 %2579
      %v2581 = vsel %vm2360, %v2337, 0
      %v2583 = vsel %vm2360, %v2339, 0
      %v2585 = vsel %vm2360, %v2341, 0
      %v2587 = vsel %vm2360, %v2576, 0
      %v2589 = vsel %vm2360, %v2578, 0
      %v2591 = vsel %vm2360, %v2580, 0
      %2593 = vmatpush.xpose.msra.mxu0 0.0
      %2594 = vmatpush.xpose.msra.mxu0 0.0
      %2595 = vmatpush.xpose.msra.mxu0 0.0
      %2596 = vmatpush.xpose.msra.mxu0 0.0
      %2597 = vmatpush.xpose.msra.mxu0 0.0
      %2598 = vmatpush.xpose.msra.mxu0 0.0
      %2599 = vmatpush.xpose.msra.mxu0 0.0
      %2600 = vmatpush.xpose.msra.mxu0 0.0
      %2601 = vmatpush.xpose.msra.mxu0 0.0
      %2602 = vmatpush.xpose.msra.mxu0 0.0
      %2603 = vmatpush.xpose.msra.mxu0 0.0
      %2604 = vmatpush.xpose.msra.mxu0 0.0
      %2605 = vmatpush.xpose.msra.mxu0 0.0
      %2606 = vmatpush.xpose.msra.mxu0 %v2591
      %2607 = vmatpush.xpose.msra.mxu0 %v2589
      %2608 = vmatpush.xpose.msra.mxu0 %v2587
      %2609 = vmatmul.f32.gmra.mxu0 %v2581
      %v2610 = vpop.f32.mrf.mxu0
      %v2611 = vadd.f32 0.0, %v2610
      %2612 = vmatmul.f32.gmra.mxu0 %v2583
      %v2613 = vpop.f32.mrf.mxu0
      %v2614 = vadd.f32 0.0, %v2613
      %2615 = vmatmul.f32.gmra.mxu0 %v2585
      %v2616 = vpop.f32.mrf.mxu0
      %v2617 = vadd.f32 0.0, %v2616
      %2618 = vdwg.mxu0
      %2619 = vrot.lane.b32.xlu0 %v2343, 96
      %v2620 = vpop.permute.xlu0 %2619
      %2621 = vrot.lane.b32.xlu0 %v2345, 96
      %v2622 = vpop.permute.xlu0 %2621
      %2623 = vrot.lane.b32.xlu0 %v2347, 96
      %v2624 = vpop.permute.xlu0 %2623
      %v2625 = vsel %vm2360, %v2343, 0
      %v2627 = vsel %vm2360, %v2345, 0
      %v2629 = vsel %vm2360, %v2347, 0
      %v2631 = vsel %vm2360, %v2620, 0
      %v2633 = vsel %vm2360, %v2622, 0
      %v2635 = vsel %vm2360, %v2624, 0
      %2637 = vmatpush.xpose.msra.mxu0 0.0
      %2638 = vmatpush.xpose.msra.mxu0 0.0
      %2639 = vmatpush.xpose.msra.mxu0 0.0
      %2640 = vmatpush.xpose.msra.mxu0 0.0
      %2641 = vmatpush.xpose.msra.mxu0 0.0
      %2642 = vmatpush.xpose.msra.mxu0 0.0
      %2643 = vmatpush.xpose.msra.mxu0 0.0
      %2644 = vmatpush.xpose.msra.mxu0 0.0
      %2645 = vmatpush.xpose.msra.mxu0 0.0
      %2646 = vmatpush.xpose.msra.mxu0 0.0
      %2647 = vmatpush.xpose.msra.mxu0 0.0
      %2648 = vmatpush.xpose.msra.mxu0 0.0
      %2649 = vmatpush.xpose.msra.mxu0 0.0
      %2650 = vmatpush.xpose.msra.mxu0 %v2635
      %2651 = vmatpush.xpose.msra.mxu0 %v2633
      %2652 = vmatpush.xpose.msra.mxu0 %v2631
      %2653 = vmatmul.f32.gmra.mxu0 %v2625
      %v2654 = vpop.f32.mrf.mxu0
      %v2655 = vadd.f32 0.0, %v2654
      %2656 = vmatmul.f32.gmra.mxu0 %v2627
      %v2657 = vpop.f32.mrf.mxu0
      %v2658 = vadd.f32 0.0, %v2657
      %2659 = vmatmul.f32.gmra.mxu0 %v2629
      %v2660 = vpop.f32.mrf.mxu0
      %v2661 = vadd.f32 0.0, %v2660
      %2662 = vdwg.mxu0
      %2663 = vrot.lane.b32.xlu0 %v2349, 96
      %v2664 = vpop.permute.xlu0 %2663
      %2665 = vrot.lane.b32.xlu0 %v2351, 96
      %v2666 = vpop.permute.xlu0 %2665
      %2667 = vrot.lane.b32.xlu0 %v2353, 96
      %v2668 = vpop.permute.xlu0 %2667
      %v2669 = vsel %vm2360, %v2349, 0
      %v2671 = vsel %vm2360, %v2351, 0
      %v2673 = vsel %vm2360, %v2353, 0
      %v2675 = vsel %vm2360, %v2664, 0
      %v2677 = vsel %vm2360, %v2666, 0
      %v2679 = vsel %vm2360, %v2668, 0
      %2681 = vmatpush.xpose.msra.mxu0 0.0
      %2682 = vmatpush.xpose.msra.mxu0 0.0
      %2683 = vmatpush.xpose.msra.mxu0 0.0
      %2684 = vmatpush.xpose.msra.mxu0 0.0
      %2685 = vmatpush.xpose.msra.mxu0 0.0
      %2686 = vmatpush.xpose.msra.mxu0 0.0
      %2687 = vmatpush.xpose.msra.mxu0 0.0
      %2688 = vmatpush.xpose.msra.mxu0 0.0
      %2689 = vmatpush.xpose.msra.mxu0 0.0
      %2690 = vmatpush.xpose.msra.mxu0 0.0
      %2691 = vmatpush.xpose.msra.mxu0 0.0
      %2692 = vmatpush.xpose.msra.mxu0 0.0
      %2693 = vmatpush.xpose.msra.mxu0 0.0
      %2694 = vmatpush.xpose.msra.mxu0 %v2679
      %2695 = vmatpush.xpose.msra.mxu0 %v2677
      %2696 = vmatpush.xpose.msra.mxu0 %v2675
      %2697 = vmatmul.f32.gmra.mxu0 %v2669
      %v2698 = vpop.f32.mrf.mxu0
      %v2699 = vadd.f32 0.0, %v2698
      %2700 = vmatmul.f32.gmra.mxu0 %v2671
      %v2701 = vpop.f32.mrf.mxu0
      %v2702 = vadd.f32 0.0, %v2701
      %2703 = vmatmul.f32.gmra.mxu0 %v2673
      %v2704 = vpop.f32.mrf.mxu0
      %v2705 = vadd.f32 0.0, %v2704
      %2706 = vdwg.mxu0
      %v2707 = vmul.f32 %v2391, 0.35355338
      %v2708 = vmul.f32 %v2394, 0.35355338
      %v2709 = vmul.f32 %v2397, 0.35355338
      %v2710 = vmul.f32 %v2435, 0.35355338
      %v2711 = vmul.f32 %v2438, 0.35355338
      %v2712 = vmul.f32 %v2441, 0.35355338
      %v2713 = vmul.f32 %v2479, 0.35355338
      %v2714 = vmul.f32 %v2482, 0.35355338
      %v2715 = vmul.f32 %v2485, 0.35355338
      %v2716 = vmul.f32 %v2523, 0.35355338
      %v2717 = vmul.f32 %v2526, 0.35355338
      %v2718 = vmul.f32 %v2529, 0.35355338
      %v2719 = vmul.f32 %v2567, 0.35355338
      %v2720 = vmul.f32 %v2570, 0.35355338
      %v2721 = vmul.f32 %v2573, 0.35355338
      %v2722 = vmul.f32 %v2611, 0.35355338
      %v2723 = vmul.f32 %v2614, 0.35355338
      %v2724 = vmul.f32 %v2617, 0.35355338
      %v2725 = vmul.f32 %v2655, 0.35355338
      %v2726 = vmul.f32 %v2658, 0.35355338
      %v2727 = vmul.f32 %v2661, 0.35355338
      %v2728 = vmul.f32 %v2699, 0.35355338
      %v2729 = vmul.f32 %v2702, 0.35355338
      %v2730 = vmul.f32 %v2705, 0.35355338
      %v2731 = vsel %vm573, %v2707, -inf
      %2732 = vmax.xlane.f32.xlu0 %v2731
      %v2733 = vpop.xlane.xlu0 %2732
      %v2734 = vsel %vm573, %v2708, -inf
      %2735 = vmax.xlane.f32.xlu0 %v2734
      %v2736 = vpop.xlane.xlu0 %2735
      %v2737 = vsel %vm580, %v2709, -inf
      %2738 = vmax.xlane.f32.xlu0 %v2737
      %v2739 = vpop.xlane.xlu0 %2738
      %v2740 = vsel %vm573, %v2710, -inf
      %2741 = vmax.xlane.f32.xlu0 %v2740
      %v2742 = vpop.xlane.xlu0 %2741
      %v2743 = vsel %vm573, %v2711, -inf
      %2744 = vmax.xlane.f32.xlu0 %v2743
      %v2745 = vpop.xlane.xlu0 %2744
      %v2746 = vsel %vm580, %v2712, -inf
      %2747 = vmax.xlane.f32.xlu0 %v2746
      %v2748 = vpop.xlane.xlu0 %2747
      %v2749 = vsel %vm573, %v2713, -inf
      %2750 = vmax.xlane.f32.xlu0 %v2749
      %v2751 = vpop.xlane.xlu0 %2750
      %v2752 = vsel %vm573, %v2714, -inf
      %2753 = vmax.xlane.f32.xlu0 %v2752
      %v2754 = vpop.xlane.xlu0 %2753
      %v2755 = vsel %vm580, %v2715, -inf
      %2756 = vmax.xlane.f32.xlu0 %v2755
      %v2757 = vpop.xlane.xlu0 %2756
      %v2758 = vsel %vm573, %v2716, -inf
      %2759 = vmax.xlane.f32.xlu0 %v2758
      %v2760 = vpop.xlane.xlu0 %2759
      %v2761 = vsel %vm573, %v2717, -inf
      %2762 = vmax.xlane.f32.xlu0 %v2761
      %v2763 = vpop.xlane.xlu0 %2762
      %v2764 = vsel %vm580, %v2718, -inf
      %2765 = vmax.xlane.f32.xlu0 %v2764
      %v2766 = vpop.xlane.xlu0 %2765
      %v2767 = vsel %vm573, %v2719, -inf
      %2768 = vmax.xlane.f32.xlu0 %v2767
      %v2769 = vpop.xlane.xlu0 %2768
      %v2770 = vsel %vm573, %v2720, -inf
      %2771 = vmax.xlane.f32.xlu0 %v2770
      %v2772 = vpop.xlane.xlu0 %2771
      %v2773 = vsel %vm580, %v2721, -inf
      %2774 = vmax.xlane.f32.xlu0 %v2773
      %v2775 = vpop.xlane.xlu0 %2774
      %v2776 = vsel %vm573, %v2722, -inf
      %2777 = vmax.xlane.f32.xlu0 %v2776
      %v2778 = vpop.xlane.xlu0 %2777
      %v2779 = vsel %vm573, %v2723, -inf
      %2780 = vmax.xlane.f32.xlu0 %v2779
      %v2781 = vpop.xlane.xlu0 %2780
      %v2782 = vsel %vm580, %v2724, -inf
      %2783 = vmax.xlane.f32.xlu0 %v2782
      %v2784 = vpop.xlane.xlu0 %2783
      %v2785 = vsel %vm573, %v2725, -inf
      %2786 = vmax.xlane.f32.xlu0 %v2785
      %v2787 = vpop.xlane.xlu0 %2786
      %v2788 = vsel %vm573, %v2726, -inf
      %2789 = vmax.xlane.f32.xlu0 %v2788
      %v2790 = vpop.xlane.xlu0 %2789
      %v2791 = vsel %vm580, %v2727, -inf
      %2792 = vmax.xlane.f32.xlu0 %v2791
      %v2793 = vpop.xlane.xlu0 %2792
      %v2794 = vsel %vm573, %v2728, -inf
      %2795 = vmax.xlane.f32.xlu0 %v2794
      %v2796 = vpop.xlane.xlu0 %2795
      %v2797 = vsel %vm573, %v2729, -inf
      %2798 = vmax.xlane.f32.xlu0 %v2797
      %v2799 = vpop.xlane.xlu0 %2798
      %v2800 = vsel %vm580, %v2730, -inf
      %2801 = vmax.xlane.f32.xlu0 %v2800
      %v2802 = vpop.xlane.xlu0 %2801
      %v2803 = vsub.f32 %v2707, %v2733
      %v2804 = vsub.f32 %v2708, %v2736
      %v2805 = vsub.f32 %v2709, %v2739
      %v2806 = vsub.f32 %v2710, %v2742
      %v2807 = vsub.f32 %v2711, %v2745
      %v2808 = vsub.f32 %v2712, %v2748
      %v2809 = vsub.f32 %v2713, %v2751
      %v2810 = vsub.f32 %v2714, %v2754
      %v2811 = vsub.f32 %v2715, %v2757
      %v2812 = vsub.f32 %v2716, %v2760
      %v2813 = vsub.f32 %v2717, %v2763
      %v2814 = vsub.f32 %v2718, %v2766
      %v2815 = vsub.f32 %v2719, %v2769
      %v2816 = vsub.f32 %v2720, %v2772
      %v2817 = vsub.f32 %v2721, %v2775
      %v2818 = vsub.f32 %v2722, %v2778
      %v2819 = vsub.f32 %v2723, %v2781
      %v2820 = vsub.f32 %v2724, %v2784
      %v2821 = vsub.f32 %v2725, %v2787
      %v2822 = vsub.f32 %v2726, %v2790
      %v2823 = vsub.f32 %v2727, %v2793
      %v2824 = vsub.f32 %v2728, %v2796
      %v2825 = vsub.f32 %v2729, %v2799
      %v2826 = vsub.f32 %v2730, %v2802
      %v2827 = vmul.f32 %v2803, 1.442695
      %v2828 = vpow.pop %v2827
      %v2829 = vmul.f32 %v2804, 1.442695
      %v2830 = vpow.pop %v2829
      %v2831 = vmul.f32 %v2805, 1.442695
      %v2832 = vpow.pop %v2831
      %v2833 = vmul.f32 %v2806, 1.442695
      %v2834 = vpow.pop %v2833
      %v2835 = vmul.f32 %v2807, 1.442695
      %v2836 = vpow.pop %v2835
      %v2837 = vmul.f32 %v2808, 1.442695
      %v2838 = vpow.pop %v2837
      %v2839 = vmul.f32 %v2809, 1.442695
      %v2840 = vpow.pop %v2839
      %v2841 = vmul.f32 %v2810, 1.442695
      %v2842 = vpow.pop %v2841
      %v2843 = vmul.f32 %v2811, 1.442695
      %v2844 = vpow.pop %v2843
      %v2845 = vmul.f32 %v2812, 1.442695
      %v2846 = vpow.pop %v2845
      %v2847 = vmul.f32 %v2813, 1.442695
      %v2848 = vpow.pop %v2847
      %v2849 = vmul.f32 %v2814, 1.442695
      %v2850 = vpow.pop %v2849
      %v2851 = vmul.f32 %v2815, 1.442695
      %v2852 = vpow.pop %v2851
      %v2853 = vmul.f32 %v2816, 1.442695
      %v2854 = vpow.pop %v2853
      %v2855 = vmul.f32 %v2817, 1.442695
      %v2856 = vpow.pop %v2855
      %v2857 = vmul.f32 %v2818, 1.442695
      %v2858 = vpow.pop %v2857
      %v2859 = vmul.f32 %v2819, 1.442695
      %v2860 = vpow.pop %v2859
      %v2861 = vmul.f32 %v2820, 1.442695
      %v2862 = vpow.pop %v2861
      %v2863 = vmul.f32 %v2821, 1.442695
      %v2864 = vpow.pop %v2863
      %v2865 = vmul.f32 %v2822, 1.442695
      %v2866 = vpow.pop %v2865
      %v2867 = vmul.f32 %v2823, 1.442695
      %v2868 = vpow.pop %v2867
      %v2869 = vmul.f32 %v2824, 1.442695
      %v2870 = vpow.pop %v2869
      %v2871 = vmul.f32 %v2825, 1.442695
      %v2872 = vpow.pop %v2871
      %v2873 = vmul.f32 %v2826, 1.442695
      %v2874 = vpow.pop %v2873
      %v2875 = vsel %vm573, %v2828, 0.0
      %2876 = vadd.xlane.f32.xlu0 %v2875
      %v2877 = vpop.xlane.xlu0 %2876
      %v2878 = vsel %vm573, %v2830, 0.0
      %2879 = vadd.xlane.f32.xlu0 %v2878
      %v2880 = vpop.xlane.xlu0 %2879
      %v2881 = vsel %vm580, %v2832, 0.0
      %2882 = vadd.xlane.f32.xlu0 %v2881
      %v2883 = vpop.xlane.xlu0 %2882
      %v2884 = vsel %vm573, %v2834, 0.0
      %2885 = vadd.xlane.f32.xlu0 %v2884
      %v2886 = vpop.xlane.xlu0 %2885
      %v2887 = vsel %vm573, %v2836, 0.0
      %2888 = vadd.xlane.f32.xlu0 %v2887
      %v2889 = vpop.xlane.xlu0 %2888
      %v2890 = vsel %vm580, %v2838, 0.0
      %2891 = vadd.xlane.f32.xlu0 %v2890
      %v2892 = vpop.xlane.xlu0 %2891
      %v2893 = vsel %vm573, %v2840, 0.0
      %2894 = vadd.xlane.f32.xlu0 %v2893
      %v2895 = vpop.xlane.xlu0 %2894
      %v2896 = vsel %vm573, %v2842, 0.0
      %2897 = vadd.xlane.f32.xlu0 %v2896
      %v2898 = vpop.xlane.xlu0 %2897
      %v2899 = vsel %vm580, %v2844, 0.0
      %2900 = vadd.xlane.f32.xlu0 %v2899
      %v2901 = vpop.xlane.xlu0 %2900
      %v2902 = vsel %vm573, %v2846, 0.0
      %2903 = vadd.xlane.f32.xlu0 %v2902
      %v2904 = vpop.xlane.xlu0 %2903
      %v2905 = vsel %vm573, %v2848, 0.0
      %2906 = vadd.xlane.f32.xlu0 %v2905
      %v2907 = vpop.xlane.xlu0 %2906
      %v2908 = vsel %vm580, %v2850, 0.0
      %2909 = vadd.xlane.f32.xlu0 %v2908
      %v2910 = vpop.xlane.xlu0 %2909
      %v2911 = vsel %vm573, %v2852, 0.0
      %2912 = vadd.xlane.f32.xlu0 %v2911
      %v2913 = vpop.xlane.xlu0 %2912
      %v2914 = vsel %vm573, %v2854, 0.0
      %2915 = vadd.xlane.f32.xlu0 %v2914
      %v2916 = vpop.xlane.xlu0 %2915
      %v2917 = vsel %vm580, %v2856, 0.0
      %2918 = vadd.xlane.f32.xlu0 %v2917
      %v2919 = vpop.xlane.xlu0 %2918
      %v2920 = vsel %vm573, %v2858, 0.0
      %2921 = vadd.xlane.f32.xlu0 %v2920
      %v2922 = vpop.xlane.xlu0 %2921
      %v2923 = vsel %vm573, %v2860, 0.0
      %2924 = vadd.xlane.f32.xlu0 %v2923
      %v2925 = vpop.xlane.xlu0 %2924
      %v2926 = vsel %vm580, %v2862, 0.0
      %2927 = vadd.xlane.f32.xlu0 %v2926
      %v2928 = vpop.xlane.xlu0 %2927
      %v2929 = vsel %vm573, %v2864, 0.0
      %2930 = vadd.xlane.f32.xlu0 %v2929
      %v2931 = vpop.xlane.xlu0 %2930
      %v2932 = vsel %vm573, %v2866, 0.0
      %2933 = vadd.xlane.f32.xlu0 %v2932
      %v2934 = vpop.xlane.xlu0 %2933
      %v2935 = vsel %vm580, %v2868, 0.0
      %2936 = vadd.xlane.f32.xlu0 %v2935
      %v2937 = vpop.xlane.xlu0 %2936
      %v2938 = vsel %vm573, %v2870, 0.0
      %2939 = vadd.xlane.f32.xlu0 %v2938
      %v2940 = vpop.xlane.xlu0 %2939
      %v2941 = vsel %vm573, %v2872, 0.0
      %2942 = vadd.xlane.f32.xlu0 %v2941
      %v2943 = vpop.xlane.xlu0 %2942
      %v2944 = vsel %vm580, %v2874, 0.0
      %2945 = vadd.xlane.f32.xlu0 %v2944
      %v2946 = vpop.xlane.xlu0 %2945
      %v2947 = vrcp.pop %v2877
      %v2948 = vmul.f32 %v2877, %v2947
      %v2949 = vsub.f32 1.0, %v2948
      %v2950 = vmul.f32 %v2947, %v2949
      %v2951 = vadd.f32 %v2947, %v2950
      %vm2952 = vweird.f32 %v2877
      %vm2953 = vweird.f32 %v2947
      %vm2954 = vmor %vm2952, %vm2953
      %v2955 = vsel %vm2954, %v2947, %v2951
      %v2956 = vand.u32 2147483647, %v2877
      %vm2957 = vcmp.eq.f32.partialorder %v2956, 8.507059e+37
      %v2958 = vand.u32 %v2877, 2147483648
      %v2959 = vor.u32 1.1754944e-38, %v2958
      %v2960 = vsel %vm2957, %v2959, %v2955
      %v2961 = vmul.f32 %v2828, %v2960
      %v2962 = vrcp.pop %v2880
      %v2963 = vmul.f32 %v2880, %v2962
      %v2964 = vsub.f32 1.0, %v2963
      %v2965 = vmul.f32 %v2962, %v2964
      %v2966 = vadd.f32 %v2962, %v2965
      %vm2967 = vweird.f32 %v2880
      %vm2968 = vweird.f32 %v2962
      %vm2969 = vmor %vm2967, %vm2968
      %v2970 = vsel %vm2969, %v2962, %v2966
      %v2971 = vand.u32 2147483647, %v2880
      %vm2972 = vcmp.eq.f32.partialorder %v2971, 8.507059e+37
      %v2973 = vand.u32 %v2880, 2147483648
      %v2974 = vor.u32 1.1754944e-38, %v2973
      %v2975 = vsel %vm2972, %v2974, %v2970
      %v2976 = vmul.f32 %v2830, %v2975
      %v2977 = vrcp.pop %v2883
      %v2978 = vmul.f32 %v2883, %v2977
      %v2979 = vsub.f32 1.0, %v2978
      %v2980 = vmul.f32 %v2977, %v2979
      %v2981 = vadd.f32 %v2977, %v2980
      %vm2982 = vweird.f32 %v2883
      %vm2983 = vweird.f32 %v2977
      %vm2984 = vmor %vm2982, %vm2983
      %v2985 = vsel %vm2984, %v2977, %v2981
      %v2986 = vand.u32 2147483647, %v2883
      %vm2987 = vcmp.eq.f32.partialorder %v2986, 8.507059e+37
      %v2988 = vand.u32 %v2883, 2147483648
      %v2989 = vor.u32 1.1754944e-38, %v2988
      %v2990 = vsel %vm2987, %v2989, %v2985
      %v2991 = vmul.f32 %v2832, %v2990
      %v2992 = vrcp.pop %v2886
      %v2993 = vmul.f32 %v2886, %v2992
      %v2994 = vsub.f32 1.0, %v2993
      %v2995 = vmul.f32 %v2992, %v2994
      %v2996 = vadd.f32 %v2992, %v2995
      %vm2997 = vweird.f32 %v2886
      %vm2998 = vweird.f32 %v2992
      %vm2999 = vmor %vm2997, %vm2998
      %v3000 = vsel %vm2999, %v2992, %v2996
      %v3001 = vand.u32 2147483647, %v2886
      %vm3002 = vcmp.eq.f32.partialorder %v3001, 8.507059e+37
      %v3003 = vand.u32 %v2886, 2147483648
      %v3004 = vor.u32 1.1754944e-38, %v3003
      %v3005 = vsel %vm3002, %v3004, %v3000
      %v3006 = vmul.f32 %v2834, %v3005
      %v3007 = vrcp.pop %v2889
      %v3008 = vmul.f32 %v2889, %v3007
      %v3009 = vsub.f32 1.0, %v3008
      %v3010 = vmul.f32 %v3007, %v3009
      %v3011 = vadd.f32 %v3007, %v3010
      %vm3012 = vweird.f32 %v2889
      %vm3013 = vweird.f32 %v3007
      %vm3014 = vmor %vm3012, %vm3013
      %v3015 = vsel %vm3014, %v3007, %v3011
      %v3016 = vand.u32 2147483647, %v2889
      %vm3017 = vcmp.eq.f32.partialorder %v3016, 8.507059e+37
      %v3018 = vand.u32 %v2889, 2147483648
      %v3019 = vor.u32 1.1754944e-38, %v3018
      %v3020 = vsel %vm3017, %v3019, %v3015
      %v3021 = vmul.f32 %v2836, %v3020
      %v3022 = vrcp.pop %v2892
      %v3023 = vmul.f32 %v2892, %v3022
      %v3024 = vsub.f32 1.0, %v3023
      %v3025 = vmul.f32 %v3022, %v3024
      %v3026 = vadd.f32 %v3022, %v3025
      %vm3027 = vweird.f32 %v2892
      %vm3028 = vweird.f32 %v3022
      %vm3029 = vmor %vm3027, %vm3028
      %v3030 = vsel %vm3029, %v3022, %v3026
      %v3031 = vand.u32 2147483647, %v2892
      %vm3032 = vcmp.eq.f32.partialorder %v3031, 8.507059e+37
      %v3033 = vand.u32 %v2892, 2147483648
      %v3034 = vor.u32 1.1754944e-38, %v3033
      %v3035 = vsel %vm3032, %v3034, %v3030
      %v3036 = vmul.f32 %v2838, %v3035
      %v3037 = vrcp.pop %v2895
      %v3038 = vmul.f32 %v2895, %v3037
      %v3039 = vsub.f32 1.0, %v3038
      %v3040 = vmul.f32 %v3037, %v3039
      %v3041 = vadd.f32 %v3037, %v3040
      %vm3042 = vweird.f32 %v2895
      %vm3043 = vweird.f32 %v3037
      %vm3044 = vmor %vm3042, %vm3043
      %v3045 = vsel %vm3044, %v3037, %v3041
      %v3046 = vand.u32 2147483647, %v2895
      %vm3047 = vcmp.eq.f32.partialorder %v3046, 8.507059e+37
      %v3048 = vand.u32 %v2895, 2147483648
      %v3049 = vor.u32 1.1754944e-38, %v3048
      %v3050 = vsel %vm3047, %v3049, %v3045
      %v3051 = vmul.f32 %v2840, %v3050
      %v3052 = vrcp.pop %v2898
      %v3053 = vmul.f32 %v2898, %v3052
      %v3054 = vsub.f32 1.0, %v3053
      %v3055 = vmul.f32 %v3052, %v3054
      %v3056 = vadd.f32 %v3052, %v3055
      %vm3057 = vweird.f32 %v2898
      %vm3058 = vweird.f32 %v3052
      %vm3059 = vmor %vm3057, %vm3058
      %v3060 = vsel %vm3059, %v3052, %v3056
      %v3061 = vand.u32 2147483647, %v2898
      %vm3062 = vcmp.eq.f32.partialorder %v3061, 8.507059e+37
      %v3063 = vand.u32 %v2898, 2147483648
      %v3064 = vor.u32 1.1754944e-38, %v3063
      %v3065 = vsel %vm3062, %v3064, %v3060
      %v3066 = vmul.f32 %v2842, %v3065
      %v3067 = vrcp.pop %v2901
      %v3068 = vmul.f32 %v2901, %v3067
      %v3069 = vsub.f32 1.0, %v3068
      %v3070 = vmul.f32 %v3067, %v3069
      %v3071 = vadd.f32 %v3067, %v3070
      %vm3072 = vweird.f32 %v2901
      %vm3073 = vweird.f32 %v3067
      %vm3074 = vmor %vm3072, %vm3073
      %v3075 = vsel %vm3074, %v3067, %v3071
      %v3076 = vand.u32 2147483647, %v2901
      %vm3077 = vcmp.eq.f32.partialorder %v3076, 8.507059e+37
      %v3078 = vand.u32 %v2901, 2147483648
      %v3079 = vor.u32 1.1754944e-38, %v3078
      %v3080 = vsel %vm3077, %v3079, %v3075
      %v3081 = vmul.f32 %v2844, %v3080
      %v3082 = vrcp.pop %v2904
      %v3083 = vmul.f32 %v2904, %v3082
      %v3084 = vsub.f32 1.0, %v3083
      %v3085 = vmul.f32 %v3082, %v3084
      %v3086 = vadd.f32 %v3082, %v3085
      %vm3087 = vweird.f32 %v2904
      %vm3088 = vweird.f32 %v3082
      %vm3089 = vmor %vm3087, %vm3088
      %v3090 = vsel %vm3089, %v3082, %v3086
      %v3091 = vand.u32 2147483647, %v2904
      %vm3092 = vcmp.eq.f32.partialorder %v3091, 8.507059e+37
      %v3093 = vand.u32 %v2904, 2147483648
      %v3094 = vor.u32 1.1754944e-38, %v3093
      %v3095 = vsel %vm3092, %v3094, %v3090
      %v3096 = vmul.f32 %v2846, %v3095
      %v3097 = vrcp.pop %v2907
      %v3098 = vmul.f32 %v2907, %v3097
      %v3099 = vsub.f32 1.0, %v3098
      %v3100 = vmul.f32 %v3097, %v3099
      %v3101 = vadd.f32 %v3097, %v3100
      %vm3102 = vweird.f32 %v2907
      %vm3103 = vweird.f32 %v3097
      %vm3104 = vmor %vm3102, %vm3103
      %v3105 = vsel %vm3104, %v3097, %v3101
      %v3106 = vand.u32 2147483647, %v2907
      %vm3107 = vcmp.eq.f32.partialorder %v3106, 8.507059e+37
      %v3108 = vand.u32 %v2907, 2147483648
      %v3109 = vor.u32 1.1754944e-38, %v3108
      %v3110 = vsel %vm3107, %v3109, %v3105
      %v3111 = vmul.f32 %v2848, %v3110
      %v3112 = vrcp.pop %v2910
      %v3113 = vmul.f32 %v2910, %v3112
      %v3114 = vsub.f32 1.0, %v3113
      %v3115 = vmul.f32 %v3112, %v3114
      %v3116 = vadd.f32 %v3112, %v3115
      %vm3117 = vweird.f32 %v2910
      %vm3118 = vweird.f32 %v3112
      %vm3119 = vmor %vm3117, %vm3118
      %v3120 = vsel %vm3119, %v3112, %v3116
      %v3121 = vand.u32 2147483647, %v2910
      %vm3122 = vcmp.eq.f32.partialorder %v3121, 8.507059e+37
      %v3123 = vand.u32 %v2910, 2147483648
      %v3124 = vor.u32 1.1754944e-38, %v3123
      %v3125 = vsel %vm3122, %v3124, %v3120
      %v3126 = vmul.f32 %v2850, %v3125
      %v3127 = vrcp.pop %v2913
      %v3128 = vmul.f32 %v2913, %v3127
      %v3129 = vsub.f32 1.0, %v3128
      %v3130 = vmul.f32 %v3127, %v3129
      %v3131 = vadd.f32 %v3127, %v3130
      %vm3132 = vweird.f32 %v2913
      %vm3133 = vweird.f32 %v3127
      %vm3134 = vmor %vm3132, %vm3133
      %v3135 = vsel %vm3134, %v3127, %v3131
      %v3136 = vand.u32 2147483647, %v2913
      %vm3137 = vcmp.eq.f32.partialorder %v3136, 8.507059e+37
      %v3138 = vand.u32 %v2913, 2147483648
      %v3139 = vor.u32 1.1754944e-38, %v3138
      %v3140 = vsel %vm3137, %v3139, %v3135
      %v3141 = vmul.f32 %v2852, %v3140
      %v3142 = vrcp.pop %v2916
      %v3143 = vmul.f32 %v2916, %v3142
      %v3144 = vsub.f32 1.0, %v3143
      %v3145 = vmul.f32 %v3142, %v3144
      %v3146 = vadd.f32 %v3142, %v3145
      %vm3147 = vweird.f32 %v2916
      %vm3148 = vweird.f32 %v3142
      %vm3149 = vmor %vm3147, %vm3148
      %v3150 = vsel %vm3149, %v3142, %v3146
      %v3151 = vand.u32 2147483647, %v2916
      %vm3152 = vcmp.eq.f32.partialorder %v3151, 8.507059e+37
      %v3153 = vand.u32 %v2916, 2147483648
      %v3154 = vor.u32 1.1754944e-38, %v3153
      %v3155 = vsel %vm3152, %v3154, %v3150
      %v3156 = vmul.f32 %v2854, %v3155
      %v3157 = vrcp.pop %v2919
      %v3158 = vmul.f32 %v2919, %v3157
      %v3159 = vsub.f32 1.0, %v3158
      %v3160 = vmul.f32 %v3157, %v3159
      %v3161 = vadd.f32 %v3157, %v3160
      %vm3162 = vweird.f32 %v2919
      %vm3163 = vweird.f32 %v3157
      %vm3164 = vmor %vm3162, %vm3163
      %v3165 = vsel %vm3164, %v3157, %v3161
      %v3166 = vand.u32 2147483647, %v2919
      %vm3167 = vcmp.eq.f32.partialorder %v3166, 8.507059e+37
      %v3168 = vand.u32 %v2919, 2147483648
      %v3169 = vor.u32 1.1754944e-38, %v3168
      %v3170 = vsel %vm3167, %v3169, %v3165
      %v3171 = vmul.f32 %v2856, %v3170
      %v3172 = vrcp.pop %v2922
      %v3173 = vmul.f32 %v2922, %v3172
      %v3174 = vsub.f32 1.0, %v3173
      %v3175 = vmul.f32 %v3172, %v3174
      %v3176 = vadd.f32 %v3172, %v3175
      %vm3177 = vweird.f32 %v2922
      %vm3178 = vweird.f32 %v3172
      %vm3179 = vmor %vm3177, %vm3178
      %v3180 = vsel %vm3179, %v3172, %v3176
      %v3181 = vand.u32 2147483647, %v2922
      %vm3182 = vcmp.eq.f32.partialorder %v3181, 8.507059e+37
      %v3183 = vand.u32 %v2922, 2147483648
      %v3184 = vor.u32 1.1754944e-38, %v3183
      %v3185 = vsel %vm3182, %v3184, %v3180
      %v3186 = vmul.f32 %v2858, %v3185
      %v3187 = vrcp.pop %v2925
      %v3188 = vmul.f32 %v2925, %v3187
      %v3189 = vsub.f32 1.0, %v3188
      %v3190 = vmul.f32 %v3187, %v3189
      %v3191 = vadd.f32 %v3187, %v3190
      %vm3192 = vweird.f32 %v2925
      %vm3193 = vweird.f32 %v3187
      %vm3194 = vmor %vm3192, %vm3193
      %v3195 = vsel %vm3194, %v3187, %v3191
      %v3196 = vand.u32 2147483647, %v2925
      %vm3197 = vcmp.eq.f32.partialorder %v3196, 8.507059e+37
      %v3198 = vand.u32 %v2925, 2147483648
      %v3199 = vor.u32 1.1754944e-38, %v3198
      %v3200 = vsel %vm3197, %v3199, %v3195
      %v3201 = vmul.f32 %v2860, %v3200
      %v3202 = vrcp.pop %v2928
      %v3203 = vmul.f32 %v2928, %v3202
      %v3204 = vsub.f32 1.0, %v3203
      %v3205 = vmul.f32 %v3202, %v3204
      %v3206 = vadd.f32 %v3202, %v3205
      %vm3207 = vweird.f32 %v2928
      %vm3208 = vweird.f32 %v3202
      %vm3209 = vmor %vm3207, %vm3208
      %v3210 = vsel %vm3209, %v3202, %v3206
      %v3211 = vand.u32 2147483647, %v2928
      %vm3212 = vcmp.eq.f32.partialorder %v3211, 8.507059e+37
      %v3213 = vand.u32 %v2928, 2147483648
      %v3214 = vor.u32 1.1754944e-38, %v3213
      %v3215 = vsel %vm3212, %v3214, %v3210
      %v3216 = vmul.f32 %v2862, %v3215
      %v3217 = vrcp.pop %v2931
      %v3218 = vmul.f32 %v2931, %v3217
      %v3219 = vsub.f32 1.0, %v3218
      %v3220 = vmul.f32 %v3217, %v3219
      %v3221 = vadd.f32 %v3217, %v3220
      %vm3222 = vweird.f32 %v2931
      %vm3223 = vweird.f32 %v3217
      %vm3224 = vmor %vm3222, %vm3223
      %v3225 = vsel %vm3224, %v3217, %v3221
      %v3226 = vand.u32 2147483647, %v2931
      %vm3227 = vcmp.eq.f32.partialorder %v3226, 8.507059e+37
      %v3228 = vand.u32 %v2931, 2147483648
      %v3229 = vor.u32 1.1754944e-38, %v3228
      %v3230 = vsel %vm3227, %v3229, %v3225
      %v3231 = vmul.f32 %v2864, %v3230
      %v3232 = vrcp.pop %v2934
      %v3233 = vmul.f32 %v2934, %v3232
      %v3234 = vsub.f32 1.0, %v3233
      %v3235 = vmul.f32 %v3232, %v3234
      %v3236 = vadd.f32 %v3232, %v3235
      %vm3237 = vweird.f32 %v2934
      %vm3238 = vweird.f32 %v3232
      %vm3239 = vmor %vm3237, %vm3238
      %v3240 = vsel %vm3239, %v3232, %v3236
      %v3241 = vand.u32 2147483647, %v2934
      %vm3242 = vcmp.eq.f32.partialorder %v3241, 8.507059e+37
      %v3243 = vand.u32 %v2934, 2147483648
      %v3244 = vor.u32 1.1754944e-38, %v3243
      %v3245 = vsel %vm3242, %v3244, %v3240
      %v3246 = vmul.f32 %v2866, %v3245
      %v3247 = vrcp.pop %v2937
      %v3248 = vmul.f32 %v2937, %v3247
      %v3249 = vsub.f32 1.0, %v3248
      %v3250 = vmul.f32 %v3247, %v3249
      %v3251 = vadd.f32 %v3247, %v3250
      %vm3252 = vweird.f32 %v2937
      %vm3253 = vweird.f32 %v3247
      %vm3254 = vmor %vm3252, %vm3253
      %v3255 = vsel %vm3254, %v3247, %v3251
      %v3256 = vand.u32 2147483647, %v2937
      %vm3257 = vcmp.eq.f32.partialorder %v3256, 8.507059e+37
      %v3258 = vand.u32 %v2937, 2147483648
      %v3259 = vor.u32 1.1754944e-38, %v3258
      %v3260 = vsel %vm3257, %v3259, %v3255
      %v3261 = vmul.f32 %v2868, %v3260
      %v3262 = vrcp.pop %v2940
      %v3263 = vmul.f32 %v2940, %v3262
      %v3264 = vsub.f32 1.0, %v3263
      %v3265 = vmul.f32 %v3262, %v3264
      %v3266 = vadd.f32 %v3262, %v3265
      %vm3267 = vweird.f32 %v2940
      %vm3268 = vweird.f32 %v3262
      %vm3269 = vmor %vm3267, %vm3268
      %v3270 = vsel %vm3269, %v3262, %v3266
      %v3271 = vand.u32 2147483647, %v2940
      %vm3272 = vcmp.eq.f32.partialorder %v3271, 8.507059e+37
      %v3273 = vand.u32 %v2940, 2147483648
      %v3274 = vor.u32 1.1754944e-38, %v3273
      %v3275 = vsel %vm3272, %v3274, %v3270
      %v3276 = vmul.f32 %v2870, %v3275
      %v3277 = vrcp.pop %v2943
      %v3278 = vmul.f32 %v2943, %v3277
      %v3279 = vsub.f32 1.0, %v3278
      %v3280 = vmul.f32 %v3277, %v3279
      %v3281 = vadd.f32 %v3277, %v3280
      %vm3282 = vweird.f32 %v2943
      %vm3283 = vweird.f32 %v3277
      %vm3284 = vmor %vm3282, %vm3283
      %v3285 = vsel %vm3284, %v3277, %v3281
      %v3286 = vand.u32 2147483647, %v2943
      %vm3287 = vcmp.eq.f32.partialorder %v3286, 8.507059e+37
      %v3288 = vand.u32 %v2943, 2147483648
      %v3289 = vor.u32 1.1754944e-38, %v3288
      %v3290 = vsel %vm3287, %v3289, %v3285
      %v3291 = vmul.f32 %v2872, %v3290
      %v3292 = vrcp.pop %v2946
      %v3293 = vmul.f32 %v2946, %v3292
      %v3294 = vsub.f32 1.0, %v3293
      %v3295 = vmul.f32 %v3292, %v3294
      %v3296 = vadd.f32 %v3292, %v3295
      %vm3297 = vweird.f32 %v2946
      %vm3298 = vweird.f32 %v3292
      %vm3299 = vmor %vm3297, %vm3298
      %v3300 = vsel %vm3299, %v3292, %v3296
      %v3301 = vand.u32 2147483647, %v2946
      %vm3302 = vcmp.eq.f32.partialorder %v3301, 8.507059e+37
      %v3303 = vand.u32 %v2946, 2147483648
      %v3304 = vor.u32 1.1754944e-38, %v3303
      %v3305 = vsel %vm3302, %v3304, %v3300
      %v3306 = vmul.f32 %v2874, %v3305
      %3307 = vrot.lane.b32.xlu0 %v2294, 64
      %v3308 = vpop.permute.xlu0 %3307
      %3309 = vrot.lane.b32.xlu0 %v2297, 64
      %v3310 = vpop.permute.xlu0 %3309
      %3311 = vrot.lane.b32.xlu0 %v2300, 64
      %v3312 = vpop.permute.xlu0 %3311
      %v3316 = vsel %vm573, %v2961, 0
      %v3319 = vsel %vm573, %v2976, 0
      %v3322 = vsel %vm573, %v2991, 0
      %v3324 = vsel %vm130, %v3312, 0
      %3326 = vmatpush.msra.mxu0 0.0
      %3327 = vmatpush.msra.mxu0 0.0
      %3328 = vmatpush.msra.mxu0 0.0
      %3329 = vmatpush.msra.mxu0 0.0
      %3330 = vmatpush.msra.mxu0 0.0
      %3331 = vmatpush.msra.mxu0 0.0
      %3332 = vmatpush.msra.mxu0 0.0
      %3333 = vmatpush.msra.mxu0 0.0
      %3334 = vmatpush.msra.mxu0 0.0
      %3335 = vmatpush.msra.mxu0 0.0
      %3336 = vmatpush.msra.mxu0 0.0
      %3337 = vmatpush.msra.mxu0 0.0
      %3338 = vmatpush.msra.mxu0 0.0
      %3339 = vmatpush.msra.mxu0 %v3324
      %3340 = vmatpush.msra.mxu0 %v3310
      %3341 = vmatpush.msra.mxu0 %v3308
      %3342 = vmatmul.f32.gmra.mxu0 %v3316
      %v3343 = vpop.f32.mrf.mxu0
      %v3344 = vadd.f32 0.0, %v3343
      %3345 = vmatmul.f32.gmra.mxu0 %v3319
      %v3346 = vpop.f32.mrf.mxu0
      %v3347 = vadd.f32 0.0, %v3346
      %3348 = vmatmul.f32.gmra.mxu0 %v3322
      %v3349 = vpop.f32.mrf.mxu0
      %v3350 = vadd.f32 0.0, %v3349
      %3351 = vdwg.mxu0
      %3352 = vrot.lane.b32.xlu0 %v2312, 64
      %v3353 = vpop.permute.xlu0 %3352
      %3354 = vrot.lane.b32.xlu0 %v2314, 64
      %v3355 = vpop.permute.xlu0 %3354
      %3356 = vrot.lane.b32.xlu0 %v2316, 64
      %v3357 = vpop.permute.xlu0 %3356
      %v3361 = vsel %vm573, %v3006, 0
      %v3364 = vsel %vm573, %v3021, 0
      %v3367 = vsel %vm573, %v3036, 0
      %v3369 = vsel %vm130, %v3357, 0
      %3371 = vmatpush.msra.mxu0 0.0
      %3372 = vmatpush.msra.mxu0 0.0
      %3373 = vmatpush.msra.mxu0 0.0
      %3374 = vmatpush.msra.mxu0 0.0
      %3375 = vmatpush.msra.mxu0 0.0
      %3376 = vmatpush.msra.mxu0 0.0
      %3377 = vmatpush.msra.mxu0 0.0
      %3378 = vmatpush.msra.mxu0 0.0
      %3379 = vmatpush.msra.mxu0 0.0
      %3380 = vmatpush.msra.mxu0 0.0
      %3381 = vmatpush.msra.mxu0 0.0
      %3382 = vmatpush.msra.mxu0 0.0
      %3383 = vmatpush.msra.mxu0 0.0
      %3384 = vmatpush.msra.mxu0 %v3369
      %3385 = vmatpush.msra.mxu0 %v3355
      %3386 = vmatpush.msra.mxu0 %v3353
      %3387 = vmatmul.f32.gmra.mxu0 %v3361
      %v3388 = vpop.f32.mrf.mxu0
      %v3389 = vadd.f32 0.0, %v3388
      %3390 = vmatmul.f32.gmra.mxu0 %v3364
      %v3391 = vpop.f32.mrf.mxu0
      %v3392 = vadd.f32 0.0, %v3391
      %3393 = vmatmul.f32.gmra.mxu0 %v3367
      %v3394 = vpop.f32.mrf.mxu0
      %v3395 = vadd.f32 0.0, %v3394
      %3396 = vdwg.mxu0
      %3397 = vrot.lane.b32.xlu0 %v2318, 64
      %v3398 = vpop.permute.xlu0 %3397
      %3399 = vrot.lane.b32.xlu0 %v2320, 64
      %v3400 = vpop.permute.xlu0 %3399
      %3401 = vrot.lane.b32.xlu0 %v2322, 64
      %v3402 = vpop.permute.xlu0 %3401
      %v3406 = vsel %vm573, %v3051, 0
      %v3409 = vsel %vm573, %v3066, 0
      %v3412 = vsel %vm573, %v3081, 0
      %v3414 = vsel %vm130, %v3402, 0
      %3416 = vmatpush.msra.mxu0 0.0
      %3417 = vmatpush.msra.mxu0 0.0
      %3418 = vmatpush.msra.mxu0 0.0
      %3419 = vmatpush.msra.mxu0 0.0
      %3420 = vmatpush.msra.mxu0 0.0
      %3421 = vmatpush.msra.mxu0 0.0
      %3422 = vmatpush.msra.mxu0 0.0
      %3423 = vmatpush.msra.mxu0 0.0
      %3424 = vmatpush.msra.mxu0 0.0
      %3425 = vmatpush.msra.mxu0 0.0
      %3426 = vmatpush.msra.mxu0 0.0
      %3427 = vmatpush.msra.mxu0 0.0
      %3428 = vmatpush.msra.mxu0 0.0
      %3429 = vmatpush.msra.mxu0 %v3414
      %3430 = vmatpush.msra.mxu0 %v3400
      %3431 = vmatpush.msra.mxu0 %v3398
      %3432 = vmatmul.f32.gmra.mxu0 %v3406
      %v3433 = vpop.f32.mrf.mxu0
      %v3434 = vadd.f32 0.0, %v3433
      %3435 = vmatmul.f32.gmra.mxu0 %v3409
      %v3436 = vpop.f32.mrf.mxu0
      %v3437 = vadd.f32 0.0, %v3436
      %3438 = vmatmul.f32.gmra.mxu0 %v3412
      %v3439 = vpop.f32.mrf.mxu0
      %v3440 = vadd.f32 0.0, %v3439
      %3441 = vdwg.mxu0
      %3442 = vrot.lane.b32.xlu0 %v2324, 64
      %v3443 = vpop.permute.xlu0 %3442
      %3444 = vrot.lane.b32.xlu0 %v2326, 64
      %v3445 = vpop.permute.xlu0 %3444
      %3446 = vrot.lane.b32.xlu0 %v2328, 64
      %v3447 = vpop.permute.xlu0 %3446
      %v3451 = vsel %vm573, %v3096, 0
      %v3454 = vsel %vm573, %v3111, 0
      %v3457 = vsel %vm573, %v3126, 0
      %v3459 = vsel %vm130, %v3447, 0
      %3461 = vmatpush.msra.mxu0 0.0
      %3462 = vmatpush.msra.mxu0 0.0
      %3463 = vmatpush.msra.mxu0 0.0
      %3464 = vmatpush.msra.mxu0 0.0
      %3465 = vmatpush.msra.mxu0 0.0
      %3466 = vmatpush.msra.mxu0 0.0
      %3467 = vmatpush.msra.mxu0 0.0
      %3468 = vmatpush.msra.mxu0 0.0
      %3469 = vmatpush.msra.mxu0 0.0
      %3470 = vmatpush.msra.mxu0 0.0
      %3471 = vmatpush.msra.mxu0 0.0
      %3472 = vmatpush.msra.mxu0 0.0
      %3473 = vmatpush.msra.mxu0 0.0
      %3474 = vmatpush.msra.mxu0 %v3459
      %3475 = vmatpush.msra.mxu0 %v3445
      %3476 = vmatpush.msra.mxu0 %v3443
      %3477 = vmatmul.f32.gmra.mxu0 %v3451
      %v3478 = vpop.f32.mrf.mxu0
      %v3479 = vadd.f32 0.0, %v3478
      %3480 = vmatmul.f32.gmra.mxu0 %v3454
      %v3481 = vpop.f32.mrf.mxu0
      %v3482 = vadd.f32 0.0, %v3481
      %3483 = vmatmul.f32.gmra.mxu0 %v3457
      %v3484 = vpop.f32.mrf.mxu0
      %v3485 = vadd.f32 0.0, %v3484
      %3486 = vdwg.mxu0
      %3487 = vrot.lane.b32.xlu0 %v2333, 64
      %v3488 = vpop.permute.xlu0 %3487
      %3489 = vrot.lane.b32.xlu0 %v2335, 64
      %v3490 = vpop.permute.xlu0 %3489
      %3491 = vrot.lane.b32.xlu0 %v2334, 64
      %v3492 = vpop.permute.xlu0 %3491
      %v3496 = vsel %vm573, %v3141, 0
      %v3499 = vsel %vm573, %v3156, 0
      %v3502 = vsel %vm573, %v3171, 0
      %v3504 = vsel %vm130, %v3492, 0
      %3506 = vmatpush.msra.mxu0 0.0
      %3507 = vmatpush.msra.mxu0 0.0
      %3508 = vmatpush.msra.mxu0 0.0
      %3509 = vmatpush.msra.mxu0 0.0
      %3510 = vmatpush.msra.mxu0 0.0
      %3511 = vmatpush.msra.mxu0 0.0
      %3512 = vmatpush.msra.mxu0 0.0
      %3513 = vmatpush.msra.mxu0 0.0
      %3514 = vmatpush.msra.mxu0 0.0
      %3515 = vmatpush.msra.mxu0 0.0
      %3516 = vmatpush.msra.mxu0 0.0
      %3517 = vmatpush.msra.mxu0 0.0
      %3518 = vmatpush.msra.mxu0 0.0
      %3519 = vmatpush.msra.mxu0 %v3504
      %3520 = vmatpush.msra.mxu0 %v3490
      %3521 = vmatpush.msra.mxu0 %v3488
      %3522 = vmatmul.f32.gmra.mxu0 %v3496
      %v3523 = vpop.f32.mrf.mxu0
      %v3524 = vadd.f32 0.0, %v3523
      %3525 = vmatmul.f32.gmra.mxu0 %v3499
      %v3526 = vpop.f32.mrf.mxu0
      %v3527 = vadd.f32 0.0, %v3526
      %3528 = vmatmul.f32.gmra.mxu0 %v3502
      %v3529 = vpop.f32.mrf.mxu0
      %v3530 = vadd.f32 0.0, %v3529
      %3531 = vdwg.mxu0
      %3532 = vrot.lane.b32.xlu0 %v2337, 64
      %v3533 = vpop.permute.xlu0 %3532
      %3534 = vrot.lane.b32.xlu0 %v2339, 64
      %v3535 = vpop.permute.xlu0 %3534
      %3536 = vrot.lane.b32.xlu0 %v2341, 64
      %v3537 = vpop.permute.xlu0 %3536
      %v3541 = vsel %vm573, %v3186, 0
      %v3544 = vsel %vm573, %v3201, 0
      %v3547 = vsel %vm573, %v3216, 0
      %v3549 = vsel %vm130, %v3537, 0
      %3551 = vmatpush.msra.mxu0 0.0
      %3552 = vmatpush.msra.mxu0 0.0
      %3553 = vmatpush.msra.mxu0 0.0
      %3554 = vmatpush.msra.mxu0 0.0
      %3555 = vmatpush.msra.mxu0 0.0
      %3556 = vmatpush.msra.mxu0 0.0
      %3557 = vmatpush.msra.mxu0 0.0
      %3558 = vmatpush.msra.mxu0 0.0
      %3559 = vmatpush.msra.mxu0 0.0
      %3560 = vmatpush.msra.mxu0 0.0
      %3561 = vmatpush.msra.mxu0 0.0
      %3562 = vmatpush.msra.mxu0 0.0
      %3563 = vmatpush.msra.mxu0 0.0
      %3564 = vmatpush.msra.mxu0 %v3549
      %3565 = vmatpush.msra.mxu0 %v3535
      %3566 = vmatpush.msra.mxu0 %v3533
      %3567 = vmatmul.f32.gmra.mxu0 %v3541
      %v3568 = vpop.f32.mrf.mxu0
      %v3569 = vadd.f32 0.0, %v3568
      %3570 = vmatmul.f32.gmra.mxu0 %v3544
      %v3571 = vpop.f32.mrf.mxu0
      %v3572 = vadd.f32 0.0, %v3571
      %3573 = vmatmul.f32.gmra.mxu0 %v3547
      %v3574 = vpop.f32.mrf.mxu0
      %v3575 = vadd.f32 0.0, %v3574
      %3576 = vdwg.mxu0
      %3577 = vrot.lane.b32.xlu0 %v2343, 64
      %v3578 = vpop.permute.xlu0 %3577
      %3579 = vrot.lane.b32.xlu0 %v2345, 64
      %v3580 = vpop.permute.xlu0 %3579
      %3581 = vrot.lane.b32.xlu0 %v2347, 64
      %v3582 = vpop.permute.xlu0 %3581
      %v3586 = vsel %vm573, %v3231, 0
      %v3589 = vsel %vm573, %v3246, 0
      %v3592 = vsel %vm573, %v3261, 0
      %v3594 = vsel %vm130, %v3582, 0
      %3596 = vmatpush.msra.mxu0 0.0
      %3597 = vmatpush.msra.mxu0 0.0
      %3598 = vmatpush.msra.mxu0 0.0
      %3599 = vmatpush.msra.mxu0 0.0
      %3600 = vmatpush.msra.mxu0 0.0
      %3601 = vmatpush.msra.mxu0 0.0
      %3602 = vmatpush.msra.mxu0 0.0
      %3603 = vmatpush.msra.mxu0 0.0
      %3604 = vmatpush.msra.mxu0 0.0
      %3605 = vmatpush.msra.mxu0 0.0
      %3606 = vmatpush.msra.mxu0 0.0
      %3607 = vmatpush.msra.mxu0 0.0
      %3608 = vmatpush.msra.mxu0 0.0
      %3609 = vmatpush.msra.mxu0 %v3594
      %3610 = vmatpush.msra.mxu0 %v3580
      %3611 = vmatpush.msra.mxu0 %v3578
      %3612 = vmatmul.f32.gmra.mxu0 %v3586
      %v3613 = vpop.f32.mrf.mxu0
      %v3614 = vadd.f32 0.0, %v3613
      %3615 = vmatmul.f32.gmra.mxu0 %v3589
      %v3616 = vpop.f32.mrf.mxu0
      %v3617 = vadd.f32 0.0, %v3616
      %3618 = vmatmul.f32.gmra.mxu0 %v3592
      %v3619 = vpop.f32.mrf.mxu0
      %v3620 = vadd.f32 0.0, %v3619
      %3621 = vdwg.mxu0
      %3622 = vrot.lane.b32.xlu0 %v2349, 64
      %v3623 = vpop.permute.xlu0 %3622
      %3624 = vrot.lane.b32.xlu0 %v2351, 64
      %v3625 = vpop.permute.xlu0 %3624
      %3626 = vrot.lane.b32.xlu0 %v2353, 64
      %v3627 = vpop.permute.xlu0 %3626
      %v3631 = vsel %vm573, %v3276, 0
      %v3634 = vsel %vm573, %v3291, 0
      %v3637 = vsel %vm573, %v3306, 0
      %v3639 = vsel %vm130, %v3627, 0
      %3641 = vmatpush.msra.mxu0 0.0
      %3642 = vmatpush.msra.mxu0 0.0
      %3643 = vmatpush.msra.mxu0 0.0
      %3644 = vmatpush.msra.mxu0 0.0
      %3645 = vmatpush.msra.mxu0 0.0
      %3646 = vmatpush.msra.mxu0 0.0
      %3647 = vmatpush.msra.mxu0 0.0
      %3648 = vmatpush.msra.mxu0 0.0
      %3649 = vmatpush.msra.mxu0 0.0
      %3650 = vmatpush.msra.mxu0 0.0
      %3651 = vmatpush.msra.mxu0 0.0
      %3652 = vmatpush.msra.mxu0 0.0
      %3653 = vmatpush.msra.mxu0 0.0
      %3654 = vmatpush.msra.mxu0 %v3639
      %3655 = vmatpush.msra.mxu0 %v3625
      %3656 = vmatpush.msra.mxu0 %v3623
      %3657 = vmatmul.f32.gmra.mxu0 %v3631
      %v3658 = vpop.f32.mrf.mxu0
      %v3659 = vadd.f32 0.0, %v3658
      %3660 = vmatmul.f32.gmra.mxu0 %v3634
      %v3661 = vpop.f32.mrf.mxu0
      %v3662 = vadd.f32 0.0, %v3661
      %3663 = vmatmul.f32.gmra.mxu0 %v3637
      %v3664 = vpop.f32.mrf.mxu0
      %v3665 = vadd.f32 0.0, %v3664
      %3666 = vdwg.mxu0
      %s3667 = scalar_lea.vmem %s8, %s2124
      %v3668 = vld [vmem:[%s3667] sm:$0xff]
      %v3669 = vld [vmem:[%s3667 + $0x8] sm:$0xff]
      %v3670 = vld [vmem:[%s3667 + $0x10] sm:$0xff]
      %v3671 = vld [vmem:[%s3667 + $0x18] sm:$0xff]
      %s3672 = scalar_lea.vmem %s9, %s2110
      %v3673 = vld [vmem:[%s3672] sm:$0x1]
      %3677 = vrot.lane.b32.xlu0 %v3389, 8
      %v3678 = vpop.permute.xlu0 %3677
      %3679 = vrot.lane.b32.xlu0 %v3392, 8
      %v3680 = vpop.permute.xlu0 %3679
      %3681 = vrot.lane.b32.xlu0 %v3395, 8
      %v3682 = vpop.permute.xlu0 %3681
      %3689 = vrot.lane.b32.xlu0 %v3434, 16
      %v3690 = vpop.permute.xlu0 %3689
      %3691 = vrot.lane.b32.xlu0 %v3437, 16
      %v3692 = vpop.permute.xlu0 %3691
      %3693 = vrot.lane.b32.xlu0 %v3440, 16
      %v3694 = vpop.permute.xlu0 %3693
      %3701 = vrot.lane.b32.xlu0 %v3479, 24
      %v3702 = vpop.permute.xlu0 %3701
      %3703 = vrot.lane.b32.xlu0 %v3482, 24
      %v3704 = vpop.permute.xlu0 %3703
      %3705 = vrot.lane.b32.xlu0 %v3485, 24
      %v3706 = vpop.permute.xlu0 %3705
      %v3710 = vsel %vm2360, %v3344, %v3678
      %v3711 = vsel %vm2360, %v3347, %v3680
      %v3712 = vsel %vm2360, %v3350, %v3682
      %v3713 = vsel %vm390, %v3710, %v3690
      %v3714 = vsel %vm390, %v3711, %v3692
      %v3715 = vsel %vm390, %v3712, %v3694
      %vm3716 = vcmask 195584
      %v3717 = vsel %vm3716, %v3713, %v3702
      %v3718 = vsel %vm3716, %v3714, %v3704
      %v3719 = vsel %vm3716, %v3715, %v3706
      %3723 = vrot.lane.b32.xlu0 %v3569, 8
      %v3724 = vpop.permute.xlu0 %3723
      %3725 = vrot.lane.b32.xlu0 %v3572, 8
      %v3726 = vpop.permute.xlu0 %3725
      %3727 = vrot.lane.b32.xlu0 %v3575, 8
      %v3728 = vpop.permute.xlu0 %3727
      %3735 = vrot.lane.b32.xlu0 %v3614, 16
      %v3736 = vpop.permute.xlu0 %3735
      %3737 = vrot.lane.b32.xlu0 %v3617, 16
      %v3738 = vpop.permute.xlu0 %3737
      %3739 = vrot.lane.b32.xlu0 %v3620, 16
      %v3740 = vpop.permute.xlu0 %3739
      %3747 = vrot.lane.b32.xlu0 %v3659, 24
      %v3748 = vpop.permute.xlu0 %3747
      %3749 = vrot.lane.b32.xlu0 %v3662, 24
      %v3750 = vpop.permute.xlu0 %3749
      %3751 = vrot.lane.b32.xlu0 %v3665, 24
      %v3752 = vpop.permute.xlu0 %3751
      %v3756 = vsel %vm2360, %v3524, %v3724
      %v3757 = vsel %vm2360, %v3527, %v3726
      %v3758 = vsel %vm2360, %v3530, %v3728
      %v3759 = vsel %vm390, %v3756, %v3736
      %v3760 = vsel %vm390, %v3757, %v3738
      %v3761 = vsel %vm390, %v3758, %v3740
      %v3762 = vsel %vm3716, %v3759, %v3748
      %v3763 = vsel %vm3716, %v3760, %v3750
      %v3764 = vsel %vm3716, %v3761, %v3752
      %v3768 = vrot.slane %v3762, 7
      %v3769 = vrot.slane %v3763, 7
      %v3770 = vsel %vm130, %v3768, %v3769
      %v3771 = vrot.slane %v3764, 7
      %v3772 = vsel %vm130, %v3769, %v3771
      %v3774 = vsel %vm130, %v3719, %v3768
      %v3776 = vperm.slane %v3673, 0
      %v3779 = vsel %vm176, %v3717, 0
      %v3782 = vsel %vm176, %v3718, 0
      %v3785 = vsel %vm176, %v3774, 0
      %v3787 = vsel %vm176, %v3770, 0
      %v3789 = vsel %vm176, %v3772, 0
      %3791 = vmatpush.msra.mxu0 0.0
      %3792 = vmatpush.msra.mxu0 0.0
      %3793 = vmatpush.msra.mxu0 0.0
      %3794 = vmatpush.msra.mxu0 0.0
      %3795 = vmatpush.msra.mxu0 0.0
      %3796 = vmatpush.msra.mxu0 0.0
      %3797 = vmatpush.msra.mxu0 0.0
      %3798 = vmatpush.msra.mxu0 0.0
      %3799 = vmatpush.msra.mxu0 0.0
      %3800 = vmatpush.msra.mxu0 0.0
      %3801 = vmatpush.msra.mxu0 0.0
      %3802 = vmatpush.msra.mxu0 0.0
      %3803 = vmatpush.msra.mxu0 %v3671
      %3804 = vmatpush.msra.mxu0 %v3670
      %3805 = vmatpush.msra.mxu0 %v3669
      %3806 = vmatpush.msra.mxu0 %v3668
      %3807 = vmatmul.f32.gmra.mxu0 %v3779
      %v3808 = vpop.f32.mrf.mxu0
      %v3809 = vadd.f32 %v3776, %v3808
      %3810 = vmatmul.f32.gmra.mxu0 %v3782
      %v3811 = vpop.f32.mrf.mxu0
      %v3812 = vadd.f32 %v3776, %v3811
      %3813 = vmatmul.f32.gmra.mxu0 %v3785
      %v3814 = vpop.f32.mrf.mxu0
      %v3815 = vadd.f32 %v3776, %v3814
      %3816 = vmatmul.f32.gmra.mxu0 %v3787
      %v3817 = vpop.f32.mrf.mxu0
      %v3818 = vadd.f32 %v3776, %v3817
      %3819 = vmatmul.f32.gmra.mxu0 %v3789
      %v3820 = vpop.f32.mrf.mxu0
      %v3821 = vadd.f32 %v3776, %v3820
      %3822 = vdwg.mxu0
      %v3823 = vadd.f32 %v2115, %v3809
      %v3824 = vadd.f32 %v2116, %v3812
      %v3825 = vadd.f32 %v2117, %v3815
      %v3826 = vadd.f32 %v2118, %v3818
      %v3827 = vadd.f32 %v2119, %v3821
      %s3828 = scalar_lea.vmem %s10, %s2110
      %v3829 = vld [vmem:[%s3828] sm:$0x1]
      %s3830 = scalar_lea.vmem %s11, %s2110
      %v3831 = vld [vmem:[%s3830] sm:$0x1]
      %s3832 = scalar_lea.vmem %s12, %s2124
      %v3833 = vld [vmem:[%s3832] sm:$0xff]
      %v3834 = vld [vmem:[%s3832 + $0x8] sm:$0xff]
      %v3835 = vld [vmem:[%s3832 + $0x10] sm:$0xff]
      %v3836 = vld [vmem:[%s3832 + $0x18] sm:$0xff]
      %s3837 = scalar_lea.vmem %s13, %s2110
      %v3838 = vld [vmem:[%s3837] sm:$0x1]
      %s3839 = smul.u32 %s2110, 128
      %s3840 = scalar_lea.vmem %s14, %s3839
      %v3841 = vld [vmem:[%s3840] sm:$0xff]
      %v3842 = vld [vmem:[%s3840 + $0x8] sm:$0xff]
      %v3843 = vld [vmem:[%s3840 + $0x10] sm:$0xff]
      %v3844 = vld [vmem:[%s3840 + $0x18] sm:$0xff]
      %v3845 = vld [vmem:[%s3840 + $0x20] sm:$0xff]
      %v3846 = vld [vmem:[%s3840 + $0x28] sm:$0xff]
      %v3847 = vld [vmem:[%s3840 + $0x30] sm:$0xff]
      %v3848 = vld [vmem:[%s3840 + $0x38] sm:$0xff]
      %v3849 = vld [vmem:[%s3840 + $0x40] sm:$0xff]
      %v3850 = vld [vmem:[%s3840 + $0x48] sm:$0xff]
      %v3851 = vld [vmem:[%s3840 + $0x50] sm:$0xff]
      %v3852 = vld [vmem:[%s3840 + $0x58] sm:$0xff]
      %v3853 = vld [vmem:[%s3840 + $0x60] sm:$0xff]
      %v3854 = vld [vmem:[%s3840 + $0x68] sm:$0xff]
      %v3855 = vld [vmem:[%s3840 + $0x70] sm:$0xff]
      %v3856 = vld [vmem:[%s3840 + $0x78] sm:$0xff]
      %s3857 = scalar_lea.vmem %s15, %s2110
      %v3858 = vld [vmem:[%s3857] sm:$0x1]
      %v3859 = vsel %vm176, %v3823, 0.0
      %3860 = vadd.xlane.f32.xlu0 %v3859
      %v3861 = vpop.xlane.xlu0 %3860
      %v3862 = vsel %vm176, %v3824, 0.0
      %3863 = vadd.xlane.f32.xlu0 %v3862
      %v3864 = vpop.xlane.xlu0 %3863
      %v3865 = vsel %vm176, %v3825, 0.0
      %3866 = vadd.xlane.f32.xlu0 %v3865
      %v3867 = vpop.xlane.xlu0 %3866
      %v3868 = vsel %vm176, %v3826, 0.0
      %3869 = vadd.xlane.f32.xlu0 %v3868
      %v3870 = vpop.xlane.xlu0 %3869
      %v3871 = vsel %vm189, %v3827, 0.0
      %3872 = vadd.xlane.f32.xlu0 %v3871
      %v3873 = vpop.xlane.xlu0 %3872
      %v3874 = vmul.f32 %v3861, %v199
      %v3875 = vmul.f32 %v3864, %v199
      %v3876 = vmul.f32 %v3867, %v199
      %v3877 = vmul.f32 %v3870, %v199
      %v3878 = vmul.f32 %v3873, %v199
      %v3879 = vsub.f32 %v3823, %v3874
      %v3880 = vsub.f32 %v3824, %v3875
      %v3881 = vsub.f32 %v3825, %v3876
      %v3882 = vsub.f32 %v3826, %v3877
      %v3883 = vsub.f32 %v3827, %v3878
      %v3884 = vmul.f32 %v3879, %v3879
      %v3885 = vmul.f32 %v3880, %v3880
      %v3886 = vmul.f32 %v3881, %v3881
      %v3887 = vmul.f32 %v3882, %v3882
      %v3888 = vmul.f32 %v3883, %v3883
      %v3889 = vsel %vm176, %v3884, 0.0
      %3890 = vadd.xlane.f32.xlu0 %v3889
      %v3891 = vpop.xlane.xlu0 %3890
      %v3892 = vsel %vm176, %v3885, 0.0
      %3893 = vadd.xlane.f32.xlu0 %v3892
      %v3894 = vpop.xlane.xlu0 %3893
      %v3895 = vsel %vm176, %v3886, 0.0
      %3896 = vadd.xlane.f32.xlu0 %v3895
      %v3897 = vpop.xlane.xlu0 %3896
      %v3898 = vsel %vm176, %v3887, 0.0
      %3899 = vadd.xlane.f32.xlu0 %v3898
      %v3900 = vpop.xlane.xlu0 %3899
      %v3901 = vsel %vm189, %v3888, 0.0
      %3902 = vadd.xlane.f32.xlu0 %v3901
      %v3903 = vpop.xlane.xlu0 %3902
      %v3904 = vmul.f32 %v3891, %v199
      %v3905 = vmul.f32 %v3894, %v199
      %v3906 = vmul.f32 %v3897, %v199
      %v3907 = vmul.f32 %v3900, %v199
      %v3908 = vmul.f32 %v3903, %v199
      %v3909 = vadd.f32 %v3904, 1e-05
      %v3910 = vadd.f32 %v3905, 1e-05
      %v3911 = vadd.f32 %v3906, 1e-05
      %v3912 = vadd.f32 %v3907, 1e-05
      %v3913 = vadd.f32 %v3908, 1e-05
      %v3914 = vrsqrt.pop %v3909
      %v3915 = vmul.f32 %v3914, %v3909
      %v3916 = vmul.f32 %v3915, %v3914
      %v3917 = vmul.f32 0.5, %v3916
      %v3918 = vsub.f32 1.5, %v3917
      %v3919 = vmul.f32 %v3914, %v3918
      %vm3920 = vweird.f32 %v3909
      %vm3921 = vweird.f32 %v3914
      %vm3922 = vmor %vm3920, %vm3921
      %v3923 = vsel %vm3922, %v3914, %v3919
      %v3924 = vrsqrt.pop %v3910
      %v3925 = vmul.f32 %v3924, %v3910
      %v3926 = vmul.f32 %v3925, %v3924
      %v3927 = vmul.f32 0.5, %v3926
      %v3928 = vsub.f32 1.5, %v3927
      %v3929 = vmul.f32 %v3924, %v3928
      %vm3930 = vweird.f32 %v3910
      %vm3931 = vweird.f32 %v3924
      %vm3932 = vmor %vm3930, %vm3931
      %v3933 = vsel %vm3932, %v3924, %v3929
      %v3934 = vrsqrt.pop %v3911
      %v3935 = vmul.f32 %v3934, %v3911
      %v3936 = vmul.f32 %v3935, %v3934
      %v3937 = vmul.f32 0.5, %v3936
      %v3938 = vsub.f32 1.5, %v3937
      %v3939 = vmul.f32 %v3934, %v3938
      %vm3940 = vweird.f32 %v3911
      %vm3941 = vweird.f32 %v3934
      %vm3942 = vmor %vm3940, %vm3941
      %v3943 = vsel %vm3942, %v3934, %v3939
      %v3944 = vrsqrt.pop %v3912
      %v3945 = vmul.f32 %v3944, %v3912
      %v3946 = vmul.f32 %v3945, %v3944
      %v3947 = vmul.f32 0.5, %v3946
      %v3948 = vsub.f32 1.5, %v3947
      %v3949 = vmul.f32 %v3944, %v3948
      %vm3950 = vweird.f32 %v3912
      %vm3951 = vweird.f32 %v3944
      %vm3952 = vmor %vm3950, %vm3951
      %v3953 = vsel %vm3952, %v3944, %v3949
      %v3954 = vrsqrt.pop %v3913
      %v3955 = vmul.f32 %v3954, %v3913
      %v3956 = vmul.f32 %v3955, %v3954
      %v3957 = vmul.f32 0.5, %v3956
      %v3958 = vsub.f32 1.5, %v3957
      %v3959 = vmul.f32 %v3954, %v3958
      %vm3960 = vweird.f32 %v3913
      %vm3961 = vweird.f32 %v3954
      %vm3962 = vmor %vm3960, %vm3961
      %v3963 = vsel %vm3962, %v3954, %v3959
      %v3964 = vmul.f32 %v3879, %v3923
      %v3965 = vmul.f32 %v3880, %v3933
      %v3966 = vmul.f32 %v3881, %v3943
      %v3967 = vmul.f32 %v3882, %v3953
      %v3968 = vmul.f32 %v3883, %v3963
      %v3970 = vperm.slane %v3829, 0
      %v3972 = vmul.f32 %v3964, %v3970
      %v3973 = vmul.f32 %v3965, %v3970
      %v3974 = vmul.f32 %v3966, %v3970
      %v3975 = vmul.f32 %v3967, %v3970
      %v3976 = vmul.f32 %v3968, %v3970
      %v3978 = vperm.slane %v3831, 0
      %v3980 = vadd.f32 %v3972, %v3978
      %v3981 = vadd.f32 %v3973, %v3978
      %v3982 = vadd.f32 %v3974, %v3978
      %v3983 = vadd.f32 %v3975, %v3978
      %v3984 = vadd.f32 %v3976, %v3978
      %v3986 = vperm.slane %v3838, 0
      %v3989 = vsel %vm176, %v3980, 0
      %v3992 = vsel %vm176, %v3981, 0
      %v3995 = vsel %vm176, %v3982, 0
      %v3998 = vsel %vm176, %v3983, 0
      %v4001 = vsel %vm176, %v3984, 0
      %4003 = vmatpush.msra.mxu0 0.0
      %4004 = vmatpush.msra.mxu0 0.0
      %4005 = vmatpush.msra.mxu0 0.0
      %4006 = vmatpush.msra.mxu0 0.0
      %4007 = vmatpush.msra.mxu0 0.0
      %4008 = vmatpush.msra.mxu0 0.0
      %4009 = vmatpush.msra.mxu0 0.0
      %4010 = vmatpush.msra.mxu0 0.0
      %4011 = vmatpush.msra.mxu0 0.0
      %4012 = vmatpush.msra.mxu0 0.0
      %4013 = vmatpush.msra.mxu0 0.0
      %4014 = vmatpush.msra.mxu0 0.0
      %4015 = vmatpush.msra.mxu0 %v3836
      %4016 = vmatpush.msra.mxu0 %v3835
      %4017 = vmatpush.msra.mxu0 %v3834
      %4018 = vmatpush.msra.mxu0 %v3833
      %4019 = vmatmul.f32.gmra.mxu0 %v3989
      %v4020 = vpop.f32.mrf.mxu0
      %v4021 = vadd.f32 %v3986, %v4020
      %4022 = vmatmul.f32.gmra.mxu0 %v3992
      %v4023 = vpop.f32.mrf.mxu0
      %v4024 = vadd.f32 %v3986, %v4023
      %4025 = vmatmul.f32.gmra.mxu0 %v3995
      %v4026 = vpop.f32.mrf.mxu0
      %v4027 = vadd.f32 %v3986, %v4026
      %4028 = vmatmul.f32.gmra.mxu0 %v3998
      %v4029 = vpop.f32.mrf.mxu0
      %v4030 = vadd.f32 %v3986, %v4029
      %4031 = vmatmul.f32.gmra.mxu0 %v4001
      %v4032 = vpop.f32.mrf.mxu0
      %v4033 = vadd.f32 %v3986, %v4032
      %4034 = vdwg.mxu0
      %v4035 = vmul.f32 %v4021, 0.5
      %v4036 = vmul.f32 %v4024, 0.5
      %v4037 = vmul.f32 %v4027, 0.5
      %v4038 = vmul.f32 %v4030, 0.5
      %v4039 = vmul.f32 %v4033, 0.5
      %v4040 = vmul.f32 %v4021, 0.70710677
      %v4041 = vmul.f32 %v4024, 0.70710677
      %v4042 = vmul.f32 %v4027, 0.70710677
      %v4043 = vmul.f32 %v4030, 0.70710677
      %v4044 = vmul.f32 %v4033, 0.70710677
      %v4045 = vmul.f32 %v4040, %v4040
      %v4046 = vmin.f32 16.0, %v4045
      %v4047 = vmul.f32 %v4046, 2.1237322e-06
      %v4048 = vadd.f32 %v4047, 0.00028619796
      %v4049 = vmul.f32 %v4046, %v4048
      %v4050 = vadd.f32 %v4049, 0.0036580483
      %v4051 = vmul.f32 %v4046, %v4050
      %v4052 = vadd.f32 %v4051, 0.05243302
      %v4053 = vmul.f32 %v4046, %v4052
      %v4054 = vadd.f32 %v4053, 0.18741608
      %v4055 = vmul.f32 %v4046, %v4054
      %v4056 = vadd.f32 %v4055, 1.1283791
      %v4057 = vmul.f32 %v4040, %v4056
      %v4058 = vmul.f32 %v4046, 3.8918573e-05
      %v4059 = vadd.f32 %v4058, 0.001143296
      %v4060 = vmul.f32 %v4046, %v4059
      %v4061 = vadd.f32 %v4060, 0.014752088
      %v4062 = vmul.f32 %v4046, %v4061
      %v4063 = vadd.f32 %v4062, 0.112945676
      %v4064 = vmul.f32 %v4046, %v4063
      %v4065 = vadd.f32 %v4064, 0.4994258
      %v4066 = vmul.f32 %v4046, %v4065
      %v4067 = vadd.f32 %v4066, 1.0
      %v4068 = vrcp.pop %v4067
      %v4069 = vmul.f32 %v4067, %v4068
      %v4070 = vsub.f32 1.0, %v4069
      %v4071 = vmul.f32 %v4068, %v4070
      %v4072 = vadd.f32 %v4068, %v4071
      %vm4073 = vweird.f32 %v4067
      %vm4074 = vweird.f32 %v4068
      %vm4075 = vmor %vm4073, %vm4074
      %v4076 = vsel %vm4075, %v4068, %v4072
      %v4077 = vand.u32 2147483647, %v4067
      %vm4078 = vcmp.eq.f32.partialorder %v4077, 8.507059e+37
      %v4079 = vand.u32 %v4067, 2147483648
      %v4080 = vor.u32 1.1754944e-38, %v4079
      %v4081 = vsel %vm4078, %v4080, %v4076
      %v4082 = vmul.f32 %v4057, %v4081
      %v4083 = vmin.f32 %v4082, 1.0
      %v4084 = vmax.f32 %v4083, -1.0
      %v4085 = vmul.f32 %v4041, %v4041
      %v4086 = vmin.f32 16.0, %v4085
      %v4087 = vmul.f32 %v4086, 2.1237322e-06
      %v4088 = vadd.f32 %v4087, 0.00028619796
      %v4089 = vmul.f32 %v4086, %v4088
      %v4090 = vadd.f32 %v4089, 0.0036580483
      %v4091 = vmul.f32 %v4086, %v4090
      %v4092 = vadd.f32 %v4091, 0.05243302
      %v4093 = vmul.f32 %v4086, %v4092
      %v4094 = vadd.f32 %v4093, 0.18741608
      %v4095 = vmul.f32 %v4086, %v4094
      %v4096 = vadd.f32 %v4095, 1.1283791
      %v4097 = vmul.f32 %v4041, %v4096
      %v4098 = vmul.f32 %v4086, 3.8918573e-05
      %v4099 = vadd.f32 %v4098, 0.001143296
      %v4100 = vmul.f32 %v4086, %v4099
      %v4101 = vadd.f32 %v4100, 0.014752088
      %v4102 = vmul.f32 %v4086, %v4101
      %v4103 = vadd.f32 %v4102, 0.112945676
      %v4104 = vmul.f32 %v4086, %v4103
      %v4105 = vadd.f32 %v4104, 0.4994258
      %v4106 = vmul.f32 %v4086, %v4105
      %v4107 = vadd.f32 %v4106, 1.0
      %v4108 = vrcp.pop %v4107
      %v4109 = vmul.f32 %v4107, %v4108
      %v4110 = vsub.f32 1.0, %v4109
      %v4111 = vmul.f32 %v4108, %v4110
      %v4112 = vadd.f32 %v4108, %v4111
      %vm4113 = vweird.f32 %v4107
      %vm4114 = vweird.f32 %v4108
      %vm4115 = vmor %vm4113, %vm4114
      %v4116 = vsel %vm4115, %v4108, %v4112
      %v4117 = vand.u32 2147483647, %v4107
      %vm4118 = vcmp.eq.f32.partialorder %v4117, 8.507059e+37
      %v4119 = vand.u32 %v4107, 2147483648
      %v4120 = vor.u32 1.1754944e-38, %v4119
      %v4121 = vsel %vm4118, %v4120, %v4116
      %v4122 = vmul.f32 %v4097, %v4121
      %v4123 = vmin.f32 %v4122, 1.0
      %v4124 = vmax.f32 %v4123, -1.0
      %v4125 = vmul.f32 %v4042, %v4042
      %v4126 = vmin.f32 16.0, %v4125
      %v4127 = vmul.f32 %v4126, 2.1237322e-06
      %v4128 = vadd.f32 %v4127, 0.00028619796
      %v4129 = vmul.f32 %v4126, %v4128
      %v4130 = vadd.f32 %v4129, 0.0036580483
      %v4131 = vmul.f32 %v4126, %v4130
      %v4132 = vadd.f32 %v4131, 0.05243302
      %v4133 = vmul.f32 %v4126, %v4132
      %v4134 = vadd.f32 %v4133, 0.18741608
      %v4135 = vmul.f32 %v4126, %v4134
      %v4136 = vadd.f32 %v4135, 1.1283791
      %v4137 = vmul.f32 %v4042, %v4136
      %v4138 = vmul.f32 %v4126, 3.8918573e-05
      %v4139 = vadd.f32 %v4138, 0.001143296
      %v4140 = vmul.f32 %v4126, %v4139
      %v4141 = vadd.f32 %v4140, 0.014752088
      %v4142 = vmul.f32 %v4126, %v4141
      %v4143 = vadd.f32 %v4142, 0.112945676
      %v4144 = vmul.f32 %v4126, %v4143
      %v4145 = vadd.f32 %v4144, 0.4994258
      %v4146 = vmul.f32 %v4126, %v4145
      %v4147 = vadd.f32 %v4146, 1.0
      %v4148 = vrcp.pop %v4147
      %v4149 = vmul.f32 %v4147, %v4148
      %v4150 = vsub.f32 1.0, %v4149
      %v4151 = vmul.f32 %v4148, %v4150
      %v4152 = vadd.f32 %v4148, %v4151
      %vm4153 = vweird.f32 %v4147
      %vm4154 = vweird.f32 %v4148
      %vm4155 = vmor %vm4153, %vm4154
      %v4156 = vsel %vm4155, %v4148, %v4152
      %v4157 = vand.u32 2147483647, %v4147
      %vm4158 = vcmp.eq.f32.partialorder %v4157, 8.507059e+37
      %v4159 = vand.u32 %v4147, 2147483648
      %v4160 = vor.u32 1.1754944e-38, %v4159
      %v4161 = vsel %vm4158, %v4160, %v4156
      %v4162 = vmul.f32 %v4137, %v4161
      %v4163 = vmin.f32 %v4162, 1.0
      %v4164 = vmax.f32 %v4163, -1.0
      %v4165 = vmul.f32 %v4043, %v4043
      %v4166 = vmin.f32 16.0, %v4165
      %v4167 = vmul.f32 %v4166, 2.1237322e-06
      %v4168 = vadd.f32 %v4167, 0.00028619796
      %v4169 = vmul.f32 %v4166, %v4168
      %v4170 = vadd.f32 %v4169, 0.0036580483
      %v4171 = vmul.f32 %v4166, %v4170
      %v4172 = vadd.f32 %v4171, 0.05243302
      %v4173 = vmul.f32 %v4166, %v4172
      %v4174 = vadd.f32 %v4173, 0.18741608
      %v4175 = vmul.f32 %v4166, %v4174
      %v4176 = vadd.f32 %v4175, 1.1283791
      %v4177 = vmul.f32 %v4043, %v4176
      %v4178 = vmul.f32 %v4166, 3.8918573e-05
      %v4179 = vadd.f32 %v4178, 0.001143296
      %v4180 = vmul.f32 %v4166, %v4179
      %v4181 = vadd.f32 %v4180, 0.014752088
      %v4182 = vmul.f32 %v4166, %v4181
      %v4183 = vadd.f32 %v4182, 0.112945676
      %v4184 = vmul.f32 %v4166, %v4183
      %v4185 = vadd.f32 %v4184, 0.4994258
      %v4186 = vmul.f32 %v4166, %v4185
      %v4187 = vadd.f32 %v4186, 1.0
      %v4188 = vrcp.pop %v4187
      %v4189 = vmul.f32 %v4187, %v4188
      %v4190 = vsub.f32 1.0, %v4189
      %v4191 = vmul.f32 %v4188, %v4190
      %v4192 = vadd.f32 %v4188, %v4191
      %vm4193 = vweird.f32 %v4187
      %vm4194 = vweird.f32 %v4188
      %vm4195 = vmor %vm4193, %vm4194
      %v4196 = vsel %vm4195, %v4188, %v4192
      %v4197 = vand.u32 2147483647, %v4187
      %vm4198 = vcmp.eq.f32.partialorder %v4197, 8.507059e+37
      %v4199 = vand.u32 %v4187, 2147483648
      %v4200 = vor.u32 1.1754944e-38, %v4199
      %v4201 = vsel %vm4198, %v4200, %v4196
      %v4202 = vmul.f32 %v4177, %v4201
      %v4203 = vmin.f32 %v4202, 1.0
      %v4204 = vmax.f32 %v4203, -1.0
      %v4205 = vmul.f32 %v4044, %v4044
      %v4206 = vmin.f32 16.0, %v4205
      %v4207 = vmul.f32 %v4206, 2.1237322e-06
      %v4208 = vadd.f32 %v4207, 0.00028619796
      %v4209 = vmul.f32 %v4206, %v4208
      %v4210 = vadd.f32 %v4209, 0.0036580483
      %v4211 = vmul.f32 %v4206, %v4210
      %v4212 = vadd.f32 %v4211, 0.05243302
      %v4213 = vmul.f32 %v4206, %v4212
      %v4214 = vadd.f32 %v4213, 0.18741608
      %v4215 = vmul.f32 %v4206, %v4214
      %v4216 = vadd.f32 %v4215, 1.1283791
      %v4217 = vmul.f32 %v4044, %v4216
      %v4218 = vmul.f32 %v4206, 3.8918573e-05
      %v4219 = vadd.f32 %v4218, 0.001143296
      %v4220 = vmul.f32 %v4206, %v4219
      %v4221 = vadd.f32 %v4220, 0.014752088
      %v4222 = vmul.f32 %v4206, %v4221
      %v4223 = vadd.f32 %v4222, 0.112945676
      %v4224 = vmul.f32 %v4206, %v4223
      %v4225 = vadd.f32 %v4224, 0.4994258
      %v4226 = vmul.f32 %v4206, %v4225
      %v4227 = vadd.f32 %v4226, 1.0
      %v4228 = vrcp.pop %v4227
      %v4229 = vmul.f32 %v4227, %v4228
      %v4230 = vsub.f32 1.0, %v4229
      %v4231 = vmul.f32 %v4228, %v4230
      %v4232 = vadd.f32 %v4228, %v4231
      %vm4233 = vweird.f32 %v4227
      %vm4234 = vweird.f32 %v4228
      %vm4235 = vmor %vm4233, %vm4234
      %v4236 = vsel %vm4235, %v4228, %v4232
      %v4237 = vand.u32 2147483647, %v4227
      %vm4238 = vcmp.eq.f32.partialorder %v4237, 8.507059e+37
      %v4239 = vand.u32 %v4227, 2147483648
      %v4240 = vor.u32 1.1754944e-38, %v4239
      %v4241 = vsel %vm4238, %v4240, %v4236
      %v4242 = vmul.f32 %v4217, %v4241
      %v4243 = vmin.f32 %v4242, 1.0
      %v4244 = vmax.f32 %v4243, -1.0
      %v4245 = vadd.f32 %v4084, 1.0
      %v4246 = vadd.f32 %v4124, 1.0
      %v4247 = vadd.f32 %v4164, 1.0
      %v4248 = vadd.f32 %v4204, 1.0
      %v4249 = vadd.f32 %v4244, 1.0
      %v4250 = vmul.f32 %v4035, %v4245
      %v4251 = vmul.f32 %v4036, %v4246
      %v4252 = vmul.f32 %v4037, %v4247
      %v4253 = vmul.f32 %v4038, %v4248
      %v4254 = vmul.f32 %v4039, %v4249
      %v4256 = vperm.slane %v3858, 0
      %4258 = vmatpush.msra.mxu0 %v3856
      %4259 = vmatpush.msra.mxu0 %v3855
      %4260 = vmatpush.msra.mxu0 %v3854
      %4261 = vmatpush.msra.mxu0 %v3853
      %4262 = vmatpush.msra.mxu0 %v3852
      %4263 = vmatpush.msra.mxu0 %v3851
      %4264 = vmatpush.msra.mxu0 %v3850
      %4265 = vmatpush.msra.mxu0 %v3849
      %4266 = vmatpush.msra.mxu0 %v3848
      %4267 = vmatpush.msra.mxu0 %v3847
      %4268 = vmatpush.msra.mxu0 %v3846
      %4269 = vmatpush.msra.mxu0 %v3845
      %4270 = vmatpush.msra.mxu0 %v3844
      %4271 = vmatpush.msra.mxu0 %v3843
      %4272 = vmatpush.msra.mxu0 %v3842
      %4273 = vmatpush.msra.mxu0 %v3841
      %4274 = vmatmul.f32.gmra.mxu0 %v4250
      %v4275 = vpop.f32.mrf.mxu0
      %v4276 = vadd.f32 %v4256, %v4275
      %4277 = vmatmul.f32.gmra.mxu0 %v4251
      %v4278 = vpop.f32.mrf.mxu0
      %v4279 = vadd.f32 %v4256, %v4278
      %4280 = vmatmul.f32.gmra.mxu0 %v4252
      %v4281 = vpop.f32.mrf.mxu0
      %v4282 = vadd.f32 %v4256, %v4281
      %4283 = vmatmul.f32.gmra.mxu0 %v4253
      %v4284 = vpop.f32.mrf.mxu0
      %v4285 = vadd.f32 %v4256, %v4284
      %4286 = vmatmul.f32.gmra.mxu0 %v4254
      %v4287 = vpop.f32.mrf.mxu0
      %v4288 = vadd.f32 %v4256, %v4287
      %4289 = vdwg.mxu0
      %v4290 = vadd.f32 %v3823, %v4276
      %v4291 = vadd.f32 %v3824, %v4279
      %v4292 = vadd.f32 %v3825, %v4282
      %v4293 = vadd.f32 %v3826, %v4285
      %v4294 = vadd.f32 %v3827, %v4288
    $region86: #{alivit_forward.1} parent=1 // loop_footer
      %s2114 = sadd.s32 1, %s2110
    $region87: #{alivit_forward.1} parent=1 // loop_footer_branch
      %2109 = sbr.rel target = $region83
    $region88: #{alivit_forward.1} parent=1 // loop_exit
      _
    %s4295 = scalar_lea.vmem %s4, 11
    %v4296 = vld [vmem:[%s4295] sm:$0x1]
    %s4297 = scalar_lea.vmem %s5, 11
    %v4298 = vld [vmem:[%s4297] sm:$0x1]
    %s4299 = scalar_lea.vmem %s6, 352
    %v4300 = vld [vmem:[%s4299] sm:$0xff]
    %v4301 = vld [vmem:[%s4299 + $0x8] sm:$0xff]
    %v4302 = vld [vmem:[%s4299 + $0x10] sm:$0xff]
    %v4303 = vld [vmem:[%s4299 + $0x18] sm:$0xff]
    %s4304 = scalar_lea.vmem %s7, 11
    %v4305 = vld [vmem:[%s4304] sm:$0x1]
    %v4306 = vsel %vm176, %v2115, 0.0
    %4307 = vadd.xlane.f32.xlu0 %v4306
    %v4308 = vpop.xlane.xlu0 %4307
    %v4309 = vsel %vm176, %v2116, 0.0
    %4310 = vadd.xlane.f32.xlu0 %v4309
    %v4311 = vpop.xlane.xlu0 %4310
    %v4312 = vsel %vm176, %v2117, 0.0
    %4313 = vadd.xlane.f32.xlu0 %v4312
    %v4314 = vpop.xlane.xlu0 %4313
    %v4315 = vsel %vm176, %v2118, 0.0
    %4316 = vadd.xlane.f32.xlu0 %v4315
    %v4317 = vpop.xlane.xlu0 %4316
    %v4318 = vsel %vm189, %v2119, 0.0
    %4319 = vadd.xlane.f32.xlu0 %v4318
    %v4320 = vpop.xlane.xlu0 %4319
    %v4321 = vmul.f32 %v4308, %v199
    %v4322 = vmul.f32 %v4311, %v199
    %v4323 = vmul.f32 %v4314, %v199
    %v4324 = vmul.f32 %v4317, %v199
    %v4325 = vmul.f32 %v4320, %v199
    %v4326 = vsub.f32 %v2115, %v4321
    %v4327 = vsub.f32 %v2116, %v4322
    %v4328 = vsub.f32 %v2117, %v4323
    %v4329 = vsub.f32 %v2118, %v4324
    %v4330 = vsub.f32 %v2119, %v4325
    %v4331 = vmul.f32 %v4326, %v4326
    %v4332 = vmul.f32 %v4327, %v4327
    %v4333 = vmul.f32 %v4328, %v4328
    %v4334 = vmul.f32 %v4329, %v4329
    %v4335 = vmul.f32 %v4330, %v4330
    %v4336 = vsel %vm176, %v4331, 0.0
    %4337 = vadd.xlane.f32.xlu0 %v4336
    %v4338 = vpop.xlane.xlu0 %4337
    %v4339 = vsel %vm176, %v4332, 0.0
    %4340 = vadd.xlane.f32.xlu0 %v4339
    %v4341 = vpop.xlane.xlu0 %4340
    %v4342 = vsel %vm176, %v4333, 0.0
    %4343 = vadd.xlane.f32.xlu0 %v4342
    %v4344 = vpop.xlane.xlu0 %4343
    %v4345 = vsel %vm176, %v4334, 0.0
    %4346 = vadd.xlane.f32.xlu0 %v4345
    %v4347 = vpop.xlane.xlu0 %4346
    %v4348 = vsel %vm189, %v4335, 0.0
    %4349 = vadd.xlane.f32.xlu0 %v4348
    %v4350 = vpop.xlane.xlu0 %4349
    %v4351 = vmul.f32 %v4338, %v199
    %v4352 = vmul.f32 %v4341, %v199
    %v4353 = vmul.f32 %v4344, %v199
    %v4354 = vmul.f32 %v4347, %v199
    %v4355 = vmul.f32 %v4350, %v199
    %v4356 = vadd.f32 %v4351, 1e-05
    %v4357 = vadd.f32 %v4352, 1e-05
    %v4358 = vadd.f32 %v4353, 1e-05
    %v4359 = vadd.f32 %v4354, 1e-05
    %v4360 = vadd.f32 %v4355, 1e-05
    %v4361 = vrsqrt.pop %v4356
    %v4362 = vmul.f32 %v4361, %v4356
    %v4363 = vmul.f32 %v4362, %v4361
    %v4364 = vmul.f32 0.5, %v4363
    %v4365 = vsub.f32 1.5, %v4364
    %v4366 = vmul.f32 %v4361, %v4365
    %vm4367 = vweird.f32 %v4356
    %vm4368 = vweird.f32 %v4361
    %vm4369 = vmor %vm4367, %vm4368
    %v4370 = vsel %vm4369, %v4361, %v4366
    %v4371 = vrsqrt.pop %v4357
    %v4372 = vmul.f32 %v4371, %v4357
    %v4373 = vmul.f32 %v4372, %v4371
    %v4374 = vmul.f32 0.5, %v4373
    %v4375 = vsub.f32 1.5, %v4374
    %v4376 = vmul.f32 %v4371, %v4375
    %vm4377 = vweird.f32 %v4357
    %vm4378 = vweird.f32 %v4371
    %vm4379 = vmor %vm4377, %vm4378
    %v4380 = vsel %vm4379, %v4371, %v4376
    %v4381 = vrsqrt.pop %v4358
    %v4382 = vmul.f32 %v4381, %v4358
    %v4383 = vmul.f32 %v4382, %v4381
    %v4384 = vmul.f32 0.5, %v4383
    %v4385 = vsub.f32 1.5, %v4384
    %v4386 = vmul.f32 %v4381, %v4385
    %vm4387 = vweird.f32 %v4358
    %vm4388 = vweird.f32 %v4381
    %vm4389 = vmor %vm4387, %vm4388
    %v4390 = vsel %vm4389, %v4381, %v4386
    %v4391 = vrsqrt.pop %v4359
    %v4392 = vmul.f32 %v4391, %v4359
    %v4393 = vmul.f32 %v4392, %v4391
    %v4394 = vmul.f32 0.5, %v4393
    %v4395 = vsub.f32 1.5, %v4394
    %v4396 = vmul.f32 %v4391, %v4395
    %vm4397 = vweird.f32 %v4359
    %vm4398 = vweird.f32 %v4391
    %vm4399 = vmor %vm4397, %vm4398
    %v4400 = vsel %vm4399, %v4391, %v4396
    %v4401 = vrsqrt.pop %v4360
    %v4402 = vmul.f32 %v4401, %v4360
    %v4403 = vmul.f32 %v4402, %v4401
    %v4404 = vmul.f32 0.5, %v4403
    %v4405 = vsub.f32 1.5, %v4404
    %v4406 = vmul.f32 %v4401, %v4405
    %vm4407 = vweird.f32 %v4360
    %vm4408 = vweird.f32 %v4401
    %vm4409 = vmor %vm4407, %vm4408
    %v4410 = vsel %vm4409, %v4401, %v4406
    %v4411 = vmul.f32 %v4326, %v4370
    %v4412 = vmul.f32 %v4327, %v4380
    %v4413 = vmul.f32 %v4328, %v4390
    %v4414 = vmul.f32 %v4329, %v4400
    %v4415 = vmul.f32 %v4330, %v4410
    %v4417 = vperm.slane %v4296, 0
    %v4419 = vmul.f32 %v4411, %v4417
    %v4420 = vmul.f32 %v4412, %v4417
    %v4421 = vmul.f32 %v4413, %v4417
    %v4422 = vmul.f32 %v4414, %v4417
    %v4423 = vmul.f32 %v4415, %v4417
    %v4425 = vperm.slane %v4298, 0
    %v4427 = vadd.f32 %v4419, %v4425
    %v4428 = vadd.f32 %v4420, %v4425
    %v4429 = vadd.f32 %v4421, %v4425
    %v4430 = vadd.f32 %v4422, %v4425
    %v4431 = vadd.f32 %v4423, %v4425
    %v4433 = vperm.slane %v4305, 0
    %v4436 = vsel %vm176, %v4427, 0
    %v4439 = vsel %vm176, %v4428, 0
    %v4442 = vsel %vm176, %v4429, 0
    %v4445 = vsel %vm176, %v4430, 0
    %v4448 = vsel %vm176, %v4431, 0
    %4450 = vmatpush.msra.mxu0 0.0
    %4451 = vmatpush.msra.mxu0 0.0
    %4452 = vmatpush.msra.mxu0 0.0
    %4453 = vmatpush.msra.mxu0 0.0
    %4454 = vmatpush.msra.mxu0 0.0
    %4455 = vmatpush.msra.mxu0 0.0
    %4456 = vmatpush.msra.mxu0 0.0
    %4457 = vmatpush.msra.mxu0 0.0
    %4458 = vmatpush.msra.mxu0 0.0
    %4459 = vmatpush.msra.mxu0 0.0
    %4460 = vmatpush.msra.mxu0 0.0
    %4461 = vmatpush.msra.mxu0 0.0
    %4462 = vmatpush.msra.mxu0 %v4303
    %4463 = vmatpush.msra.mxu0 %v4302
    %4464 = vmatpush.msra.mxu0 %v4301
    %4465 = vmatpush.msra.mxu0 %v4300
    %4466 = vmatmul.f32.gmra.mxu0 %v4436
    %v4467 = vpop.f32.mrf.mxu0
    %v4468 = vadd.f32 %v4433, %v4467
    %4469 = vmatmul.f32.gmra.mxu0 %v4439
    %v4470 = vpop.f32.mrf.mxu0
    %v4471 = vadd.f32 %v4433, %v4470
    %4472 = vmatmul.f32.gmra.mxu0 %v4442
    %v4473 = vpop.f32.mrf.mxu0
    %v4474 = vadd.f32 %v4433, %v4473
    %4475 = vmatmul.f32.gmra.mxu0 %v4445
    %v4476 = vpop.f32.mrf.mxu0
    %v4477 = vadd.f32 %v4433, %v4476
    %4478 = vmatmul.f32.gmra.mxu0 %v4448
    %v4479 = vpop.f32.mrf.mxu0
    %v4480 = vadd.f32 %v4433, %v4479
    %4481 = vdwg.mxu0
    %4485 = vrot.lane.b32.xlu0 %v4468, 112
    %v4486 = vpop.permute.xlu0 %4485
    %4487 = vrot.lane.b32.xlu0 %v4471, 112
    %v4488 = vpop.permute.xlu0 %4487
    %4489 = vrot.lane.b32.xlu0 %v4474, 112
    %v4490 = vpop.permute.xlu0 %4489
    %v4493 = vrot.slane %v4474, 1
    %v4494 = vrot.slane %v4477, 1
    %v4495 = vsel %vm372, %v4493, %v4494
    %v4496 = vrot.slane %v4480, 1
    %v4497 = vsel %vm372, %v4494, %v4496
    %4498 = vrot.lane.b32.xlu0 %v4495, 112
    %v4499 = vpop.permute.xlu0 %4498
    %4500 = vrot.lane.b32.xlu0 %v4497, 112
    %v4501 = vpop.permute.xlu0 %4500
    %4502 = vrot.lane.b32.xlu0 %v4496, 112
    %v4503 = vpop.permute.xlu0 %4502
    %v4504 = vld [vmem:[%s18] sm:$0xff]
    %v4505 = vld [vmem:[%s18 + $0x8] sm:$0xff]
    %v4506 = vld [vmem:[%s18 + $0x10] sm:$0x1]
    %v4507 = vld [vmem:[%s18 + $0x18] sm:$0xff]
    %v4508 = vld [vmem:[%s18 + $0x20] sm:$0xff]
    %v4509 = vld [vmem:[%s18 + $0x28] sm:$0x1]
    %v4510 = vld [vmem:[%s18 + $0x30] sm:$0xff]
    %v4511 = vld [vmem:[%s18 + $0x38] sm:$0xff]
    %v4512 = vld [vmem:[%s18 + $0x40] sm:$0x1]
    %v4513 = vld [vmem:[%s18 + $0x48] sm:$0xff]
    %v4514 = vld [vmem:[%s18 + $0x50] sm:$0xff]
    %v4515 = vld [vmem:[%s18 + $0x58] sm:$0x1]
    %4516 = vrot.lane.b32.xlu0 %v4468, 96
    %v4517 = vpop.permute.xlu0 %4516
    %4518 = vrot.lane.b32.xlu0 %v4471, 96
    %v4519 = vpop.permute.xlu0 %4518
    %4520 = vrot.lane.b32.xlu0 %v4474, 96
    %v4521 = vpop.permute.xlu0 %4520
    %v4522 = vsel %vm390, %v4468, 0
    %v4524 = vsel %vm390, %v4471, 0
    %v4526 = vsel %vm390, %v4474, 0
    %v4528 = vsel %vm390, %v4517, 0
    %v4530 = vsel %vm390, %v4519, 0
    %v4532 = vsel %vm390, %v4521, 0
    %4534 = vmatpush.xpose.msra.mxu0 0.0
    %4535 = vmatpush.xpose.msra.mxu0 0.0
    %4536 = vmatpush.xpose.msra.mxu0 0.0
    %4537 = vmatpush.xpose.msra.mxu0 0.0
    %4538 = vmatpush.xpose.msra.mxu0 0.0
    %4539 = vmatpush.xpose.msra.mxu0 0.0
    %4540 = vmatpush.xpose.msra.mxu0 0.0
    %4541 = vmatpush.xpose.msra.mxu0 0.0
    %4542 = vmatpush.xpose.msra.mxu0 0.0
    %4543 = vmatpush.xpose.msra.mxu0 0.0
    %4544 = vmatpush.xpose.msra.mxu0 0.0
    %4545 = vmatpush.xpose.msra.mxu0 0.0
    %4546 = vmatpush.xpose.msra.mxu0 0.0
    %4547 = vmatpush.xpose.msra.mxu0 %v4532
    %4548 = vmatpush.xpose.msra.mxu0 %v4530
    %4549 = vmatpush.xpose.msra.mxu0 %v4528
    %4550 = vmatmul.f32.gmra.mxu0 %v4522
    %v4551 = vpop.f32.mrf.mxu0
    %v4552 = vadd.f32 0.0, %v4551
    %4553 = vmatmul.f32.gmra.mxu0 %v4524
    %v4554 = vpop.f32.mrf.mxu0
    %v4555 = vadd.f32 0.0, %v4554
    %4556 = vmatmul.f32.gmra.mxu0 %v4526
    %v4557 = vpop.f32.mrf.mxu0
    %v4558 = vadd.f32 0.0, %v4557
    %4559 = vdwg.mxu0
    %4560 = vrot.lane.b32.xlu0 %v4486, 96
    %v4561 = vpop.permute.xlu0 %4560
    %4562 = vrot.lane.b32.xlu0 %v4488, 96
    %v4563 = vpop.permute.xlu0 %4562
    %4564 = vrot.lane.b32.xlu0 %v4490, 96
    %v4565 = vpop.permute.xlu0 %4564
    %v4566 = vsel %vm390, %v4486, 0
    %v4568 = vsel %vm390, %v4488, 0
    %v4570 = vsel %vm390, %v4490, 0
    %v4572 = vsel %vm390, %v4561, 0
    %v4574 = vsel %vm390, %v4563, 0
    %v4576 = vsel %vm390, %v4565, 0
    %4578 = vmatpush.xpose.msra.mxu0 0.0
    %4579 = vmatpush.xpose.msra.mxu0 0.0
    %4580 = vmatpush.xpose.msra.mxu0 0.0
    %4581 = vmatpush.xpose.msra.mxu0 0.0
    %4582 = vmatpush.xpose.msra.mxu0 0.0
    %4583 = vmatpush.xpose.msra.mxu0 0.0
    %4584 = vmatpush.xpose.msra.mxu0 0.0
    %4585 = vmatpush.xpose.msra.mxu0 0.0
    %4586 = vmatpush.xpose.msra.mxu0 0.0
    %4587 = vmatpush.xpose.msra.mxu0 0.0
    %4588 = vmatpush.xpose.msra.mxu0 0.0
    %4589 = vmatpush.xpose.msra.mxu0 0.0
    %4590 = vmatpush.xpose.msra.mxu0 0.0
    %4591 = vmatpush.xpose.msra.mxu0 %v4576
    %4592 = vmatpush.xpose.msra.mxu0 %v4574
    %4593 = vmatpush.xpose.msra.mxu0 %v4572
    %4594 = vmatmul.f32.gmra.mxu0 %v4566
    %v4595 = vpop.f32.mrf.mxu0
    %v4596 = vadd.f32 0.0, %v4595
    %4597 = vmatmul.f32.gmra.mxu0 %v4568
    %v4598 = vpop.f32.mrf.mxu0
    %v4599 = vadd.f32 0.0, %v4598
    %4600 = vmatmul.f32.gmra.mxu0 %v4570
    %v4601 = vpop.f32.mrf.mxu0
    %v4602 = vadd.f32 0.0, %v4601
    %4603 = vdwg.mxu0
    %4604 = vrot.lane.b32.xlu0 %v4495, 96
    %v4605 = vpop.permute.xlu0 %4604
    %4606 = vrot.lane.b32.xlu0 %v4497, 96
    %v4607 = vpop.permute.xlu0 %4606
    %4608 = vrot.lane.b32.xlu0 %v4496, 96
    %v4609 = vpop.permute.xlu0 %4608
    %v4610 = vsel %vm390, %v4495, 0
    %v4612 = vsel %vm390, %v4497, 0
    %v4614 = vsel %vm390, %v4496, 0
    %v4616 = vsel %vm390, %v4605, 0
    %v4618 = vsel %vm390, %v4607, 0
    %v4620 = vsel %vm390, %v4609, 0
    %4622 = vmatpush.xpose.msra.mxu0 0.0
    %4623 = vmatpush.xpose.msra.mxu0 0.0
    %4624 = vmatpush.xpose.msra.mxu0 0.0
    %4625 = vmatpush.xpose.msra.mxu0 0.0
    %4626 = vmatpush.xpose.msra.mxu0 0.0
    %4627 = vmatpush.xpose.msra.mxu0 0.0
    %4628 = vmatpush.xpose.msra.mxu0 0.0
    %4629 = vmatpush.xpose.msra.mxu0 0.0
    %4630 = vmatpush.xpose.msra.mxu0 0.0
    %4631 = vmatpush.xpose.msra.mxu0 0.0
    %4632 = vmatpush.xpose.msra.mxu0 0.0
    %4633 = vmatpush.xpose.msra.mxu0 0.0
    %4634 = vmatpush.xpose.msra.mxu0 0.0
    %4635 = vmatpush.xpose.msra.mxu0 %v4620
    %4636 = vmatpush.xpose.msra.mxu0 %v4618
    %4637 = vmatpush.xpose.msra.mxu0 %v4616
    %4638 = vmatmul.f32.gmra.mxu0 %v4610
    %v4639 = vpop.f32.mrf.mxu0
    %v4640 = vadd.f32 0.0, %v4639
    %4641 = vmatmul.f32.gmra.mxu0 %v4612
    %v4642 = vpop.f32.mrf.mxu0
    %v4643 = vadd.f32 0.0, %v4642
    %4644 = vmatmul.f32.gmra.mxu0 %v4614
    %v4645 = vpop.f32.mrf.mxu0
    %v4646 = vadd.f32 0.0, %v4645
    %4647 = vdwg.mxu0
    %4648 = vrot.lane.b32.xlu0 %v4499, 96
    %v4649 = vpop.permute.xlu0 %4648
    %4650 = vrot.lane.b32.xlu0 %v4501, 96
    %v4651 = vpop.permute.xlu0 %4650
    %4652 = vrot.lane.b32.xlu0 %v4503, 96
    %v4653 = vpop.permute.xlu0 %4652
    %v4654 = vsel %vm390, %v4499, 0
    %v4656 = vsel %vm390, %v4501, 0
    %v4658 = vsel %vm390, %v4503, 0
    %v4660 = vsel %vm390, %v4649, 0
    %v4662 = vsel %vm390, %v4651, 0
    %v4664 = vsel %vm390, %v4653, 0
    %4666 = vmatpush.xpose.msra.mxu0 0.0
    %4667 = vmatpush.xpose.msra.mxu0 0.0
    %4668 = vmatpush.xpose.msra.mxu0 0.0
    %4669 = vmatpush.xpose.msra.mxu0 0.0
    %4670 = vmatpush.xpose.msra.mxu0 0.0
    %4671 = vmatpush.xpose.msra.mxu0 0.0
    %4672 = vmatpush.xpose.msra.mxu0 0.0
    %4673 = vmatpush.xpose.msra.mxu0 0.0
    %4674 = vmatpush.xpose.msra.mxu0 0.0
    %4675 = vmatpush.xpose.msra.mxu0 0.0
    %4676 = vmatpush.xpose.msra.mxu0 0.0
    %4677 = vmatpush.xpose.msra.mxu0 0.0
    %4678 = vmatpush.xpose.msra.mxu0 0.0
    %4679 = vmatpush.xpose.msra.mxu0 %v4664
    %4680 = vmatpush.xpose.msra.mxu0 %v4662
    %4681 = vmatpush.xpose.msra.mxu0 %v4660
    %4682 = vmatmul.f32.gmra.mxu0 %v4654
    %v4683 = vpop.f32.mrf.mxu0
    %v4684 = vadd.f32 0.0, %v4683
    %4685 = vmatmul.f32.gmra.mxu0 %v4656
    %v4686 = vpop.f32.mrf.mxu0
    %v4687 = vadd.f32 0.0, %v4686
    %4688 = vmatmul.f32.gmra.mxu0 %v4658
    %v4689 = vpop.f32.mrf.mxu0
    %v4690 = vadd.f32 0.0, %v4689
    %4691 = vdwg.mxu0
    %v4692 = vmul.f32 %v4552, 0.25
    %v4693 = vmul.f32 %v4555, 0.25
    %v4694 = vmul.f32 %v4558, 0.25
    %v4695 = vmul.f32 %v4596, 0.25
    %v4696 = vmul.f32 %v4599, 0.25
    %v4697 = vmul.f32 %v4602, 0.25
    %v4698 = vmul.f32 %v4640, 0.25
    %v4699 = vmul.f32 %v4643, 0.25
    %v4700 = vmul.f32 %v4646, 0.25
    %v4701 = vmul.f32 %v4684, 0.25
    %v4702 = vmul.f32 %v4687, 0.25
    %v4703 = vmul.f32 %v4690, 0.25
    %v4704 = vsel %vm573, %v4692, -inf
    %4705 = vmax.xlane.f32.xlu0 %v4704
    %v4706 = vpop.xlane.xlu0 %4705
    %v4707 = vsel %vm573, %v4693, -inf
    %4708 = vmax.xlane.f32.xlu0 %v4707
    %v4709 = vpop.xlane.xlu0 %4708
    %v4710 = vsel %vm580, %v4694, -inf
    %4711 = vmax.xlane.f32.xlu0 %v4710
    %v4712 = vpop.xlane.xlu0 %4711
    %v4713 = vsel %vm573, %v4695, -inf
    %4714 = vmax.xlane.f32.xlu0 %v4713
    %v4715 = vpop.xlane.xlu0 %4714
    %v4716 = vsel %vm573, %v4696, -inf
    %4717 = vmax.xlane.f32.xlu0 %v4716
    %v4718 = vpop.xlane.xlu0 %4717
    %v4719 = vsel %vm580, %v4697, -inf
    %4720 = vmax.xlane.f32.xlu0 %v4719
    %v4721 = vpop.xlane.xlu0 %4720
    %v4722 = vsel %vm573, %v4698, -inf
    %4723 = vmax.xlane.f32.xlu0 %v4722
    %v4724 = vpop.xlane.xlu0 %4723
    %v4725 = vsel %vm573, %v4699, -inf
    %4726 = vmax.xlane.f32.xlu0 %v4725
    %v4727 = vpop.xlane.xlu0 %4726
    %v4728 = vsel %vm580, %v4700, -inf
    %4729 = vmax.xlane.f32.xlu0 %v4728
    %v4730 = vpop.xlane.xlu0 %4729
    %v4731 = vsel %vm573, %v4701, -inf
    %4732 = vmax.xlane.f32.xlu0 %v4731
    %v4733 = vpop.xlane.xlu0 %4732
    %v4734 = vsel %vm573, %v4702, -inf
    %4735 = vmax.xlane.f32.xlu0 %v4734
    %v4736 = vpop.xlane.xlu0 %4735
    %v4737 = vsel %vm580, %v4703, -inf
    %4738 = vmax.xlane.f32.xlu0 %v4737
    %v4739 = vpop.xlane.xlu0 %4738
    %v4740 = vsub.f32 %v4692, %v4706
    %v4741 = vsub.f32 %v4693, %v4709
    %v4742 = vsub.f32 %v4694, %v4712
    %v4743 = vsub.f32 %v4695, %v4715
    %v4744 = vsub.f32 %v4696, %v4718
    %v4745 = vsub.f32 %v4697, %v4721
    %v4746 = vsub.f32 %v4698, %v4724
    %v4747 = vsub.f32 %v4699, %v4727
    %v4748 = vsub.f32 %v4700, %v4730
    %v4749 = vsub.f32 %v4701, %v4733
    %v4750 = vsub.f32 %v4702, %v4736
    %v4751 = vsub.f32 %v4703, %v4739
    %v4752 = vmul.f32 %v4740, 1.442695
    %v4753 = vpow.pop %v4752
    %v4754 = vmul.f32 %v4741, 1.442695
    %v4755 = vpow.pop %v4754
    %v4756 = vmul.f32 %v4742, 1.442695
    %v4757 = vpow.pop %v4756
    %v4758 = vmul.f32 %v4743, 1.442695
    %v4759 = vpow.pop %v4758
    %v4760 = vmul.f32 %v4744, 1.442695
    %v4761 = vpow.pop %v4760
    %v4762 = vmul.f32 %v4745, 1.442695
    %v4763 = vpow.pop %v4762
    %v4764 = vmul.f32 %v4746, 1.442695
    %v4765 = vpow.pop %v4764
    %v4766 = vmul.f32 %v4747, 1.442695
    %v4767 = vpow.pop %v4766
    %v4768 = vmul.f32 %v4748, 1.442695
    %v4769 = vpow.pop %v4768
    %v4770 = vmul.f32 %v4749, 1.442695
    %v4771 = vpow.pop %v4770
    %v4772 = vmul.f32 %v4750, 1.442695
    %v4773 = vpow.pop %v4772
    %v4774 = vmul.f32 %v4751, 1.442695
    %v4775 = vpow.pop %v4774
    %v4776 = vsel %vm573, %v4753, 0.0
    %4777 = vadd.xlane.f32.xlu0 %v4776
    %v4778 = vpop.xlane.xlu0 %4777
    %v4779 = vsel %vm573, %v4755, 0.0
    %4780 = vadd.xlane.f32.xlu0 %v4779
    %v4781 = vpop.xlane.xlu0 %4780
    %v4782 = vsel %vm580, %v4757, 0.0
    %4783 = vadd.xlane.f32.xlu0 %v4782
    %v4784 = vpop.xlane.xlu0 %4783
    %v4785 = vsel %vm573, %v4759, 0.0
    %4786 = vadd.xlane.f32.xlu0 %v4785
    %v4787 = vpop.xlane.xlu0 %4786
    %v4788 = vsel %vm573, %v4761, 0.0
    %4789 = vadd.xlane.f32.xlu0 %v4788
    %v4790 = vpop.xlane.xlu0 %4789
    %v4791 = vsel %vm580, %v4763, 0.0
    %4792 = vadd.xlane.f32.xlu0 %v4791
    %v4793 = vpop.xlane.xlu0 %4792
    %v4794 = vsel %vm573, %v4765, 0.0
    %4795 = vadd.xlane.f32.xlu0 %v4794
    %v4796 = vpop.xlane.xlu0 %4795
    %v4797 = vsel %vm573, %v4767, 0.0
    %4798 = vadd.xlane.f32.xlu0 %v4797
    %v4799 = vpop.xlane.xlu0 %4798
    %v4800 = vsel %vm580, %v4769, 0.0
    %4801 = vadd.xlane.f32.xlu0 %v4800
    %v4802 = vpop.xlane.xlu0 %4801
    %v4803 = vsel %vm573, %v4771, 0.0
    %4804 = vadd.xlane.f32.xlu0 %v4803
    %v4805 = vpop.xlane.xlu0 %4804
    %v4806 = vsel %vm573, %v4773, 0.0
    %4807 = vadd.xlane.f32.xlu0 %v4806
    %v4808 = vpop.xlane.xlu0 %4807
    %v4809 = vsel %vm580, %v4775, 0.0
    %4810 = vadd.xlane.f32.xlu0 %v4809
    %v4811 = vpop.xlane.xlu0 %4810
    %v4812 = vlog2.pop %v4778
    %v4813 = vmul.f32 %v4812, 0.6931472
    %v4814 = vlog2.pop %v4781
    %v4815 = vmul.f32 %v4814, 0.6931472
    %v4816 = vlog2.pop %v4784
    %v4817 = vmul.f32 %v4816, 0.6931472
    %v4818 = vlog2.pop %v4787
    %v4819 = vmul.f32 %v4818, 0.6931472
    %v4820 = vlog2.pop %v4790
    %v4821 = vmul.f32 %v4820, 0.6931472
    %v4822 = vlog2.pop %v4793
    %v4823 = vmul.f32 %v4822, 0.6931472
    %v4824 = vlog2.pop %v4796
    %v4825 = vmul.f32 %v4824, 0.6931472
    %v4826 = vlog2.pop %v4799
    %v4827 = vmul.f32 %v4826, 0.6931472
    %v4828 = vlog2.pop %v4802
    %v4829 = vmul.f32 %v4828, 0.6931472
    %v4830 = vlog2.pop %v4805
    %v4831 = vmul.f32 %v4830, 0.6931472
    %v4832 = vlog2.pop %v4808
    %v4833 = vmul.f32 %v4832, 0.6931472
    %v4834 = vlog2.pop %v4811
    %v4835 = vmul.f32 %v4834, 0.6931472
    %v4836 = vsub.f32 %v4740, %v4813
    %v4837 = vsub.f32 %v4741, %v4815
    %v4838 = vsub.f32 %v4742, %v4817
    %v4839 = vsub.f32 %v4743, %v4819
    %v4840 = vsub.f32 %v4744, %v4821
    %v4841 = vsub.f32 %v4745, %v4823
    %v4842 = vsub.f32 %v4746, %v4825
    %v4843 = vsub.f32 %v4747, %v4827
    %v4844 = vsub.f32 %v4748, %v4829
    %v4845 = vsub.f32 %v4749, %v4831
    %v4846 = vsub.f32 %v4750, %v4833
    %v4847 = vsub.f32 %v4751, %v4835
    %v4848 = vsub.f32 0.0, %v4504
    %v4849 = vsub.f32 0.0, %v4505
    %v4850 = vsub.f32 0.0, %v4506
    %v4851 = vsub.f32 0.0, %v4507
    %v4852 = vsub.f32 0.0, %v4508
    %v4853 = vsub.f32 0.0, %v4509
    %v4854 = vsub.f32 0.0, %v4510
    %v4855 = vsub.f32 0.0, %v4511
    %v4856 = vsub.f32 0.0, %v4512
    %v4857 = vsub.f32 0.0, %v4513
    %v4858 = vsub.f32 0.0, %v4514
    %v4859 = vsub.f32 0.0, %v4515
    %v4860 = vmul.f32 %v4848, %v4836
    %v4861 = vmul.f32 %v4849, %v4837
    %v4862 = vmul.f32 %v4850, %v4838
    %v4863 = vmul.f32 %v4851, %v4839
    %v4864 = vmul.f32 %v4852, %v4840
    %v4865 = vmul.f32 %v4853, %v4841
    %v4866 = vmul.f32 %v4854, %v4842
    %v4867 = vmul.f32 %v4855, %v4843
    %v4868 = vmul.f32 %v4856, %v4844
    %v4869 = vmul.f32 %v4857, %v4845
    %v4870 = vmul.f32 %v4858, %v4846
    %v4871 = vmul.f32 %v4859, %v4847
    %v4872 = vsel %vm573, %v4860, 0.0
    %4873 = vadd.xlane.f32.xlu0 %v4872
    %v4874 = vpop.xlane.xlu0 %4873
    %v4875 = vsel %vm573, %v4861, 0.0
    %4876 = vadd.xlane.f32.xlu0 %v4875
    %v4877 = vpop.xlane.xlu0 %4876
    %v4878 = vsel %vm580, %v4862, 0.0
    %4879 = vadd.xlane.f32.xlu0 %v4878
    %v4880 = vpop.xlane.xlu0 %4879
    %v4881 = vsel %vm573, %v4863, 0.0
    %4882 = vadd.xlane.f32.xlu0 %v4881
    %v4883 = vpop.xlane.xlu0 %4882
    %v4884 = vsel %vm573, %v4864, 0.0
    %4885 = vadd.xlane.f32.xlu0 %v4884
    %v4886 = vpop.xlane.xlu0 %4885
    %v4887 = vsel %vm580, %v4865, 0.0
    %4888 = vadd.xlane.f32.xlu0 %v4887
    %v4889 = vpop.xlane.xlu0 %4888
    %v4890 = vsel %vm573, %v4866, 0.0
    %4891 = vadd.xlane.f32.xlu0 %v4890
    %v4892 = vpop.xlane.xlu0 %4891
    %v4893 = vsel %vm573, %v4867, 0.0
    %4894 = vadd.xlane.f32.xlu0 %v4893
    %v4895 = vpop.xlane.xlu0 %4894
    %v4896 = vsel %vm580, %v4868, 0.0
    %4897 = vadd.xlane.f32.xlu0 %v4896
    %v4898 = vpop.xlane.xlu0 %4897
    %v4899 = vsel %vm573, %v4869, 0.0
    %4900 = vadd.xlane.f32.xlu0 %v4899
    %v4901 = vpop.xlane.xlu0 %4900
    %v4902 = vsel %vm573, %v4870, 0.0
    %4903 = vadd.xlane.f32.xlu0 %v4902
    %v4904 = vpop.xlane.xlu0 %4903
    %v4905 = vsel %vm580, %v4871, 0.0
    %4906 = vadd.xlane.f32.xlu0 %v4905
    %v4907 = vpop.xlane.xlu0 %4906
    %v4908 = vadd.f32 %v4874, %v4883
    %v4909 = vadd.f32 %v4908, %v4892
    %v4910 = vadd.f32 %v4909, %v4901
    %v4911 = vadd.f32 %v4877, %v4886
    %v4912 = vadd.f32 %v4911, %v4895
    %v4913 = vadd.f32 %v4912, %v4904
    %v4914 = vsel %vm130, %v4880, 0.0
    %v4915 = vsel %vm130, %v4889, 0.0
    %v4916 = vadd.f32 %v4914, %v4915
    %v4917 = vsel %vm130, %v4898, 0.0
    %v4918 = vadd.f32 %v4916, %v4917
    %v4919 = vsel %vm130, %v4907, 0.0
    %v4920 = vadd.f32 %v4918, %v4919
    %v4921 = vadd.f32 %v4910, %v4913
    %v4922 = vsel %vm130, %v4920, 0.0
    %v4923 = vadd.f32 %v4921, %v4922
    %v4924 = vrot.slane %v4923, 4
    %v4925 = vadd.f32 %v4923, %v4924
    %v4926 = vrot.slane %v4925, 2
    %v4927 = vadd.f32 %v4925, %v4926
    %v4928 = vrot.slane %v4927, 1
    %v4929 = vadd.f32 %v4927, %v4928
    %v4930 = vadd.f32 %v812, %v4929
    %v4931 = vld [vmem:[%s19] sm:$0xff]
    %v4932 = vld [vmem:[%s19 + $0x8] sm:$0xff]
    %v4933 = vld [vmem:[%s19 + $0x10] sm:$0x1]
    %v4934 = vld [vmem:[%s19 + $0x18] sm:$0xff]
    %v4935 = vld [vmem:[%s19 + $0x20] sm:$0xff]
    %v4936 = vld [vmem:[%s19 + $0x28] sm:$0x1]
    %v4937 = vld [vmem:[%s19 + $0x30] sm:$0xff]
    %v4938 = vld [vmem:[%s19 + $0x38] sm:$0xff]
    %v4939 = vld [vmem:[%s19 + $0x40] sm:$0x1]
    %v4940 = vld [vmem:[%s19 + $0x48] sm:$0xff]
    %v4941 = vld [vmem:[%s19 + $0x50] sm:$0xff]
    %v4942 = vld [vmem:[%s19 + $0x58] sm:$0x1]
    %4943 = vrot.lane.b32.xlu0 %v4468, 64
    %v4944 = vpop.permute.xlu0 %4943
    %4945 = vrot.lane.b32.xlu0 %v4471, 64
    %v4946 = vpop.permute.xlu0 %4945
    %4947 = vrot.lane.b32.xlu0 %v4474, 64
    %v4948 = vpop.permute.xlu0 %4947
    %v4949 = vsel %vm390, %v4944, 0
    %v4951 = vsel %vm390, %v4946, 0
    %v4953 = vsel %vm390, %v4948, 0
    %4955 = vmatpush.xpose.msra.mxu0 0.0
    %4956 = vmatpush.xpose.msra.mxu0 0.0
    %4957 = vmatpush.xpose.msra.mxu0 0.0
    %4958 = vmatpush.xpose.msra.mxu0 0.0
    %4959 = vmatpush.xpose.msra.mxu0 0.0
    %4960 = vmatpush.xpose.msra.mxu0 0.0
    %4961 = vmatpush.xpose.msra.mxu0 0.0
    %4962 = vmatpush.xpose.msra.mxu0 0.0
    %4963 = vmatpush.xpose.msra.mxu0 0.0
    %4964 = vmatpush.xpose.msra.mxu0 0.0
    %4965 = vmatpush.xpose.msra.mxu0 0.0
    %4966 = vmatpush.xpose.msra.mxu0 0.0
    %4967 = vmatpush.xpose.msra.mxu0 0.0
    %4968 = vmatpush.xpose.msra.mxu0 %v4953
    %4969 = vmatpush.xpose.msra.mxu0 %v4951
    %4970 = vmatpush.xpose.msra.mxu0 %v4949
    %4971 = vmatmul.f32.gmra.mxu0 %v4949
    %v4972 = vpop.f32.mrf.mxu0
    %v4973 = vadd.f32 0.0, %v4972
    %4974 = vmatmul.f32.gmra.mxu0 %v4951
    %v4975 = vpop.f32.mrf.mxu0
    %v4976 = vadd.f32 0.0, %v4975
    %4977 = vmatmul.f32.gmra.mxu0 %v4953
    %v4978 = vpop.f32.mrf.mxu0
    %v4979 = vadd.f32 0.0, %v4978
    %4980 = vdwg.mxu0
    %4981 = vrot.lane.b32.xlu0 %v4486, 64
    %v4982 = vpop.permute.xlu0 %4981
    %4983 = vrot.lane.b32.xlu0 %v4488, 64
    %v4984 = vpop.permute.xlu0 %4983
    %4985 = vrot.lane.b32.xlu0 %v4490, 64
    %v4986 = vpop.permute.xlu0 %4985
    %v4987 = vsel %vm390, %v4982, 0
    %v4989 = vsel %vm390, %v4984, 0
    %v4991 = vsel %vm390, %v4986, 0
    %4993 = vmatpush.xpose.msra.mxu0 0.0
    %4994 = vmatpush.xpose.msra.mxu0 0.0
    %4995 = vmatpush.xpose.msra.mxu0 0.0
    %4996 = vmatpush.xpose.msra.mxu0 0.0
    %4997 = vmatpush.xpose.msra.mxu0 0.0
    %4998 = vmatpush.xpose.msra.mxu0 0.0
    %4999 = vmatpush.xpose.msra.mxu0 0.0
    %5000 = vmatpush.xpose.msra.mxu0 0.0
    %5001 = vmatpush.xpose.msra.mxu0 0.0
    %5002 = vmatpush.xpose.msra.mxu0 0.0
    %5003 = vmatpush.xpose.msra.mxu0 0.0
    %5004 = vmatpush.xpose.msra.mxu0 0.0
    %5005 = vmatpush.xpose.msra.mxu0 0.0
    %5006 = vmatpush.xpose.msra.mxu0 %v4991
    %5007 = vmatpush.xpose.msra.mxu0 %v4989
    %5008 = vmatpush.xpose.msra.mxu0 %v4987
    %5009 = vmatmul.f32.gmra.mxu0 %v4987
    %v5010 = vpop.f32.mrf.mxu0
    %v5011 = vadd.f32 0.0, %v5010
    %5012 = vmatmul.f32.gmra.mxu0 %v4989
    %v5013 = vpop.f32.mrf.mxu0
    %v5014 = vadd.f32 0.0, %v5013
    %5015 = vmatmul.f32.gmra.mxu0 %v4991
    %v5016 = vpop.f32.mrf.mxu0
    %v5017 = vadd.f32 0.0, %v5016
    %5018 = vdwg.mxu0
    %5019 = vrot.lane.b32.xlu0 %v4495, 64
    %v5020 = vpop.permute.xlu0 %5019
    %5021 = vrot.lane.b32.xlu0 %v4497, 64
    %v5022 = vpop.permute.xlu0 %5021
    %5023 = vrot.lane.b32.xlu0 %v4496, 64
    %v5024 = vpop.permute.xlu0 %5023
    %v5025 = vsel %vm390, %v5020, 0
    %v5027 = vsel %vm390, %v5022, 0
    %v5029 = vsel %vm390, %v5024, 0
    %5031 = vmatpush.xpose.msra.mxu0 0.0
    %5032 = vmatpush.xpose.msra.mxu0 0.0
    %5033 = vmatpush.xpose.msra.mxu0 0.0
    %5034 = vmatpush.xpose.msra.mxu0 0.0
    %5035 = vmatpush.xpose.msra.mxu0 0.0
    %5036 = vmatpush.xpose.msra.mxu0 0.0
    %5037 = vmatpush.xpose.msra.mxu0 0.0
    %5038 = vmatpush.xpose.msra.mxu0 0.0
    %5039 = vmatpush.xpose.msra.mxu0 0.0
    %5040 = vmatpush.xpose.msra.mxu0 0.0
    %5041 = vmatpush.xpose.msra.mxu0 0.0
    %5042 = vmatpush.xpose.msra.mxu0 0.0
    %5043 = vmatpush.xpose.msra.mxu0 0.0
    %5044 = vmatpush.xpose.msra.mxu0 %v5029
    %5045 = vmatpush.xpose.msra.mxu0 %v5027
    %5046 = vmatpush.xpose.msra.mxu0 %v5025
    %5047 = vmatmul.f32.gmra.mxu0 %v5025
    %v5048 = vpop.f32.mrf.mxu0
    %v5049 = vadd.f32 0.0, %v5048
    %5050 = vmatmul.f32.gmra.mxu0 %v5027
    %v5051 = vpop.f32.mrf.mxu0
    %v5052 = vadd.f32 0.0, %v5051
    %5053 = vmatmul.f32.gmra.mxu0 %v5029
    %v5054 = vpop.f32.mrf.mxu0
    %v5055 = vadd.f32 0.0, %v5054
    %5056 = vdwg.mxu0
    %5057 = vrot.lane.b32.xlu0 %v4499, 64
    %v5058 = vpop.permute.xlu0 %5057
    %5059 = vrot.lane.b32.xlu0 %v4501, 64
    %v5060 = vpop.permute.xlu0 %5059
    %5061 = vrot.lane.b32.xlu0 %v4503, 64
    %v5062 = vpop.permute.xlu0 %5061
    %v5063 = vsel %vm390, %v5058, 0
    %v5065 = vsel %vm390, %v5060, 0
    %v5067 = vsel %vm390, %v5062, 0
    %5069 = vmatpush.xpose.msra.mxu0 0.0
    %5070 = vmatpush.xpose.msra.mxu0 0.0
    %5071 = vmatpush.xpose.msra.mxu0 0.0
    %5072 = vmatpush.xpose.msra.mxu0 0.0
    %5073 = vmatpush.xpose.msra.mxu0 0.0
    %5074 = vmatpush.xpose.msra.mxu0 0.0
    %5075 = vmatpush.xpose.msra.mxu0 0.0
    %5076 = vmatpush.xpose.msra.mxu0 0.0
    %5077 = vmatpush.xpose.msra.mxu0 0.0
    %5078 = vmatpush.xpose.msra.mxu0 0.0
    %5079 = vmatpush.xpose.msra.mxu0 0.0
    %5080 = vmatpush.xpose.msra.mxu0 0.0
    %5081 = vmatpush.xpose.msra.mxu0 0.0
    %5082 = vmatpush.xpose.msra.mxu0 %v5067
    %5083 = vmatpush.xpose.msra.mxu0 %v5065
    %5084 = vmatpush.xpose.msra.mxu0 %v5063
    %5085 = vmatmul.f32.gmra.mxu0 %v5063
    %v5086 = vpop.f32.mrf.mxu0
    %v5087 = vadd.f32 0.0, %v5086
    %5088 = vmatmul.f32.gmra.mxu0 %v5065
    %v5089 = vpop.f32.mrf.mxu0
    %v5090 = vadd.f32 0.0, %v5089
    %5091 = vmatmul.f32.gmra.mxu0 %v5067
    %v5092 = vpop.f32.mrf.mxu0
    %v5093 = vadd.f32 0.0, %v5092
    %5094 = vdwg.mxu0
    %v5095 = vmul.f32 %v4973, 0.25
    %v5096 = vmul.f32 %v4976, 0.25
    %v5097 = vmul.f32 %v4979, 0.25
    %v5098 = vmul.f32 %v5011, 0.25
    %v5099 = vmul.f32 %v5014, 0.25
    %v5100 = vmul.f32 %v5017, 0.25
    %v5101 = vmul.f32 %v5049, 0.25
    %v5102 = vmul.f32 %v5052, 0.25
    %v5103 = vmul.f32 %v5055, 0.25
    %v5104 = vmul.f32 %v5087, 0.25
    %v5105 = vmul.f32 %v5090, 0.25
    %v5106 = vmul.f32 %v5093, 0.25
    %v5107 = vsel %vm573, %v5095, -inf
    %5108 = vmax.xlane.f32.xlu0 %v5107
    %v5109 = vpop.xlane.xlu0 %5108
    %v5110 = vsel %vm573, %v5096, -inf
    %5111 = vmax.xlane.f32.xlu0 %v5110
    %v5112 = vpop.xlane.xlu0 %5111
    %v5113 = vsel %vm580, %v5097, -inf
    %5114 = vmax.xlane.f32.xlu0 %v5113
    %v5115 = vpop.xlane.xlu0 %5114
    %v5116 = vsel %vm573, %v5098, -inf
    %5117 = vmax.xlane.f32.xlu0 %v5116
    %v5118 = vpop.xlane.xlu0 %5117
    %v5119 = vsel %vm573, %v5099, -inf
    %5120 = vmax.xlane.f32.xlu0 %v5119
    %v5121 = vpop.xlane.xlu0 %5120
    %v5122 = vsel %vm580, %v5100, -inf
    %5123 = vmax.xlane.f32.xlu0 %v5122
    %v5124 = vpop.xlane.xlu0 %5123
    %v5125 = vsel %vm573, %v5101, -inf
    %5126 = vmax.xlane.f32.xlu0 %v5125
    %v5127 = vpop.xlane.xlu0 %5126
    %v5128 = vsel %vm573, %v5102, -inf
    %5129 = vmax.xlane.f32.xlu0 %v5128
    %v5130 = vpop.xlane.xlu0 %5129
    %v5131 = vsel %vm580, %v5103, -inf
    %5132 = vmax.xlane.f32.xlu0 %v5131
    %v5133 = vpop.xlane.xlu0 %5132
    %v5134 = vsel %vm573, %v5104, -inf
    %5135 = vmax.xlane.f32.xlu0 %v5134
    %v5136 = vpop.xlane.xlu0 %5135
    %v5137 = vsel %vm573, %v5105, -inf
    %5138 = vmax.xlane.f32.xlu0 %v5137
    %v5139 = vpop.xlane.xlu0 %5138
    %v5140 = vsel %vm580, %v5106, -inf
    %5141 = vmax.xlane.f32.xlu0 %v5140
    %v5142 = vpop.xlane.xlu0 %5141
    %v5143 = vsub.f32 %v5095, %v5109
    %v5144 = vsub.f32 %v5096, %v5112
    %v5145 = vsub.f32 %v5097, %v5115
    %v5146 = vsub.f32 %v5098, %v5118
    %v5147 = vsub.f32 %v5099, %v5121
    %v5148 = vsub.f32 %v5100, %v5124
    %v5149 = vsub.f32 %v5101, %v5127
    %v5150 = vsub.f32 %v5102, %v5130
    %v5151 = vsub.f32 %v5103, %v5133
    %v5152 = vsub.f32 %v5104, %v5136
    %v5153 = vsub.f32 %v5105, %v5139
    %v5154 = vsub.f32 %v5106, %v5142
    %v5155 = vmul.f32 %v5143, 1.442695
    %v5156 = vpow.pop %v5155
    %v5157 = vmul.f32 %v5144, 1.442695
    %v5158 = vpow.pop %v5157
    %v5159 = vmul.f32 %v5145, 1.442695
    %v5160 = vpow.pop %v5159
    %v5161 = vmul.f32 %v5146, 1.442695
    %v5162 = vpow.pop %v5161
    %v5163 = vmul.f32 %v5147, 1.442695
    %v5164 = vpow.pop %v5163
    %v5165 = vmul.f32 %v5148, 1.442695
    %v5166 = vpow.pop %v5165
    %v5167 = vmul.f32 %v5149, 1.442695
    %v5168 = vpow.pop %v5167
    %v5169 = vmul.f32 %v5150, 1.442695
    %v5170 = vpow.pop %v5169
    %v5171 = vmul.f32 %v5151, 1.442695
    %v5172 = vpow.pop %v5171
    %v5173 = vmul.f32 %v5152, 1.442695
    %v5174 = vpow.pop %v5173
    %v5175 = vmul.f32 %v5153, 1.442695
    %v5176 = vpow.pop %v5175
    %v5177 = vmul.f32 %v5154, 1.442695
    %v5178 = vpow.pop %v5177
    %v5179 = vsel %vm573, %v5156, 0.0
    %5180 = vadd.xlane.f32.xlu0 %v5179
    %v5181 = vpop.xlane.xlu0 %5180
    %v5182 = vsel %vm573, %v5158, 0.0
    %5183 = vadd.xlane.f32.xlu0 %v5182
    %v5184 = vpop.xlane.xlu0 %5183
    %v5185 = vsel %vm580, %v5160, 0.0
    %5186 = vadd.xlane.f32.xlu0 %v5185
    %v5187 = vpop.xlane.xlu0 %5186
    %v5188 = vsel %vm573, %v5162, 0.0
    %5189 = vadd.xlane.f32.xlu0 %v5188
    %v5190 = vpop.xlane.xlu0 %5189
    %v5191 = vsel %vm573, %v5164, 0.0
    %5192 = vadd.xlane.f32.xlu0 %v5191
    %v5193 = vpop.xlane.xlu0 %5192
    %v5194 = vsel %vm580, %v5166, 0.0
    %5195 = vadd.xlane.f32.xlu0 %v5194
    %v5196 = vpop.xlane.xlu0 %5195
    %v5197 = vsel %vm573, %v5168, 0.0
    %5198 = vadd.xlane.f32.xlu0 %v5197
    %v5199 = vpop.xlane.xlu0 %5198
    %v5200 = vsel %vm573, %v5170, 0.0
    %5201 = vadd.xlane.f32.xlu0 %v5200
    %v5202 = vpop.xlane.xlu0 %5201
    %v5203 = vsel %vm580, %v5172, 0.0
    %5204 = vadd.xlane.f32.xlu0 %v5203
    %v5205 = vpop.xlane.xlu0 %5204
    %v5206 = vsel %vm573, %v5174, 0.0
    %5207 = vadd.xlane.f32.xlu0 %v5206
    %v5208 = vpop.xlane.xlu0 %5207
    %v5209 = vsel %vm573, %v5176, 0.0
    %5210 = vadd.xlane.f32.xlu0 %v5209
    %v5211 = vpop.xlane.xlu0 %5210
    %v5212 = vsel %vm580, %v5178, 0.0
    %5213 = vadd.xlane.f32.xlu0 %v5212
    %v5214 = vpop.xlane.xlu0 %5213
    %v5215 = vlog2.pop %v5181
    %v5216 = vmul.f32 %v5215, 0.6931472
    %v5217 = vlog2.pop %v5184
    %v5218 = vmul.f32 %v5217, 0.6931472
    %v5219 = vlog2.pop %v5187
    %v5220 = vmul.f32 %v5219, 0.6931472
    %v5221 = vlog2.pop %v5190
    %v5222 = vmul.f32 %v5221, 0.6931472
    %v5223 = vlog2.pop %v5193
    %v5224 = vmul.f32 %v5223, 0.6931472
    %v5225 = vlog2.pop %v5196
    %v5226 = vmul.f32 %v5225, 0.6931472
    %v5227 = vlog2.pop %v5199
    %v5228 = vmul.f32 %v5227, 0.6931472
    %v5229 = vlog2.pop %v5202
    %v5230 = vmul.f32 %v5229, 0.6931472
    %v5231 = vlog2.pop %v5205
    %v5232 = vmul.f32 %v5231, 0.6931472
    %v5233 = vlog2.pop %v5208
    %v5234 = vmul.f32 %v5233, 0.6931472
    %v5235 = vlog2.pop %v5211
    %v5236 = vmul.f32 %v5235, 0.6931472
    %v5237 = vlog2.pop %v5214
    %v5238 = vmul.f32 %v5237, 0.6931472
    %v5239 = vsub.f32 %v5143, %v5216
    %v5240 = vsub.f32 %v5144, %v5218
    %v5241 = vsub.f32 %v5145, %v5220
    %v5242 = vsub.f32 %v5146, %v5222
    %v5243 = vsub.f32 %v5147, %v5224
    %v5244 = vsub.f32 %v5148, %v5226
    %v5245 = vsub.f32 %v5149, %v5228
    %v5246 = vsub.f32 %v5150, %v5230
    %v5247 = vsub.f32 %v5151, %v5232
    %v5248 = vsub.f32 %v5152, %v5234
    %v5249 = vsub.f32 %v5153, %v5236
    %v5250 = vsub.f32 %v5154, %v5238
    %v5251 = vsub.f32 0.0, %v4931
    %v5252 = vsub.f32 0.0, %v4932
    %v5253 = vsub.f32 0.0, %v4933
    %v5254 = vsub.f32 0.0, %v4934
    %v5255 = vsub.f32 0.0, %v4935
    %v5256 = vsub.f32 0.0, %v4936
    %v5257 = vsub.f32 0.0, %v4937
    %v5258 = vsub.f32 0.0, %v4938
    %v5259 = vsub.f32 0.0, %v4939
    %v5260 = vsub.f32 0.0, %v4940
    %v5261 = vsub.f32 0.0, %v4941
    %v5262 = vsub.f32 0.0, %v4942
    %v5263 = vmul.f32 %v5251, %v5239
    %v5264 = vmul.f32 %v5252, %v5240
    %v5265 = vmul.f32 %v5253, %v5241
    %v5266 = vmul.f32 %v5254, %v5242
    %v5267 = vmul.f32 %v5255, %v5243
    %v5268 = vmul.f32 %v5256, %v5244
    %v5269 = vmul.f32 %v5257, %v5245
    %v5270 = vmul.f32 %v5258, %v5246
    %v5271 = vmul.f32 %v5259, %v5247
    %v5272 = vmul.f32 %v5260, %v5248
    %v5273 = vmul.f32 %v5261, %v5249
    %v5274 = vmul.f32 %v5262, %v5250
    %v5275 = vsel %vm573, %v5263, 0.0
    %5276 = vadd.xlane.f32.xlu0 %v5275
    %v5277 = vpop.xlane.xlu0 %5276
    %v5278 = vsel %vm573, %v5264, 0.0
    %5279 = vadd.xlane.f32.xlu0 %v5278
    %v5280 = vpop.xlane.xlu0 %5279
    %v5281 = vsel %vm580, %v5265, 0.0
    %5282 = vadd.xlane.f32.xlu0 %v5281
    %v5283 = vpop.xlane.xlu0 %5282
    %v5284 = vsel %vm573, %v5266, 0.0
    %5285 = vadd.xlane.f32.xlu0 %v5284
    %v5286 = vpop.xlane.xlu0 %5285
    %v5287 = vsel %vm573, %v5267, 0.0
    %5288 = vadd.xlane.f32.xlu0 %v5287
    %v5289 = vpop.xlane.xlu0 %5288
    %v5290 = vsel %vm580, %v5268, 0.0
    %5291 = vadd.xlane.f32.xlu0 %v5290
    %v5292 = vpop.xlane.xlu0 %5291
    %v5293 = vsel %vm573, %v5269, 0.0
    %5294 = vadd.xlane.f32.xlu0 %v5293
    %v5295 = vpop.xlane.xlu0 %5294
    %v5296 = vsel %vm573, %v5270, 0.0
    %5297 = vadd.xlane.f32.xlu0 %v5296
    %v5298 = vpop.xlane.xlu0 %5297
    %v5299 = vsel %vm580, %v5271, 0.0
    %5300 = vadd.xlane.f32.xlu0 %v5299
    %v5301 = vpop.xlane.xlu0 %5300
    %v5302 = vsel %vm573, %v5272, 0.0
    %5303 = vadd.xlane.f32.xlu0 %v5302
    %v5304 = vpop.xlane.xlu0 %5303
    %v5305 = vsel %vm573, %v5273, 0.0
    %5306 = vadd.xlane.f32.xlu0 %v5305
    %v5307 = vpop.xlane.xlu0 %5306
    %v5308 = vsel %vm580, %v5274, 0.0
    %5309 = vadd.xlane.f32.xlu0 %v5308
    %v5310 = vpop.xlane.xlu0 %5309
    %v5311 = vadd.f32 %v5277, %v5286
    %v5312 = vadd.f32 %v5311, %v5295
    %v5313 = vadd.f32 %v5312, %v5304
    %v5314 = vadd.f32 %v5280, %v5289
    %v5315 = vadd.f32 %v5314, %v5298
    %v5316 = vadd.f32 %v5315, %v5307
    %v5317 = vsel %vm130, %v5283, 0.0
    %v5318 = vsel %vm130, %v5292, 0.0
    %v5319 = vadd.f32 %v5317, %v5318
    %v5320 = vsel %vm130, %v5301, 0.0
    %v5321 = vadd.f32 %v5319, %v5320
    %v5322 = vsel %vm130, %v5310, 0.0
    %v5323 = vadd.f32 %v5321, %v5322
    %v5324 = vadd.f32 %v5313, %v5316
    %v5325 = vsel %vm130, %v5323, 0.0
    %v5326 = vadd.f32 %v5324, %v5325
    %v5327 = vrot.slane %v5326, 4
    %v5328 = vadd.f32 %v5326, %v5327
    %v5329 = vrot.slane %v5328, 2
    %v5330 = vadd.f32 %v5328, %v5329
    %v5331 = vrot.slane %v5330, 1
    %v5332 = vadd.f32 %v5330, %v5331
    %v5333 = vadd.f32 %v1214, %v5332
    %vm5334 = vcmask 0
    %5335 = vst.msk [vmem:[#allocation2] sm:$0x1] %vm5334, %v4930
    %5336 = vst.msk [vmem:[#allocation4] sm:$0x1] %vm5334, %v5333
    // Predicated region
    $region89: #{alivit_forward.1} parent=1 // pred_check
      _
    $region90: #{alivit_forward.1} parent=1 // pred_check_branch
      %5338 = sbr.rel (0) target = $region92
    $region91: #{alivit_forward.1} parent=1 // pred_region
      %5340 = vsyncadd [#allocation3], 0
      %s5342 = sshll.u32 [#allocation2], 4
      %s5343 = int_to_ptr.vmem [resolvable:$true] %s5342
      %s5344 = sshll.u32 %s20, 4
      %s5345 = int_to_ptr.hbm [resolvable:$true] %s5344
      %5347 = dma.vmem_to_hbm [thread:$0]  %s5343, 16, %s5345, [#allocation3]
    $region92: #{alivit_forward.1} parent=1 // pred_fallthru
      _
    // Predicated region
    $region93: #{alivit_forward.1} parent=1 // pred_check
      _
    $region94: #{alivit_forward.1} parent=1 // pred_check_branch
      %5349 = sbr.rel (0) target = $region96
    $region95: #{alivit_forward.1} parent=1 // pred_region
      %5351 = vsyncadd [#allocation5], 0
      %s5353 = sshll.u32 [#allocation4], 4
      %s5354 = int_to_ptr.vmem [resolvable:$true] %s5353
      %s5355 = sshll.u32 %s21, 4
      %s5356 = int_to_ptr.hbm [resolvable:$true] %s5355
      %5358 = dma.vmem_to_hbm [thread:$0]  %s5354, 16, %s5356, [#allocation5]
    $region96: #{alivit_forward.1} parent=1 // pred_fallthru
      _
    // Predicated region
    $region97: #{alivit_forward.1} parent=1 // pred_check
      _
    $region98: #{alivit_forward.1} parent=1 // pred_check_branch
      %5360 = sbr.rel (0) target = $region100
    $region99: #{alivit_forward.1} parent=1 // pred_region
      %5362 = dma.done [#allocation3], 16
    $region100: #{alivit_forward.1} parent=1 // pred_fallthru
      _
    // Predicated region
    $region101: #{alivit_forward.1} parent=1 // pred_check
      _
    $region102: #{alivit_forward.1} parent=1 // pred_check_branch
      %5364 = sbr.rel (0) target = $region104
    $region103: #{alivit_forward.1} parent=1 // pred_region
      %5366 = dma.done [#allocation5], 16
    $region104: #{alivit_forward.1} parent=1 // pred_fallthru
      _
    %5367 = vsyncpa [#allocation3], 1
    %5368 = vsyncpa [#allocation5], 1

</llo_original>
